<compile_context>
chip_gen: v7x
topology: tpu7x:2x2x1
jax: 0.10.0
libtpu: 0.0.40
codegen_flags: <defaults>
</compile_context>

<pallas_src>
import math
import functools

import jax
import jax.numpy as jnp
from jax import lax
from jax.experimental import pallas as pl
from jax.experimental.pallas import tpu as pltpu

# ---- model dims (small, consistent with the module) ----
L = 8        # target sequence length
S = 16       # memory sequence length
N = 2        # batch
E = 32       # d_model
NHEAD = 4
HEAD_DIM = E // NHEAD
FFN = 64     # dim_feedforward
EPS = 1e-5

# rows of the packed (10, FFN) vector slab (cols [:E] unless noted)
ROW_BQ, ROW_BK, ROW_BV, ROW_BO = 0, 1, 2, 3
ROW_B2 = 4
ROW_G1, ROW_BE1, ROW_G2, ROW_BE2 = 5, 6, 7, 8
ROW_B1 = 9   # cols [:FFN]


def decoder_cfa_kernel(tgt_ref, mem_ref, posd_ref, pose_ref,
                       wattn_ref, w1_ref, w2_ref, vecs_ref,
                       out_ref, attw_ref):
    # Single grid step: refs hold the full arrays.
    #   tgt_ref  (N, L, E)   mem_ref (N, S, E)
    #   posd_ref (N, L, E)   pose_ref (N, S, E)
    #   wattn_ref (4, E, E)  = wq, wk, wv, wo (applied as x @ W)
    #   w1_ref (E, FFN)      w2_ref (FFN, E)
    #   vecs_ref (10, FFN)   packed biases / LayerNorm params
    wq = wattn_ref[0]
    wk = wattn_ref[1]
    wv = wattn_ref[2]
    wo = wattn_ref[3]

    bq = vecs_ref[ROW_BQ:ROW_BQ + 1, 0:E]
    bk = vecs_ref[ROW_BK:ROW_BK + 1, 0:E]
    bv = vecs_ref[ROW_BV:ROW_BV + 1, 0:E]
    bo = vecs_ref[ROW_BO:ROW_BO + 1, 0:E]
    b2 = vecs_ref[ROW_B2:ROW_B2 + 1, 0:E]
    g1 = vecs_ref[ROW_G1:ROW_G1 + 1, 0:E]
    be1 = vecs_ref[ROW_BE1:ROW_BE1 + 1, 0:E]
    g2 = vecs_ref[ROW_G2:ROW_G2 + 1, 0:E]
    be2 = vecs_ref[ROW_BE2:ROW_BE2 + 1, 0:E]
    b1 = vecs_ref[ROW_B1:ROW_B1 + 1, 0:FFN]

    scale = 1.0 / math.sqrt(HEAD_DIM)
    # contract last dim of both operands (no kh.T materialization)
    dn = (((1,), (1,)), ((), ()))

    for b in range(N):                        # static unroll over the batch
        tgt = tgt_ref[b]                      # (L, E)
        mem = mem_ref[b]                      # (S, E)
        q_in = tgt + posd_ref[b]              # with_pos_embed(tgt, pos_dec)
        k_in = mem + pose_ref[b]              # with_pos_embed(memory, pos_enc)

        # ---- multi-head cross attention (MXU) ----
        q = jnp.dot(q_in, wq, preferred_element_type=jnp.float32) + bq
        k = jnp.dot(k_in, wk, preferred_element_type=jnp.float32) + bk
        v = jnp.dot(mem, wv, preferred_element_type=jnp.float32) + bv

        attn = jnp.zeros((L, E), jnp.float32) + bo          # start from out-proj bias
        attw_sum = jnp.zeros((L, S), jnp.float32)
        for h in range(NHEAD):                # static unroll over heads
            lo = h * HEAD_DIM
            qh = q[:, lo:lo + HEAD_DIM] * scale              # (L, Dh)
            kh = k[:, lo:lo + HEAD_DIM]                      # (S, Dh)
            vh = v[:, lo:lo + HEAD_DIM]                      # (S, Dh)

            logits = lax.dot_general(qh, kh, dimension_numbers=dn,
                                     preferred_element_type=jnp.float32)  # (L, S)
            logits = logits - jnp.max(logits, axis=-1, keepdims=True)
            p = jnp.exp(logits)
            p = p * pl.reciprocal(jnp.sum(p, axis=-1, keepdims=True), approx=True)
            attw_sum = attw_sum + p

            ctx = jnp.dot(p, vh, preferred_element_type=jnp.float32)      # (L, Dh)
            # accumulate the output projection per head: no lane-dim concat
            attn = attn + jnp.dot(ctx, wo[lo:lo + HEAD_DIM, :],
                                  preferred_element_type=jnp.float32)

        # head-averaged attention weights (PyTorch MHA default return)
        attw_ref[b] = attw_sum * (1.0 / NHEAD)

        # ---- residual + LayerNorm1 ----
        x = tgt + attn
        mu = jnp.mean(x, axis=-1, keepdims=True)
        var = jnp.mean((x - mu) ** 2, axis=-1, keepdims=True)
        x = (x - mu) * lax.rsqrt(var + EPS) * g1 + be1

        # ---- feed-forward + residual + LayerNorm2 ----
        h1 = jnp.dot(x, w1_ref[...], preferred_element_type=jnp.float32) + b1
        h1 = jnp.maximum(h1, 0.0)                                          # ReLU
        ff = jnp.dot(h1, w2_ref[...], preferred_element_type=jnp.float32) + b2
        y = x + ff
        mu2 = jnp.mean(y, axis=-1, keepdims=True)
        var2 = jnp.mean((y - mu2) ** 2, axis=-1, keepdims=True)
        y = (y - mu2) * lax.rsqrt(var2 + EPS) * g2 + be2

        out_ref[b] = y


def make_params(key):
    ks = jax.random.split(key, 6)
    s = 1.0 / math.sqrt(E)
    wq = jax.random.normal(ks[0], (E, E), jnp.float32) * s
    wk = jax.random.normal(ks[1], (E, E), jnp.float32) * s
    wv = jax.random.normal(ks[2], (E, E), jnp.float32) * s
    wo = jax.random.normal(ks[3], (E, E), jnp.float32) * s
    w1 = jax.random.normal(ks[4], (E, FFN), jnp.float32) * s
    w2 = jax.random.normal(ks[5], (FFN, E), jnp.float32) * (1.0 / math.sqrt(FFN))

    # NOTE: weights apply as x @ W; weights from a PyTorch checkpoint (out,in)
    # would need a transpose before packing.
    vecs = jnp.zeros((10, FFN), jnp.float32)
    vecs = vecs.at[ROW_G1, :E].set(1.0)   # LayerNorm1 gamma
    vecs = vecs.at[ROW_G2, :E].set(1.0)   # LayerNorm2 gamma
    # all linear biases / LN betas stay zero (rows already zero)

    return dict(
        w_attn=jnp.stack([wq, wk, wv, wo], axis=0),   # (4, E, E)
        w1=w1, w2=w2, vecs=vecs,
    )


@functools.partial(jax.jit, static_argnums=())
def decoder_forward(tgt, memory, pos_dec, pos_enc, params):
    # tgt: (L, N, E), memory: (S, N, E) — PyTorch seq-first layout.
    tgt_bf = jnp.transpose(tgt, (1, 0, 2))        # (N, L, E)
    mem_bf = jnp.transpose(memory, (1, 0, 2))     # (N, S, E)
    posd_bf = jnp.transpose(pos_dec, (1, 0, 2))
    pose_bf = jnp.transpose(pos_enc, (1, 0, 2))

    full = lambda shp: pl.BlockSpec(shp, lambda i, _s=len(shp): (0,) * _s)

    in_specs = [
        full((N, L, E)),    # tgt
        full((N, S, E)),    # memory
        full((N, L, E)),    # pos_dec
        full((N, S, E)),    # pos_enc
        full((4, E, E)),    # packed wq/wk/wv/wo
        full((E, FFN)),     # w1
        full((FFN, E)),     # w2
        full((10, FFN)),    # packed biases / LN params
    ]
    out_specs = [
        full((N, L, E)),
        full((N, L, S)),
    ]

    out_bf, attw = pl.pallas_call(
        decoder_cfa_kernel,
        out_shape=(jax.ShapeDtypeStruct((N, L, E), jnp.float32),
                   jax.ShapeDtypeStruct((N, L, S), jnp.float32)),
        grid_spec=pltpu.PrefetchScalarGridSpec(
            num_scalar_prefetch=0,
            grid=(1,),                       # single step: whole batch in-kernel
            in_specs=in_specs,
            out_specs=out_specs,
        ),
        compiler_params=pltpu.CompilerParams(
            dimension_semantics=("arbitrary",)),
    )(tgt_bf, mem_bf, posd_bf, pose_bf,
      params["w_attn"], params["w1"], params["w2"], params["vecs"])

    # Decoder.norm is None -> no final norm.
    output = jnp.transpose(out_bf, (1, 0, 2))     # back to (L, N, E)
    return output, attw                            # atten_output: (N, L, S)


if __name__ == "__main__":
    key = jax.random.PRNGKey(0)
    k_tgt, k_mem, k_pd, k_pe, k_par = jax.random.split(key, 5)

    tgt = jax.random.normal(k_tgt, (L, N, E), jnp.float32)
    memory = jax.random.normal(k_mem, (S, N, E), jnp.float32)
    pos_dec = jax.random.normal(k_pd, (L, N, E), jnp.float32) * 0.1
    pos_enc = jax.random.normal(k_pe, (S, N, E), jnp.float32) * 0.1

    params = make_params(k_par)

    output, atten_output = decoder_forward(tgt, memory, pos_dec, pos_enc, params)
    jax.block_until_ready((output, atten_output))

    assert output.shape == (L, N, E)
    assert atten_output.shape == (N, L, S)
    # attention-weight rows must sum to ~1 (approx EUP reciprocal => looser atol)
    assert bool(jnp.allclose(jnp.sum(atten_output, axis=-1), 1.0, atol=2e-3))
    assert bool(jnp.all(jnp.isfinite(output)))
    print("KERNEL_OK")
</pallas_src>

<mosaic_0001>
module attributes {stable_mosaic.version = 11 : i64} {
  func.func @decoder_cfa_kernel(%arg0: i32, %arg1: memref<2x8x32xf32, #tpu.memory_space<vmem>>, %arg2: memref<2x16x32xf32, #tpu.memory_space<vmem>>, %arg3: memref<2x8x32xf32, #tpu.memory_space<vmem>>, %arg4: memref<2x16x32xf32, #tpu.memory_space<vmem>>, %arg5: memref<4x32x32xf32, #tpu.memory_space<vmem>>, %arg6: memref<32x64xf32, #tpu.memory_space<vmem>>, %arg7: memref<64x32xf32, #tpu.memory_space<vmem>>, %arg8: memref<10x64xf32, #tpu.memory_space<vmem>>, %arg9: memref<2x8x32xf32, #tpu.memory_space<vmem>>, %arg10: memref<2x8x16xf32, #tpu.memory_space<vmem>>) attributes {dimension_semantics = [#tpu.dimension_semantics<arbitrary>], iteration_bounds = array<i64: 1>, scalar_prefetch = 0 : i64, scratch_operands = 0 : i64, tpu.core_type = #tpu.core_type<tc>, window_params = [{pipeline_mode = #tpu.pipeline_mode<synchronous>, transform_indices = @transform_0, window_bounds = array<i64: 2, 8, 32>}, {pipeline_mode = #tpu.pipeline_mode<synchronous>, transform_indices = @transform_1, window_bounds = array<i64: 2, 16, 32>}, {pipeline_mode = #tpu.pipeline_mode<synchronous>, transform_indices = @transform_2, window_bounds = array<i64: 2, 8, 32>}, {pipeline_mode = #tpu.pipeline_mode<synchronous>, transform_indices = @transform_3, window_bounds = array<i64: 2, 16, 32>}, {pipeline_mode = #tpu.pipeline_mode<synchronous>, transform_indices = @transform_4, window_bounds = array<i64: 4, 32, 32>}, {pipeline_mode = #tpu.pipeline_mode<synchronous>, transform_indices = @transform_5, window_bounds = array<i64: 32, 64>}, {pipeline_mode = #tpu.pipeline_mode<synchronous>, transform_indices = @transform_6, window_bounds = array<i64: 64, 32>}, {pipeline_mode = #tpu.pipeline_mode<synchronous>, transform_indices = @transform_7, window_bounds = array<i64: 10, 64>}, {pipeline_mode = #tpu.pipeline_mode<synchronous>, transform_indices = @transform_8, window_bounds = array<i64: 2, 8, 32>}, {pipeline_mode = #tpu.pipeline_mode<synchronous>, transform_indices = @transform_9, window_bounds = array<i64: 2, 8, 16>}]} {
    %c0 = arith.constant 0 : index
    %c0_0 = arith.constant 0 : index
    %c0_1 = arith.constant 0 : index
    %0 = vector.load %arg5[%c0, %c0_0, %c0_1] : memref<4x32x32xf32, #tpu.memory_space<vmem>>, vector<1x32x32xf32>
    %1 = vector.shape_cast %0 : vector<1x32x32xf32> to vector<32x32xf32>
    %c1 = arith.constant 1 : index
    %c0_2 = arith.constant 0 : index
    %c0_3 = arith.constant 0 : index
    %2 = vector.load %arg5[%c1, %c0_2, %c0_3] : memref<4x32x32xf32, #tpu.memory_space<vmem>>, vector<1x32x32xf32>
    %3 = vector.shape_cast %2 : vector<1x32x32xf32> to vector<32x32xf32>
    %c2 = arith.constant 2 : index
    %c0_4 = arith.constant 0 : index
    %c0_5 = arith.constant 0 : index
    %4 = vector.load %arg5[%c2, %c0_4, %c0_5] : memref<4x32x32xf32, #tpu.memory_space<vmem>>, vector<1x32x32xf32>
    %5 = vector.shape_cast %4 : vector<1x32x32xf32> to vector<32x32xf32>
    %c3 = arith.constant 3 : index
    %c0_6 = arith.constant 0 : index
    %c0_7 = arith.constant 0 : index
    %6 = vector.load %arg5[%c3, %c0_6, %c0_7] : memref<4x32x32xf32, #tpu.memory_space<vmem>>, vector<1x32x32xf32>
    %7 = vector.shape_cast %6 : vector<1x32x32xf32> to vector<32x32xf32>
    %c0_8 = arith.constant 0 : index
    %c0_9 = arith.constant 0 : index
    %8 = vector.load %arg8[%c0_8, %c0_9] : memref<10x64xf32, #tpu.memory_space<vmem>>, vector<1x32xf32>
    %c1_10 = arith.constant 1 : index
    %c0_11 = arith.constant 0 : index
    %9 = vector.load %arg8[%c1_10, %c0_11] : memref<10x64xf32, #tpu.memory_space<vmem>>, vector<1x32xf32>
    %c2_12 = arith.constant 2 : index
    %c0_13 = arith.constant 0 : index
    %10 = vector.load %arg8[%c2_12, %c0_13] : memref<10x64xf32, #tpu.memory_space<vmem>>, vector<1x32xf32>
    %c3_14 = arith.constant 3 : index
    %c0_15 = arith.constant 0 : index
    %11 = vector.load %arg8[%c3_14, %c0_15] : memref<10x64xf32, #tpu.memory_space<vmem>>, vector<1x32xf32>
    %c4 = arith.constant 4 : index
    %c0_16 = arith.constant 0 : index
    %12 = vector.load %arg8[%c4, %c0_16] : memref<10x64xf32, #tpu.memory_space<vmem>>, vector<1x32xf32>
    %c5 = arith.constant 5 : index
    %c0_17 = arith.constant 0 : index
    %13 = vector.load %arg8[%c5, %c0_17] : memref<10x64xf32, #tpu.memory_space<vmem>>, vector<1x32xf32>
    %c6 = arith.constant 6 : index
    %c0_18 = arith.constant 0 : index
    %14 = vector.load %arg8[%c6, %c0_18] : memref<10x64xf32, #tpu.memory_space<vmem>>, vector<1x32xf32>
    %c7 = arith.constant 7 : index
    %c0_19 = arith.constant 0 : index
    %15 = vector.load %arg8[%c7, %c0_19] : memref<10x64xf32, #tpu.memory_space<vmem>>, vector<1x32xf32>
    %c8 = arith.constant 8 : index
    %c0_20 = arith.constant 0 : index
    %16 = vector.load %arg8[%c8, %c0_20] : memref<10x64xf32, #tpu.memory_space<vmem>>, vector<1x32xf32>
    %c9 = arith.constant 9 : index
    %c0_21 = arith.constant 0 : index
    %17 = vector.load %arg8[%c9, %c0_21] : memref<10x64xf32, #tpu.memory_space<vmem>>, vector<1x64xf32>
    %c0_22 = arith.constant 0 : index
    %c0_23 = arith.constant 0 : index
    %c0_24 = arith.constant 0 : index
    %18 = vector.load %arg1[%c0_22, %c0_23, %c0_24] : memref<2x8x32xf32, #tpu.memory_space<vmem>>, vector<1x8x32xf32>
    %19 = vector.shape_cast %18 : vector<1x8x32xf32> to vector<8x32xf32>
    %c0_25 = arith.constant 0 : index
    %c0_26 = arith.constant 0 : index
    %c0_27 = arith.constant 0 : index
    %20 = vector.load %arg2[%c0_25, %c0_26, %c0_27] : memref<2x16x32xf32, #tpu.memory_space<vmem>>, vector<1x16x32xf32>
    %21 = vector.shape_cast %20 : vector<1x16x32xf32> to vector<16x32xf32>
    %c0_28 = arith.constant 0 : index
    %c0_29 = arith.constant 0 : index
    %c0_30 = arith.constant 0 : index
    %22 = vector.load %arg3[%c0_28, %c0_29, %c0_30] : memref<2x8x32xf32, #tpu.memory_space<vmem>>, vector<1x8x32xf32>
    %23 = vector.shape_cast %22 : vector<1x8x32xf32> to vector<8x32xf32>
    %24 = arith.addf %19, %23 : vector<8x32xf32>
    %c0_31 = arith.constant 0 : index
    %c0_32 = arith.constant 0 : index
    %c0_33 = arith.constant 0 : index
    %25 = vector.load %arg4[%c0_31, %c0_32, %c0_33] : memref<2x16x32xf32, #tpu.memory_space<vmem>>, vector<1x16x32xf32>
    %26 = vector.shape_cast %25 : vector<1x16x32xf32> to vector<16x32xf32>
    %27 = arith.addf %21, %26 : vector<16x32xf32>
    %cst = arith.constant dense<0.000000e+00> : vector<8x32xf32>
    %28 = tpu.matmul %24, %1, %cst {dimension_numbers = #tpu.dot_dimension_numbers<[1], [0], [0], [1], [0, 0, 1, 1], [], []>} : vector<8x32xf32>, vector<32x32xf32>, vector<8x32xf32> -> vector<8x32xf32>
    %29 = vector.broadcast %8 : vector<1x32xf32> to vector<8x32xf32>
    %30 = arith.addf %28, %29 : vector<8x32xf32>
    %cst_34 = arith.constant dense<0.000000e+00> : vector<16x32xf32>
    %31 = tpu.matmul %27, %3, %cst_34 {dimension_numbers = #tpu.dot_dimension_numbers<[1], [0], [0], [1], [0, 0, 1, 1], [], []>} : vector<16x32xf32>, vector<32x32xf32>, vector<16x32xf32> -> vector<16x32xf32>
    %32 = vector.broadcast %9 : vector<1x32xf32> to vector<16x32xf32>
    %33 = arith.addf %31, %32 : vector<16x32xf32>
    %cst_35 = arith.constant dense<0.000000e+00> : vector<16x32xf32>
    %34 = tpu.matmul %21, %5, %cst_35 {dimension_numbers = #tpu.dot_dimension_numbers<[1], [0], [0], [1], [0, 0, 1, 1], [], []>} : vector<16x32xf32>, vector<32x32xf32>, vector<16x32xf32> -> vector<16x32xf32>
    %35 = vector.broadcast %10 : vector<1x32xf32> to vector<16x32xf32>
    %36 = arith.addf %34, %35 : vector<16x32xf32>
    %cst_36 = arith.constant 0.000000e+00 : f32
    %37 = vector.broadcast %cst_36 : f32 to vector<8x32xf32>
    %38 = vector.broadcast %11 : vector<1x32xf32> to vector<8x32xf32>
    %39 = arith.addf %37, %38 : vector<8x32xf32>
    %cst_37 = arith.constant 0.000000e+00 : f32
    %40 = vector.broadcast %cst_37 : f32 to vector<8x16xf32>
    %41 = vector.extract_strided_slice %30 {offsets = [0, 0], sizes = [8, 8], strides = [1, 1]} : vector<8x32xf32> to vector<8x8xf32>
    %cst_38 = arith.constant 0.353553385 : f32
    %42 = vector.broadcast %cst_38 : f32 to vector<8x8xf32>
    %43 = arith.mulf %41, %42 : vector<8x8xf32>
    %44 = vector.extract_strided_slice %33 {offsets = [0, 0], sizes = [16, 8], strides = [1, 1]} : vector<16x32xf32> to vector<16x8xf32>
    %45 = vector.extract_strided_slice %36 {offsets = [0, 0], sizes = [16, 8], strides = [1, 1]} : vector<16x32xf32> to vector<16x8xf32>
    %cst_39 = arith.constant dense<0.000000e+00> : vector<8x16xf32>
    %46 = tpu.matmul %43, %44, %cst_39 {dimension_numbers = #tpu.dot_dimension_numbers<[1], [1], [0], [0], [0, 0, 1, 0], [], []>} : vector<8x8xf32>, vector<16x8xf32>, vector<8x16xf32> -> vector<8x16xf32>
    %cst_40 = arith.constant dense<0xFF800000> : vector<8xf32>
    %47 = vector.multi_reduction <maximumf>, %46, %cst_40 [1] : vector<8x16xf32> to vector<8xf32>
    %48 = vector.shape_cast %47 : vector<8xf32> to vector<8x1xf32>
    %49 = vector.broadcast %48 : vector<8x1xf32> to vector<8x16xf32>
    %50 = arith.subf %46, %49 : vector<8x16xf32>
    %51 = math.exp %50 : vector<8x16xf32>
    %cst_41 = arith.constant dense<0.000000e+00> : vector<8xf32>
    %52 = vector.multi_reduction <add>, %51, %cst_41 [1] : vector<8x16xf32> to vector<8xf32>
    %53 = vector.shape_cast %52 : vector<8xf32> to vector<8x1xf32>
    %54 = tpu.reciprocal %53 {approx = true} : vector<8x1xf32> -> vector<8x1xf32>
    %55 = vector.broadcast %54 : vector<8x1xf32> to vector<8x16xf32>
    %56 = arith.mulf %51, %55 : vector<8x16xf32>
    %57 = arith.addf %40, %56 : vector<8x16xf32>
    %cst_42 = arith.constant dense<0.000000e+00> : vector<8x8xf32>
    %58 = tpu.matmul %56, %45, %cst_42 {dimension_numbers = #tpu.dot_dimension_numbers<[1], [0], [0], [1], [0, 0, 1, 1], [], []>} : vector<8x16xf32>, vector<16x8xf32>, vector<8x8xf32> -> vector<8x8xf32>
    %59 = vector.extract_strided_slice %7 {offsets = [0, 0], sizes = [8, 32], strides = [1, 1]} : vector<32x32xf32> to vector<8x32xf32>
    %cst_43 = arith.constant dense<0.000000e+00> : vector<8x32xf32>
    %60 = tpu.matmul %58, %59, %cst_43 {dimension_numbers = #tpu.dot_dimension_numbers<[1], [0], [0], [1], [0, 0, 1, 1], [], []>} : vector<8x8xf32>, vector<8x32xf32>, vector<8x32xf32> -> vector<8x32xf32>
    %61 = arith.addf %39, %60 : vector<8x32xf32>
    %62 = vector.extract_strided_slice %30 {offsets = [0, 8], sizes = [8, 8], strides = [1, 1]} : vector<8x32xf32> to vector<8x8xf32>
    %cst_44 = arith.constant 0.353553385 : f32
    %63 = vector.broadcast %cst_44 : f32 to vector<8x8xf32>
    %64 = arith.mulf %62, %63 : vector<8x8xf32>
    %65 = vector.extract_strided_slice %33 {offsets = [0, 8], sizes = [16, 8], strides = [1, 1]} : vector<16x32xf32> to vector<16x8xf32>
    %66 = vector.extract_strided_slice %36 {offsets = [0, 8], sizes = [16, 8], strides = [1, 1]} : vector<16x32xf32> to vector<16x8xf32>
    %cst_45 = arith.constant dense<0.000000e+00> : vector<8x16xf32>
    %67 = tpu.matmul %64, %65, %cst_45 {dimension_numbers = #tpu.dot_dimension_numbers<[1], [1], [0], [0], [0, 0, 1, 0], [], []>} : vector<8x8xf32>, vector<16x8xf32>, vector<8x16xf32> -> vector<8x16xf32>
    %cst_46 = arith.constant dense<0xFF800000> : vector<8xf32>
    %68 = vector.multi_reduction <maximumf>, %67, %cst_46 [1] : vector<8x16xf32> to vector<8xf32>
    %69 = vector.shape_cast %68 : vector<8xf32> to vector<8x1xf32>
    %70 = vector.broadcast %69 : vector<8x1xf32> to vector<8x16xf32>
    %71 = arith.subf %67, %70 : vector<8x16xf32>
    %72 = math.exp %71 : vector<8x16xf32>
    %cst_47 = arith.constant dense<0.000000e+00> : vector<8xf32>
    %73 = vector.multi_reduction <add>, %72, %cst_47 [1] : vector<8x16xf32> to vector<8xf32>
    %74 = vector.shape_cast %73 : vector<8xf32> to vector<8x1xf32>
    %75 = tpu.reciprocal %74 {approx = true} : vector<8x1xf32> -> vector<8x1xf32>
    %76 = vector.broadcast %75 : vector<8x1xf32> to vector<8x16xf32>
    %77 = arith.mulf %72, %76 : vector<8x16xf32>
    %78 = arith.addf %57, %77 : vector<8x16xf32>
    %cst_48 = arith.constant dense<0.000000e+00> : vector<8x8xf32>
    %79 = tpu.matmul %77, %66, %cst_48 {dimension_numbers = #tpu.dot_dimension_numbers<[1], [0], [0], [1], [0, 0, 1, 1], [], []>} : vector<8x16xf32>, vector<16x8xf32>, vector<8x8xf32> -> vector<8x8xf32>
    %80 = vector.extract_strided_slice %7 {offsets = [8, 0], sizes = [8, 32], strides = [1, 1]} : vector<32x32xf32> to vector<8x32xf32>
    %cst_49 = arith.constant dense<0.000000e+00> : vector<8x32xf32>
    %81 = tpu.matmul %79, %80, %cst_49 {dimension_numbers = #tpu.dot_dimension_numbers<[1], [0], [0], [1], [0, 0, 1, 1], [], []>} : vector<8x8xf32>, vector<8x32xf32>, vector<8x32xf32> -> vector<8x32xf32>
    %82 = arith.addf %61, %81 : vector<8x32xf32>
    %83 = vector.extract_strided_slice %30 {offsets = [0, 16], sizes = [8, 8], strides = [1, 1]} : vector<8x32xf32> to vector<8x8xf32>
    %cst_50 = arith.constant 0.353553385 : f32
    %84 = vector.broadcast %cst_50 : f32 to vector<8x8xf32>
    %85 = arith.mulf %83, %84 : vector<8x8xf32>
    %86 = vector.extract_strided_slice %33 {offsets = [0, 16], sizes = [16, 8], strides = [1, 1]} : vector<16x32xf32> to vector<16x8xf32>
    %87 = vector.extract_strided_slice %36 {offsets = [0, 16], sizes = [16, 8], strides = [1, 1]} : vector<16x32xf32> to vector<16x8xf32>
    %cst_51 = arith.constant dense<0.000000e+00> : vector<8x16xf32>
    %88 = tpu.matmul %85, %86, %cst_51 {dimension_numbers = #tpu.dot_dimension_numbers<[1], [1], [0], [0], [0, 0, 1, 0], [], []>} : vector<8x8xf32>, vector<16x8xf32>, vector<8x16xf32> -> vector<8x16xf32>
    %cst_52 = arith.constant dense<0xFF800000> : vector<8xf32>
    %89 = vector.multi_reduction <maximumf>, %88, %cst_52 [1] : vector<8x16xf32> to vector<8xf32>
    %90 = vector.shape_cast %89 : vector<8xf32> to vector<8x1xf32>
    %91 = vector.broadcast %90 : vector<8x1xf32> to vector<8x16xf32>
    %92 = arith.subf %88, %91 : vector<8x16xf32>
    %93 = math.exp %92 : vector<8x16xf32>
    %cst_53 = arith.constant dense<0.000000e+00> : vector<8xf32>
    %94 = vector.multi_reduction <add>, %93, %cst_53 [1] : vector<8x16xf32> to vector<8xf32>
    %95 = vector.shape_cast %94 : vector<8xf32> to vector<8x1xf32>
    %96 = tpu.reciprocal %95 {approx = true} : vector<8x1xf32> -> vector<8x1xf32>
    %97 = vector.broadcast %96 : vector<8x1xf32> to vector<8x16xf32>
    %98 = arith.mulf %93, %97 : vector<8x16xf32>
    %99 = arith.addf %78, %98 : vector<8x16xf32>
    %cst_54 = arith.constant dense<0.000000e+00> : vector<8x8xf32>
    %100 = tpu.matmul %98, %87, %cst_54 {dimension_numbers = #tpu.dot_dimension_numbers<[1], [0], [0], [1], [0, 0, 1, 1], [], []>} : vector<8x16xf32>, vector<16x8xf32>, vector<8x8xf32> -> vector<8x8xf32>
    %101 = vector.extract_strided_slice %7 {offsets = [16, 0], sizes = [8, 32], strides = [1, 1]} : vector<32x32xf32> to vector<8x32xf32>
    %cst_55 = arith.constant dense<0.000000e+00> : vector<8x32xf32>
    %102 = tpu.matmul %100, %101, %cst_55 {dimension_numbers = #tpu.dot_dimension_numbers<[1], [0], [0], [1], [0, 0, 1, 1], [], []>} : vector<8x8xf32>, vector<8x32xf32>, vector<8x32xf32> -> vector<8x32xf32>
    %103 = arith.addf %82, %102 : vector<8x32xf32>
    %104 = vector.extract_strided_slice %30 {offsets = [0, 24], sizes = [8, 8], strides = [1, 1]} : vector<8x32xf32> to vector<8x8xf32>
    %cst_56 = arith.constant 0.353553385 : f32
    %105 = vector.broadcast %cst_56 : f32 to vector<8x8xf32>
    %106 = arith.mulf %104, %105 : vector<8x8xf32>
    %107 = vector.extract_strided_slice %33 {offsets = [0, 24], sizes = [16, 8], strides = [1, 1]} : vector<16x32xf32> to vector<16x8xf32>
    %108 = vector.extract_strided_slice %36 {offsets = [0, 24], sizes = [16, 8], strides = [1, 1]} : vector<16x32xf32> to vector<16x8xf32>
    %cst_57 = arith.constant dense<0.000000e+00> : vector<8x16xf32>
    %109 = tpu.matmul %106, %107, %cst_57 {dimension_numbers = #tpu.dot_dimension_numbers<[1], [1], [0], [0], [0, 0, 1, 0], [], []>} : vector<8x8xf32>, vector<16x8xf32>, vector<8x16xf32> -> vector<8x16xf32>
    %cst_58 = arith.constant dense<0xFF800000> : vector<8xf32>
    %110 = vector.multi_reduction <maximumf>, %109, %cst_58 [1] : vector<8x16xf32> to vector<8xf32>
    %111 = vector.shape_cast %110 : vector<8xf32> to vector<8x1xf32>
    %112 = vector.broadcast %111 : vector<8x1xf32> to vector<8x16xf32>
    %113 = arith.subf %109, %112 : vector<8x16xf32>
    %114 = math.exp %113 : vector<8x16xf32>
    %cst_59 = arith.constant dense<0.000000e+00> : vector<8xf32>
    %115 = vector.multi_reduction <add>, %114, %cst_59 [1] : vector<8x16xf32> to vector<8xf32>
    %116 = vector.shape_cast %115 : vector<8xf32> to vector<8x1xf32>
    %117 = tpu.reciprocal %116 {approx = true} : vector<8x1xf32> -> vector<8x1xf32>
    %118 = vector.broadcast %117 : vector<8x1xf32> to vector<8x16xf32>
    %119 = arith.mulf %114, %118 : vector<8x16xf32>
    %120 = arith.addf %99, %119 : vector<8x16xf32>
    %cst_60 = arith.constant dense<0.000000e+00> : vector<8x8xf32>
    %121 = tpu.matmul %119, %108, %cst_60 {dimension_numbers = #tpu.dot_dimension_numbers<[1], [0], [0], [1], [0, 0, 1, 1], [], []>} : vector<8x16xf32>, vector<16x8xf32>, vector<8x8xf32> -> vector<8x8xf32>
    %122 = vector.extract_strided_slice %7 {offsets = [24, 0], sizes = [8, 32], strides = [1, 1]} : vector<32x32xf32> to vector<8x32xf32>
    %cst_61 = arith.constant dense<0.000000e+00> : vector<8x32xf32>
    %123 = tpu.matmul %121, %122, %cst_61 {dimension_numbers = #tpu.dot_dimension_numbers<[1], [0], [0], [1], [0, 0, 1, 1], [], []>} : vector<8x8xf32>, vector<8x32xf32>, vector<8x32xf32> -> vector<8x32xf32>
    %124 = arith.addf %103, %123 : vector<8x32xf32>
    %cst_62 = arith.constant 2.500000e-01 : f32
    %125 = vector.broadcast %cst_62 : f32 to vector<8x16xf32>
    %126 = arith.mulf %120, %125 : vector<8x16xf32>
    %c0_63 = arith.constant 0 : index
    %c0_64 = arith.constant 0 : index
    %c0_65 = arith.constant 0 : index
    %127 = vector.load %arg10[%c0_63, %c0_64, %c0_65] : memref<2x8x16xf32, #tpu.memory_space<vmem>>, vector<1x8x16xf32>
    %128 = vector.shape_cast %127 : vector<1x8x16xf32> to vector<8x16xf32>
    %129 = vector.shape_cast %126 : vector<8x16xf32> to vector<1x8x16xf32>
    tpu.vector_store %arg10[%c0_63, %c0_64, %c0_65], %129 {strides = array<i32>} : memref<2x8x16xf32, #tpu.memory_space<vmem>>, vector<1x8x16xf32>,
    %130 = arith.addf %19, %124 : vector<8x32xf32>
    %cst_66 = arith.constant dense<0.000000e+00> : vector<8xf32>
    %131 = vector.multi_reduction <add>, %130, %cst_66 [1] : vector<8x32xf32> to vector<8xf32>
    %132 = vector.shape_cast %131 : vector<8xf32> to vector<8x1xf32>
    %cst_67 = arith.constant 3.200000e+01 : f32
    %133 = vector.broadcast %cst_67 : f32 to vector<8x1xf32>
    %134 = arith.divf %132, %133 : vector<8x1xf32>
    %135 = vector.broadcast %134 : vector<8x1xf32> to vector<8x32xf32>
    %136 = arith.subf %130, %135 : vector<8x32xf32>
    %137 = arith.mulf %136, %136 : vector<8x32xf32>
    %cst_68 = arith.constant dense<0.000000e+00> : vector<8xf32>
    %138 = vector.multi_reduction <add>, %137, %cst_68 [1] : vector<8x32xf32> to vector<8xf32>
    %139 = vector.shape_cast %138 : vector<8xf32> to vector<8x1xf32>
    %cst_69 = arith.constant 3.200000e+01 : f32
    %140 = vector.broadcast %cst_69 : f32 to vector<8x1xf32>
    %141 = arith.divf %139, %140 : vector<8x1xf32>
    %142 = vector.broadcast %134 : vector<8x1xf32> to vector<8x32xf32>
    %143 = arith.subf %130, %142 : vector<8x32xf32>
    %cst_70 = arith.constant 9.99999974E-6 : f32
    %144 = vector.broadcast %cst_70 : f32 to vector<8x1xf32>
    %145 = arith.addf %141, %144 : vector<8x1xf32>
    %146 = math.rsqrt %145 : vector<8x1xf32>
    %147 = vector.broadcast %146 : vector<8x1xf32> to vector<8x32xf32>
    %148 = arith.mulf %143, %147 : vector<8x32xf32>
    %149 = vector.broadcast %13 : vector<1x32xf32> to vector<8x32xf32>
    %150 = arith.mulf %148, %149 : vector<8x32xf32>
    %151 = vector.broadcast %14 : vector<1x32xf32> to vector<8x32xf32>
    %152 = arith.addf %150, %151 : vector<8x32xf32>
    %c0_71 = arith.constant 0 : index
    %c0_72 = arith.constant 0 : index
    %153 = vector.load %arg6[%c0_71, %c0_72] : memref<32x64xf32, #tpu.memory_space<vmem>>, vector<32x64xf32>
    %cst_73 = arith.constant dense<0.000000e+00> : vector<8x64xf32>
    %154 = tpu.matmul %152, %153, %cst_73 {dimension_numbers = #tpu.dot_dimension_numbers<[1], [0], [0], [1], [0, 0, 1, 1], [], []>} : vector<8x32xf32>, vector<32x64xf32>, vector<8x64xf32> -> vector<8x64xf32>
    %155 = vector.broadcast %17 : vector<1x64xf32> to vector<8x64xf32>
    %156 = arith.addf %154, %155 : vector<8x64xf32>
    %cst_74 = arith.constant 0.000000e+00 : f32
    %157 = vector.broadcast %cst_74 : f32 to vector<8x64xf32>
    %158 = arith.maximumf %156, %157 : vector<8x64xf32>
    %c0_75 = arith.constant 0 : index
    %c0_76 = arith.constant 0 : index
    %159 = vector.load %arg7[%c0_75, %c0_76] : memref<64x32xf32, #tpu.memory_space<vmem>>, vector<64x32xf32>
    %cst_77 = arith.constant dense<0.000000e+00> : vector<8x32xf32>
    %160 = tpu.matmul %158, %159, %cst_77 {dimension_numbers = #tpu.dot_dimension_numbers<[1], [0], [0], [1], [0, 0, 1, 1], [], []>} : vector<8x64xf32>, vector<64x32xf32>, vector<8x32xf32> -> vector<8x32xf32>
    %161 = vector.broadcast %12 : vector<1x32xf32> to vector<8x32xf32>
    %162 = arith.addf %160, %161 : vector<8x32xf32>
    %163 = arith.addf %152, %162 : vector<8x32xf32>
    %cst_78 = arith.constant dense<0.000000e+00> : vector<8xf32>
    %164 = vector.multi_reduction <add>, %163, %cst_78 [1] : vector<8x32xf32> to vector<8xf32>
    %165 = vector.shape_cast %164 : vector<8xf32> to vector<8x1xf32>
    %cst_79 = arith.constant 3.200000e+01 : f32
    %166 = vector.broadcast %cst_79 : f32 to vector<8x1xf32>
    %167 = arith.divf %165, %166 : vector<8x1xf32>
    %168 = vector.broadcast %167 : vector<8x1xf32> to vector<8x32xf32>
    %169 = arith.subf %163, %168 : vector<8x32xf32>
    %170 = arith.mulf %169, %169 : vector<8x32xf32>
    %cst_80 = arith.constant dense<0.000000e+00> : vector<8xf32>
    %171 = vector.multi_reduction <add>, %170, %cst_80 [1] : vector<8x32xf32> to vector<8xf32>
    %172 = vector.shape_cast %171 : vector<8xf32> to vector<8x1xf32>
    %cst_81 = arith.constant 3.200000e+01 : f32
    %173 = vector.broadcast %cst_81 : f32 to vector<8x1xf32>
    %174 = arith.divf %172, %173 : vector<8x1xf32>
    %175 = vector.broadcast %167 : vector<8x1xf32> to vector<8x32xf32>
    %176 = arith.subf %163, %175 : vector<8x32xf32>
    %cst_82 = arith.constant 9.99999974E-6 : f32
    %177 = vector.broadcast %cst_82 : f32 to vector<8x1xf32>
    %178 = arith.addf %174, %177 : vector<8x1xf32>
    %179 = math.rsqrt %178 : vector<8x1xf32>
    %180 = vector.broadcast %179 : vector<8x1xf32> to vector<8x32xf32>
    %181 = arith.mulf %176, %180 : vector<8x32xf32>
    %182 = vector.broadcast %15 : vector<1x32xf32> to vector<8x32xf32>
    %183 = arith.mulf %181, %182 : vector<8x32xf32>
    %184 = vector.broadcast %16 : vector<1x32xf32> to vector<8x32xf32>
    %185 = arith.addf %183, %184 : vector<8x32xf32>
    %c0_83 = arith.constant 0 : index
    %c0_84 = arith.constant 0 : index
    %c0_85 = arith.constant 0 : index
    %186 = vector.load %arg9[%c0_83, %c0_84, %c0_85] : memref<2x8x32xf32, #tpu.memory_space<vmem>>, vector<1x8x32xf32>
    %187 = vector.shape_cast %186 : vector<1x8x32xf32> to vector<8x32xf32>
    %188 = vector.shape_cast %185 : vector<8x32xf32> to vector<1x8x32xf32>
    tpu.vector_store %arg9[%c0_83, %c0_84, %c0_85], %188 {strides = array<i32>} : memref<2x8x32xf32, #tpu.memory_space<vmem>>, vector<1x8x32xf32>,
    %c1_86 = arith.constant 1 : index
    %c0_87 = arith.constant 0 : index
    %c0_88 = arith.constant 0 : index
    %189 = vector.load %arg1[%c1_86, %c0_87, %c0_88] : memref<2x8x32xf32, #tpu.memory_space<vmem>>, vector<1x8x32xf32>
    %190 = vector.shape_cast %189 : vector<1x8x32xf32> to vector<8x32xf32>
    %c1_89 = arith.constant 1 : index
    %c0_90 = arith.constant 0 : index
    %c0_91 = arith.constant 0 : index
    %191 = vector.load %arg2[%c1_89, %c0_90, %c0_91] : memref<2x16x32xf32, #tpu.memory_space<vmem>>, vector<1x16x32xf32>
    %192 = vector.shape_cast %191 : vector<1x16x32xf32> to vector<16x32xf32>
    %c1_92 = arith.constant 1 : index
    %c0_93 = arith.constant 0 : index
    %c0_94 = arith.constant 0 : index
    %193 = vector.load %arg3[%c1_92, %c0_93, %c0_94] : memref<2x8x32xf32, #tpu.memory_space<vmem>>, vector<1x8x32xf32>
    %194 = vector.shape_cast %193 : vector<1x8x32xf32> to vector<8x32xf32>
    %195 = arith.addf %190, %194 : vector<8x32xf32>
    %c1_95 = arith.constant 1 : index
    %c0_96 = arith.constant 0 : index
    %c0_97 = arith.constant 0 : index
    %196 = vector.load %arg4[%c1_95, %c0_96, %c0_97] : memref<2x16x32xf32, #tpu.memory_space<vmem>>, vector<1x16x32xf32>
    %197 = vector.shape_cast %196 : vector<1x16x32xf32> to vector<16x32xf32>
    %198 = arith.addf %192, %197 : vector<16x32xf32>
    %cst_98 = arith.constant dense<0.000000e+00> : vector<8x32xf32>
    %199 = tpu.matmul %195, %1, %cst_98 {dimension_numbers = #tpu.dot_dimension_numbers<[1], [0], [0], [1], [0, 0, 1, 1], [], []>} : vector<8x32xf32>, vector<32x32xf32>, vector<8x32xf32> -> vector<8x32xf32>
    %200 = vector.broadcast %8 : vector<1x32xf32> to vector<8x32xf32>
    %201 = arith.addf %199, %200 : vector<8x32xf32>
    %cst_99 = arith.constant dense<0.000000e+00> : vector<16x32xf32>
    %202 = tpu.matmul %198, %3, %cst_99 {dimension_numbers = #tpu.dot_dimension_numbers<[1], [0], [0], [1], [0, 0, 1, 1], [], []>} : vector<16x32xf32>, vector<32x32xf32>, vector<16x32xf32> -> vector<16x32xf32>
    %203 = vector.broadcast %9 : vector<1x32xf32> to vector<16x32xf32>
    %204 = arith.addf %202, %203 : vector<16x32xf32>
    %cst_100 = arith.constant dense<0.000000e+00> : vector<16x32xf32>
    %205 = tpu.matmul %192, %5, %cst_100 {dimension_numbers = #tpu.dot_dimension_numbers<[1], [0], [0], [1], [0, 0, 1, 1], [], []>} : vector<16x32xf32>, vector<32x32xf32>, vector<16x32xf32> -> vector<16x32xf32>
    %206 = vector.broadcast %10 : vector<1x32xf32> to vector<16x32xf32>
    %207 = arith.addf %205, %206 : vector<16x32xf32>
    %cst_101 = arith.constant 0.000000e+00 : f32
    %208 = vector.broadcast %cst_101 : f32 to vector<8x32xf32>
    %209 = vector.broadcast %11 : vector<1x32xf32> to vector<8x32xf32>
    %210 = arith.addf %208, %209 : vector<8x32xf32>
    %cst_102 = arith.constant 0.000000e+00 : f32
    %211 = vector.broadcast %cst_102 : f32 to vector<8x16xf32>
    %212 = vector.extract_strided_slice %201 {offsets = [0, 0], sizes = [8, 8], strides = [1, 1]} : vector<8x32xf32> to vector<8x8xf32>
    %cst_103 = arith.constant 0.353553385 : f32
    %213 = vector.broadcast %cst_103 : f32 to vector<8x8xf32>
    %214 = arith.mulf %212, %213 : vector<8x8xf32>
    %215 = vector.extract_strided_slice %204 {offsets = [0, 0], sizes = [16, 8], strides = [1, 1]} : vector<16x32xf32> to vector<16x8xf32>
    %216 = vector.extract_strided_slice %207 {offsets = [0, 0], sizes = [16, 8], strides = [1, 1]} : vector<16x32xf32> to vector<16x8xf32>
    %cst_104 = arith.constant dense<0.000000e+00> : vector<8x16xf32>
    %217 = tpu.matmul %214, %215, %cst_104 {dimension_numbers = #tpu.dot_dimension_numbers<[1], [1], [0], [0], [0, 0, 1, 0], [], []>} : vector<8x8xf32>, vector<16x8xf32>, vector<8x16xf32> -> vector<8x16xf32>
    %cst_105 = arith.constant dense<0xFF800000> : vector<8xf32>
    %218 = vector.multi_reduction <maximumf>, %217, %cst_105 [1] : vector<8x16xf32> to vector<8xf32>
    %219 = vector.shape_cast %218 : vector<8xf32> to vector<8x1xf32>
    %220 = vector.broadcast %219 : vector<8x1xf32> to vector<8x16xf32>
    %221 = arith.subf %217, %220 : vector<8x16xf32>
    %222 = math.exp %221 : vector<8x16xf32>
    %cst_106 = arith.constant dense<0.000000e+00> : vector<8xf32>
    %223 = vector.multi_reduction <add>, %222, %cst_106 [1] : vector<8x16xf32> to vector<8xf32>
    %224 = vector.shape_cast %223 : vector<8xf32> to vector<8x1xf32>
    %225 = tpu.reciprocal %224 {approx = true} : vector<8x1xf32> -> vector<8x1xf32>
    %226 = vector.broadcast %225 : vector<8x1xf32> to vector<8x16xf32>
    %227 = arith.mulf %222, %226 : vector<8x16xf32>
    %228 = arith.addf %211, %227 : vector<8x16xf32>
    %cst_107 = arith.constant dense<0.000000e+00> : vector<8x8xf32>
    %229 = tpu.matmul %227, %216, %cst_107 {dimension_numbers = #tpu.dot_dimension_numbers<[1], [0], [0], [1], [0, 0, 1, 1], [], []>} : vector<8x16xf32>, vector<16x8xf32>, vector<8x8xf32> -> vector<8x8xf32>
    %230 = vector.extract_strided_slice %7 {offsets = [0, 0], sizes = [8, 32], strides = [1, 1]} : vector<32x32xf32> to vector<8x32xf32>
    %cst_108 = arith.constant dense<0.000000e+00> : vector<8x32xf32>
    %231 = tpu.matmul %229, %230, %cst_108 {dimension_numbers = #tpu.dot_dimension_numbers<[1], [0], [0], [1], [0, 0, 1, 1], [], []>} : vector<8x8xf32>, vector<8x32xf32>, vector<8x32xf32> -> vector<8x32xf32>
    %232 = arith.addf %210, %231 : vector<8x32xf32>
    %233 = vector.extract_strided_slice %201 {offsets = [0, 8], sizes = [8, 8], strides = [1, 1]} : vector<8x32xf32> to vector<8x8xf32>
    %cst_109 = arith.constant 0.353553385 : f32
    %234 = vector.broadcast %cst_109 : f32 to vector<8x8xf32>
    %235 = arith.mulf %233, %234 : vector<8x8xf32>
    %236 = vector.extract_strided_slice %204 {offsets = [0, 8], sizes = [16, 8], strides = [1, 1]} : vector<16x32xf32> to vector<16x8xf32>
    %237 = vector.extract_strided_slice %207 {offsets = [0, 8], sizes = [16, 8], strides = [1, 1]} : vector<16x32xf32> to vector<16x8xf32>
    %cst_110 = arith.constant dense<0.000000e+00> : vector<8x16xf32>
    %238 = tpu.matmul %235, %236, %cst_110 {dimension_numbers = #tpu.dot_dimension_numbers<[1], [1], [0], [0], [0, 0, 1, 0], [], []>} : vector<8x8xf32>, vector<16x8xf32>, vector<8x16xf32> -> vector<8x16xf32>
    %cst_111 = arith.constant dense<0xFF800000> : vector<8xf32>
    %239 = vector.multi_reduction <maximumf>, %238, %cst_111 [1] : vector<8x16xf32> to vector<8xf32>
    %240 = vector.shape_cast %239 : vector<8xf32> to vector<8x1xf32>
    %241 = vector.broadcast %240 : vector<8x1xf32> to vector<8x16xf32>
    %242 = arith.subf %238, %241 : vector<8x16xf32>
    %243 = math.exp %242 : vector<8x16xf32>
    %cst_112 = arith.constant dense<0.000000e+00> : vector<8xf32>
    %244 = vector.multi_reduction <add>, %243, %cst_112 [1] : vector<8x16xf32> to vector<8xf32>
    %245 = vector.shape_cast %244 : vector<8xf32> to vector<8x1xf32>
    %246 = tpu.reciprocal %245 {approx = true} : vector<8x1xf32> -> vector<8x1xf32>
    %247 = vector.broadcast %246 : vector<8x1xf32> to vector<8x16xf32>
    %248 = arith.mulf %243, %247 : vector<8x16xf32>
    %249 = arith.addf %228, %248 : vector<8x16xf32>
    %cst_113 = arith.constant dense<0.000000e+00> : vector<8x8xf32>
    %250 = tpu.matmul %248, %237, %cst_113 {dimension_numbers = #tpu.dot_dimension_numbers<[1], [0], [0], [1], [0, 0, 1, 1], [], []>} : vector<8x16xf32>, vector<16x8xf32>, vector<8x8xf32> -> vector<8x8xf32>
    %251 = vector.extract_strided_slice %7 {offsets = [8, 0], sizes = [8, 32], strides = [1, 1]} : vector<32x32xf32> to vector<8x32xf32>
    %cst_114 = arith.constant dense<0.000000e+00> : vector<8x32xf32>
    %252 = tpu.matmul %250, %251, %cst_114 {dimension_numbers = #tpu.dot_dimension_numbers<[1], [0], [0], [1], [0, 0, 1, 1], [], []>} : vector<8x8xf32>, vector<8x32xf32>, vector<8x32xf32> -> vector<8x32xf32>
    %253 = arith.addf %232, %252 : vector<8x32xf32>
    %254 = vector.extract_strided_slice %201 {offsets = [0, 16], sizes = [8, 8], strides = [1, 1]} : vector<8x32xf32> to vector<8x8xf32>
    %cst_115 = arith.constant 0.353553385 : f32
    %255 = vector.broadcast %cst_115 : f32 to vector<8x8xf32>
    %256 = arith.mulf %254, %255 : vector<8x8xf32>
    %257 = vector.extract_strided_slice %204 {offsets = [0, 16], sizes = [16, 8], strides = [1, 1]} : vector<16x32xf32> to vector<16x8xf32>
    %258 = vector.extract_strided_slice %207 {offsets = [0, 16], sizes = [16, 8], strides = [1, 1]} : vector<16x32xf32> to vector<16x8xf32>
    %cst_116 = arith.constant dense<0.000000e+00> : vector<8x16xf32>
    %259 = tpu.matmul %256, %257, %cst_116 {dimension_numbers = #tpu.dot_dimension_numbers<[1], [1], [0], [0], [0, 0, 1, 0], [], []>} : vector<8x8xf32>, vector<16x8xf32>, vector<8x16xf32> -> vector<8x16xf32>
    %cst_117 = arith.constant dense<0xFF800000> : vector<8xf32>
    %260 = vector.multi_reduction <maximumf>, %259, %cst_117 [1] : vector<8x16xf32> to vector<8xf32>
    %261 = vector.shape_cast %260 : vector<8xf32> to vector<8x1xf32>
    %262 = vector.broadcast %261 : vector<8x1xf32> to vector<8x16xf32>
    %263 = arith.subf %259, %262 : vector<8x16xf32>
    %264 = math.exp %263 : vector<8x16xf32>
    %cst_118 = arith.constant dense<0.000000e+00> : vector<8xf32>
    %265 = vector.multi_reduction <add>, %264, %cst_118 [1] : vector<8x16xf32> to vector<8xf32>
    %266 = vector.shape_cast %265 : vector<8xf32> to vector<8x1xf32>
    %267 = tpu.reciprocal %266 {approx = true} : vector<8x1xf32> -> vector<8x1xf32>
    %268 = vector.broadcast %267 : vector<8x1xf32> to vector<8x16xf32>
    %269 = arith.mulf %264, %268 : vector<8x16xf32>
    %270 = arith.addf %249, %269 : vector<8x16xf32>
    %cst_119 = arith.constant dense<0.000000e+00> : vector<8x8xf32>
    %271 = tpu.matmul %269, %258, %cst_119 {dimension_numbers = #tpu.dot_dimension_numbers<[1], [0], [0], [1], [0, 0, 1, 1], [], []>} : vector<8x16xf32>, vector<16x8xf32>, vector<8x8xf32> -> vector<8x8xf32>
    %272 = vector.extract_strided_slice %7 {offsets = [16, 0], sizes = [8, 32], strides = [1, 1]} : vector<32x32xf32> to vector<8x32xf32>
    %cst_120 = arith.constant dense<0.000000e+00> : vector<8x32xf32>
    %273 = tpu.matmul %271, %272, %cst_120 {dimension_numbers = #tpu.dot_dimension_numbers<[1], [0], [0], [1], [0, 0, 1, 1], [], []>} : vector<8x8xf32>, vector<8x32xf32>, vector<8x32xf32> -> vector<8x32xf32>
    %274 = arith.addf %253, %273 : vector<8x32xf32>
    %275 = vector.extract_strided_slice %201 {offsets = [0, 24], sizes = [8, 8], strides = [1, 1]} : vector<8x32xf32> to vector<8x8xf32>
    %cst_121 = arith.constant 0.353553385 : f32
    %276 = vector.broadcast %cst_121 : f32 to vector<8x8xf32>
    %277 = arith.mulf %275, %276 : vector<8x8xf32>
    %278 = vector.extract_strided_slice %204 {offsets = [0, 24], sizes = [16, 8], strides = [1, 1]} : vector<16x32xf32> to vector<16x8xf32>
    %279 = vector.extract_strided_slice %207 {offsets = [0, 24], sizes = [16, 8], strides = [1, 1]} : vector<16x32xf32> to vector<16x8xf32>
    %cst_122 = arith.constant dense<0.000000e+00> : vector<8x16xf32>
    %280 = tpu.matmul %277, %278, %cst_122 {dimension_numbers = #tpu.dot_dimension_numbers<[1], [1], [0], [0], [0, 0, 1, 0], [], []>} : vector<8x8xf32>, vector<16x8xf32>, vector<8x16xf32> -> vector<8x16xf32>
    %cst_123 = arith.constant dense<0xFF800000> : vector<8xf32>
    %281 = vector.multi_reduction <maximumf>, %280, %cst_123 [1] : vector<8x16xf32> to vector<8xf32>
    %282 = vector.shape_cast %281 : vector<8xf32> to vector<8x1xf32>
    %283 = vector.broadcast %282 : vector<8x1xf32> to vector<8x16xf32>
    %284 = arith.subf %280, %283 : vector<8x16xf32>
    %285 = math.exp %284 : vector<8x16xf32>
    %cst_124 = arith.constant dense<0.000000e+00> : vector<8xf32>
    %286 = vector.multi_reduction <add>, %285, %cst_124 [1] : vector<8x16xf32> to vector<8xf32>
    %287 = vector.shape_cast %286 : vector<8xf32> to vector<8x1xf32>
    %288 = tpu.reciprocal %287 {approx = true} : vector<8x1xf32> -> vector<8x1xf32>
    %289 = vector.broadcast %288 : vector<8x1xf32> to vector<8x16xf32>
    %290 = arith.mulf %285, %289 : vector<8x16xf32>
    %291 = arith.addf %270, %290 : vector<8x16xf32>
    %cst_125 = arith.constant dense<0.000000e+00> : vector<8x8xf32>
    %292 = tpu.matmul %290, %279, %cst_125 {dimension_numbers = #tpu.dot_dimension_numbers<[1], [0], [0], [1], [0, 0, 1, 1], [], []>} : vector<8x16xf32>, vector<16x8xf32>, vector<8x8xf32> -> vector<8x8xf32>
    %293 = vector.extract_strided_slice %7 {offsets = [24, 0], sizes = [8, 32], strides = [1, 1]} : vector<32x32xf32> to vector<8x32xf32>
    %cst_126 = arith.constant dense<0.000000e+00> : vector<8x32xf32>
    %294 = tpu.matmul %292, %293, %cst_126 {dimension_numbers = #tpu.dot_dimension_numbers<[1], [0], [0], [1], [0, 0, 1, 1], [], []>} : vector<8x8xf32>, vector<8x32xf32>, vector<8x32xf32> -> vector<8x32xf32>
    %295 = arith.addf %274, %294 : vector<8x32xf32>
    %cst_127 = arith.constant 2.500000e-01 : f32
    %296 = vector.broadcast %cst_127 : f32 to vector<8x16xf32>
    %297 = arith.mulf %291, %296 : vector<8x16xf32>
    %c1_128 = arith.constant 1 : index
    %c0_129 = arith.constant 0 : index
    %c0_130 = arith.constant 0 : index
    %298 = vector.load %arg10[%c1_128, %c0_129, %c0_130] : memref<2x8x16xf32, #tpu.memory_space<vmem>>, vector<1x8x16xf32>
    %299 = vector.shape_cast %298 : vector<1x8x16xf32> to vector<8x16xf32>
    %300 = vector.shape_cast %297 : vector<8x16xf32> to vector<1x8x16xf32>
    tpu.vector_store %arg10[%c1_128, %c0_129, %c0_130], %300 {strides = array<i32>} : memref<2x8x16xf32, #tpu.memory_space<vmem>>, vector<1x8x16xf32>,
    %301 = arith.addf %190, %295 : vector<8x32xf32>
    %cst_131 = arith.constant dense<0.000000e+00> : vector<8xf32>
    %302 = vector.multi_reduction <add>, %301, %cst_131 [1] : vector<8x32xf32> to vector<8xf32>
    %303 = vector.shape_cast %302 : vector<8xf32> to vector<8x1xf32>
    %cst_132 = arith.constant 3.200000e+01 : f32
    %304 = vector.broadcast %cst_132 : f32 to vector<8x1xf32>
    %305 = arith.divf %303, %304 : vector<8x1xf32>
    %306 = vector.broadcast %305 : vector<8x1xf32> to vector<8x32xf32>
    %307 = arith.subf %301, %306 : vector<8x32xf32>
    %308 = arith.mulf %307, %307 : vector<8x32xf32>
    %cst_133 = arith.constant dense<0.000000e+00> : vector<8xf32>
    %309 = vector.multi_reduction <add>, %308, %cst_133 [1] : vector<8x32xf32> to vector<8xf32>
    %310 = vector.shape_cast %309 : vector<8xf32> to vector<8x1xf32>
    %cst_134 = arith.constant 3.200000e+01 : f32
    %311 = vector.broadcast %cst_134 : f32 to vector<8x1xf32>
    %312 = arith.divf %310, %311 : vector<8x1xf32>
    %313 = vector.broadcast %305 : vector<8x1xf32> to vector<8x32xf32>
    %314 = arith.subf %301, %313 : vector<8x32xf32>
    %cst_135 = arith.constant 9.99999974E-6 : f32
    %315 = vector.broadcast %cst_135 : f32 to vector<8x1xf32>
    %316 = arith.addf %312, %315 : vector<8x1xf32>
    %317 = math.rsqrt %316 : vector<8x1xf32>
    %318 = vector.broadcast %317 : vector<8x1xf32> to vector<8x32xf32>
    %319 = arith.mulf %314, %318 : vector<8x32xf32>
    %320 = vector.broadcast %13 : vector<1x32xf32> to vector<8x32xf32>
    %321 = arith.mulf %319, %320 : vector<8x32xf32>
    %322 = vector.broadcast %14 : vector<1x32xf32> to vector<8x32xf32>
    %323 = arith.addf %321, %322 : vector<8x32xf32>
    %c0_136 = arith.constant 0 : index
    %c0_137 = arith.constant 0 : index
    %324 = vector.load %arg6[%c0_136, %c0_137] : memref<32x64xf32, #tpu.memory_space<vmem>>, vector<32x64xf32>
    %cst_138 = arith.constant dense<0.000000e+00> : vector<8x64xf32>
    %325 = tpu.matmul %323, %324, %cst_138 {dimension_numbers = #tpu.dot_dimension_numbers<[1], [0], [0], [1], [0, 0, 1, 1], [], []>} : vector<8x32xf32>, vector<32x64xf32>, vector<8x64xf32> -> vector<8x64xf32>
    %326 = vector.broadcast %17 : vector<1x64xf32> to vector<8x64xf32>
    %327 = arith.addf %325, %326 : vector<8x64xf32>
    %cst_139 = arith.constant 0.000000e+00 : f32
    %328 = vector.broadcast %cst_139 : f32 to vector<8x64xf32>
    %329 = arith.maximumf %327, %328 : vector<8x64xf32>
    %c0_140 = arith.constant 0 : index
    %c0_141 = arith.constant 0 : index
    %330 = vector.load %arg7[%c0_140, %c0_141] : memref<64x32xf32, #tpu.memory_space<vmem>>, vector<64x32xf32>
    %cst_142 = arith.constant dense<0.000000e+00> : vector<8x32xf32>
    %331 = tpu.matmul %329, %330, %cst_142 {dimension_numbers = #tpu.dot_dimension_numbers<[1], [0], [0], [1], [0, 0, 1, 1], [], []>} : vector<8x64xf32>, vector<64x32xf32>, vector<8x32xf32> -> vector<8x32xf32>
    %332 = vector.broadcast %12 : vector<1x32xf32> to vector<8x32xf32>
    %333 = arith.addf %331, %332 : vector<8x32xf32>
    %334 = arith.addf %323, %333 : vector<8x32xf32>
    %cst_143 = arith.constant dense<0.000000e+00> : vector<8xf32>
    %335 = vector.multi_reduction <add>, %334, %cst_143 [1] : vector<8x32xf32> to vector<8xf32>
    %336 = vector.shape_cast %335 : vector<8xf32> to vector<8x1xf32>
    %cst_144 = arith.constant 3.200000e+01 : f32
    %337 = vector.broadcast %cst_144 : f32 to vector<8x1xf32>
    %338 = arith.divf %336, %337 : vector<8x1xf32>
    %339 = vector.broadcast %338 : vector<8x1xf32> to vector<8x32xf32>
    %340 = arith.subf %334, %339 : vector<8x32xf32>
    %341 = arith.mulf %340, %340 : vector<8x32xf32>
    %cst_145 = arith.constant dense<0.000000e+00> : vector<8xf32>
    %342 = vector.multi_reduction <add>, %341, %cst_145 [1] : vector<8x32xf32> to vector<8xf32>
    %343 = vector.shape_cast %342 : vector<8xf32> to vector<8x1xf32>
    %cst_146 = arith.constant 3.200000e+01 : f32
    %344 = vector.broadcast %cst_146 : f32 to vector<8x1xf32>
    %345 = arith.divf %343, %344 : vector<8x1xf32>
    %346 = vector.broadcast %338 : vector<8x1xf32> to vector<8x32xf32>
    %347 = arith.subf %334, %346 : vector<8x32xf32>
    %cst_147 = arith.constant 9.99999974E-6 : f32
    %348 = vector.broadcast %cst_147 : f32 to vector<8x1xf32>
    %349 = arith.addf %345, %348 : vector<8x1xf32>
    %350 = math.rsqrt %349 : vector<8x1xf32>
    %351 = vector.broadcast %350 : vector<8x1xf32> to vector<8x32xf32>
    %352 = arith.mulf %347, %351 : vector<8x32xf32>
    %353 = vector.broadcast %15 : vector<1x32xf32> to vector<8x32xf32>
    %354 = arith.mulf %352, %353 : vector<8x32xf32>
    %355 = vector.broadcast %16 : vector<1x32xf32> to vector<8x32xf32>
    %356 = arith.addf %354, %355 : vector<8x32xf32>
    %c1_148 = arith.constant 1 : index
    %c0_149 = arith.constant 0 : index
    %c0_150 = arith.constant 0 : index
    %357 = vector.load %arg9[%c1_148, %c0_149, %c0_150] : memref<2x8x32xf32, #tpu.memory_space<vmem>>, vector<1x8x32xf32>
    %358 = vector.shape_cast %357 : vector<1x8x32xf32> to vector<8x32xf32>
    %359 = vector.shape_cast %356 : vector<8x32xf32> to vector<1x8x32xf32>
    tpu.vector_store %arg9[%c1_148, %c0_149, %c0_150], %359 {strides = array<i32>} : memref<2x8x32xf32, #tpu.memory_space<vmem>>, vector<1x8x32xf32>,
    return
  }
  func.func @transform_0(%arg0: i32) -> (i32, i32, i32) {
    %c0_i32 = arith.constant 0 : i32
    %c0_i32_0 = arith.constant 0 : i32
    %c0_i32_1 = arith.constant 0 : i32
    %c0_i32_2 = arith.constant 0 : i32
    return %c0_i32, %c0_i32_0, %c0_i32_1 : i32, i32, i32
  }
  func.func @transform_1(%arg0: i32) -> (i32, i32, i32) {
    %c0_i32 = arith.constant 0 : i32
    %c0_i32_0 = arith.constant 0 : i32
    %c0_i32_1 = arith.constant 0 : i32
    %c0_i32_2 = arith.constant 0 : i32
    return %c0_i32, %c0_i32_0, %c0_i32_1 : i32, i32, i32
  }
  func.func @transform_2(%arg0: i32) -> (i32, i32, i32) {
    %c0_i32 = arith.constant 0 : i32
    %c0_i32_0 = arith.constant 0 : i32
    %c0_i32_1 = arith.constant 0 : i32
    %c0_i32_2 = arith.constant 0 : i32
    return %c0_i32, %c0_i32_0, %c0_i32_1 : i32, i32, i32
  }
  func.func @transform_3(%arg0: i32) -> (i32, i32, i32) {
    %c0_i32 = arith.constant 0 : i32
    %c0_i32_0 = arith.constant 0 : i32
    %c0_i32_1 = arith.constant 0 : i32
    %c0_i32_2 = arith.constant 0 : i32
    return %c0_i32, %c0_i32_0, %c0_i32_1 : i32, i32, i32
  }
  func.func @transform_4(%arg0: i32) -> (i32, i32, i32) {
    %c0_i32 = arith.constant 0 : i32
    %c0_i32_0 = arith.constant 0 : i32
    %c0_i32_1 = arith.constant 0 : i32
    %c0_i32_2 = arith.constant 0 : i32
    return %c0_i32, %c0_i32_0, %c0_i32_1 : i32, i32, i32
  }
  func.func @transform_5(%arg0: i32) -> (i32, i32) {
    %c0_i32 = arith.constant 0 : i32
    %c0_i32_0 = arith.constant 0 : i32
    %c0_i32_1 = arith.constant 0 : i32
    return %c0_i32, %c0_i32_0 : i32, i32
  }
  func.func @transform_6(%arg0: i32) -> (i32, i32) {
    %c0_i32 = arith.constant 0 : i32
    %c0_i32_0 = arith.constant 0 : i32
    %c0_i32_1 = arith.constant 0 : i32
    return %c0_i32, %c0_i32_0 : i32, i32
  }
  func.func @transform_7(%arg0: i32) -> (i32, i32) {
    %c0_i32 = arith.constant 0 : i32
    %c0_i32_0 = arith.constant 0 : i32
    %c0_i32_1 = arith.constant 0 : i32
    return %c0_i32, %c0_i32_0 : i32, i32
  }
  func.func @transform_8(%arg0: i32) -> (i32, i32, i32) {
    %c0_i32 = arith.constant 0 : i32
    %c0_i32_0 = arith.constant 0 : i32
    %c0_i32_1 = arith.constant 0 : i32
    %c0_i32_2 = arith.constant 0 : i32
    return %c0_i32, %c0_i32_0, %c0_i32_1 : i32, i32, i32
  }
  func.func @transform_9(%arg0: i32) -> (i32, i32, i32) {
    %c0_i32 = arith.constant 0 : i32
    %c0_i32_0 = arith.constant 0 : i32
    %c0_i32_1 = arith.constant 0 : i32
    %c0_i32_2 = arith.constant 0 : i32
    return %c0_i32, %c0_i32_0, %c0_i32_1 : i32, i32, i32
  }
}

</mosaic_0001>

<llo_original>
// kernel: decoder_forward.1
$region0: #{decoder_forward.1}
  #allocation0 [shape = 'u32[]', space=smem, size = 0x4, offset = 0x4, fixed_abs, tag = 'smem constant byte address 0x4 - core index']
  #allocation1 [shape = 'u32[144,128]{1,0:T(1,128)}', space=vmem, size = 0x12000, scoped, tag = 'internal scratch']
  %s0 = inlined_call_operand.vmem [shape: f32[2,8,32], index: 0, kind: input, shape index: {}]
  %s1 = inlined_call_operand.vmem [shape: f32[2,16,32], index: 1, kind: input, shape index: {}]
  %s2 = inlined_call_operand.vmem [shape: f32[2,8,32], index: 2, kind: input, shape index: {}]
  %s3 = inlined_call_operand.vmem [shape: f32[2,16,32], index: 3, kind: input, shape index: {}]
  %s4 = inlined_call_operand.vmem [shape: f32[4,32,32], index: 4, kind: input, shape index: {}]
  %s5 = inlined_call_operand.vmem [shape: f32[32,64], index: 5, kind: input, shape index: {}]
  %s6 = inlined_call_operand.vmem [shape: f32[64,32], index: 6, kind: input, shape index: {}]
  %s7 = inlined_call_operand.vmem [shape: f32[10,64], index: 7, kind: input, shape index: {}]
  %s8 = inlined_call_operand.vmem [shape: f32[2,8,32], index: 8, kind: output, shape index: {0}]
  %s9 = inlined_call_operand.hbm [shape: f32[2,8,16], index: 9, kind: output, shape index: {1}]
  %10 = xla_tuple %s8, %s9
  %s11 = sld [smem:[#allocation0]]
  $region50: #{decoder_forward.1} parent=0
    _
  %s13 = ssub.s32 1, %s11
  %s14 = scalar_select 0, %s13, %s11
  $region1: #{decoder_forward.1} parent=0
    #allocation2 [shape = 'u8[8192]{0}', space=vmem, size = 0x2000, scoped, tag = 'output window, operand 1, single buffered']
    #allocation3 [shape = 's32[1]{0}', space=sflag, size = 0x4, scoped, tag = 'scoped memory for decoder_forward.1']
    %15 = vsyncpa [#allocation3], 0
    // Predicated region
    $region2: #{decoder_forward.1} parent=1 // pred_check
      _
    $region3: #{decoder_forward.1} parent=1 // pred_check_branch
      %17 = sbr.rel (0) target = $region5
    $region4: #{decoder_forward.1} parent=1 // pred_region
      _
    $region5: #{decoder_forward.1} parent=1 // pred_fallthru
      _
    // Predicated region
    $region6: #{decoder_forward.1} parent=1 // pred_check
      _
    $region7: #{decoder_forward.1} parent=1 // pred_check_branch
      %19 = sbr.rel (0) target = $region9
    $region8: #{decoder_forward.1} parent=1 // pred_region
      _
    $region9: #{decoder_forward.1} parent=1 // pred_fallthru
      _
    // Predicated region
    $region10: #{decoder_forward.1} parent=1 // pred_check
      _
    $region11: #{decoder_forward.1} parent=1 // pred_check_branch
      %21 = sbr.rel (0) target = $region13
    $region12: #{decoder_forward.1} parent=1 // pred_region
      _
    $region13: #{decoder_forward.1} parent=1 // pred_fallthru
      _
    // Predicated region
    $region14: #{decoder_forward.1} parent=1 // pred_check
      _
    $region15: #{decoder_forward.1} parent=1 // pred_check_branch
      %23 = sbr.rel (0) target = $region17
    $region16: #{decoder_forward.1} parent=1 // pred_region
      _
    $region17: #{decoder_forward.1} parent=1 // pred_fallthru
      _
    // Predicated region
    $region18: #{decoder_forward.1} parent=1 // pred_check
      _
    $region19: #{decoder_forward.1} parent=1 // pred_check_branch
      %25 = sbr.rel (0) target = $region21
    $region20: #{decoder_forward.1} parent=1 // pred_region
      _
    $region21: #{decoder_forward.1} parent=1 // pred_fallthru
      _
    // Predicated region
    $region22: #{decoder_forward.1} parent=1 // pred_check
      _
    $region23: #{decoder_forward.1} parent=1 // pred_check_branch
      %27 = sbr.rel (0) target = $region25
    $region24: #{decoder_forward.1} parent=1 // pred_region
      _
    $region25: #{decoder_forward.1} parent=1 // pred_fallthru
      _
    // Predicated region
    $region26: #{decoder_forward.1} parent=1 // pred_check
      _
    $region27: #{decoder_forward.1} parent=1 // pred_check_branch
      %29 = sbr.rel (0) target = $region29
    $region28: #{decoder_forward.1} parent=1 // pred_region
      _
    $region29: #{decoder_forward.1} parent=1 // pred_fallthru
      _
    // Predicated region
    $region30: #{decoder_forward.1} parent=1 // pred_check
      _
    $region31: #{decoder_forward.1} parent=1 // pred_check_branch
      %31 = sbr.rel (0) target = $region33
    $region32: #{decoder_forward.1} parent=1 // pred_region
      _
    $region33: #{decoder_forward.1} parent=1 // pred_fallthru
      _
    %v32 = vld [vmem:[%s4] sm:$0xff]
    %v33 = vld [vmem:[%s4 + $0x8] sm:$0xff]
    %v34 = vld [vmem:[%s4 + $0x10] sm:$0xff]
    %v35 = vld [vmem:[%s4 + $0x18] sm:$0xff]
    %s36 = scalar_lea.vmem %s4, 32
    %v37 = vld [vmem:[%s36] sm:$0xff]
    %v38 = vld [vmem:[%s36 + $0x8] sm:$0xff]
    %v39 = vld [vmem:[%s36 + $0x10] sm:$0xff]
    %v40 = vld [vmem:[%s36 + $0x18] sm:$0xff]
    %s41 = scalar_lea.vmem %s4, 64
    %v42 = vld [vmem:[%s41] sm:$0xff]
    %v43 = vld [vmem:[%s41 + $0x8] sm:$0xff]
    %v44 = vld [vmem:[%s41 + $0x10] sm:$0xff]
    %v45 = vld [vmem:[%s41 + $0x18] sm:$0xff]
    %s46 = scalar_lea.vmem %s4, 96
    %v47 = vld [vmem:[%s46] sm:$0xff]
    %v48 = vld [vmem:[%s46 + $0x8] sm:$0xff]
    %v49 = vld [vmem:[%s46 + $0x10] sm:$0xff]
    %v50 = vld [vmem:[%s46 + $0x18] sm:$0xff]
    %v51 = vld [vmem:[%s7] sm:$0x1]
    %v52 = vld [vmem:[%s7 + $0x1] sm:$0x1]
    %v53 = vld [vmem:[%s7 + $0x2] sm:$0x1]
    %v54 = vld [vmem:[%s7 + $0x3] sm:$0x1]
    %v55 = vld [vmem:[%s7 + $0x4] sm:$0x1]
    %v56 = vld [vmem:[%s7 + $0x5] sm:$0x1]
    %v57 = vld [vmem:[%s7 + $0x6] sm:$0x1]
    %v58 = vld [vmem:[%s7 + $0x7] sm:$0x1]
    %v59 = vld [vmem:[%s7 + $0x8] sm:$0x1]
    %v60 = vld [vmem:[%s7 + $0x9] sm:$0x1]
    %v61 = vld [vmem:[%s0] sm:$0xff]
    %v62 = vld [vmem:[%s1] sm:$0xff]
    %v63 = vld [vmem:[%s1 + $0x8] sm:$0xff]
    %v64 = vld [vmem:[%s2] sm:$0xff]
    %v65 = vadd.f32 %v61, %v64
    %v66 = vld [vmem:[%s3] sm:$0xff]
    %v67 = vld [vmem:[%s3 + $0x8] sm:$0xff]
    %v68 = vadd.f32 %v62, %v66
    %v69 = vadd.f32 %v63, %v67
    %v70 = vlaneseq
    %v71 = vshrl.u32 %v70, 7
    %v72 = vsub.s32 0, %v71
    %v73 = vrot.slane %v51, %v72
    %vm74 = vcmask 261120
    %v76 = vsel %vm74, %v65, 0
    %78 = vmatprep.subr.mxu0 0.0
    %79 = vmatpush1.msra.mxu0 %v32
    %80 = vmatprep.subr.mxu0 0.0
    %81 = vmatpush1.msra.mxu0 %v33
    %82 = vmatprep.subr.mxu0 0.0
    %83 = vmatpush1.msra.mxu0 %v34
    %84 = vmatprep.subr.mxu0 0.0
    %85 = vmatpush1.msra.mxu0 %v35
    %86 = vmatprep.subr.mxu0 0.0
    %87 = vmatpush1.msra.mxu0 0.0
    %88 = vmatprep.subr.mxu0 0.0
    %89 = vmatpush1.msra.mxu0 0.0
    %90 = vmatprep.subr.mxu0 0.0
    %91 = vmatpush1.msra.mxu0 0.0
    %92 = vmatprep.subr.mxu0 0.0
    %93 = vmatpush1.msra.mxu0 0.0
    %94 = vmatprep.subr.mxu0 0.0
    %95 = vmatpush1.msra.mxu0 0.0
    %96 = vmatprep.subr.mxu0 0.0
    %97 = vmatpush1.msra.mxu0 0.0
    %98 = vmatprep.subr.mxu0 0.0
    %99 = vmatpush1.msra.mxu0 0.0
    %100 = vmatprep.subr.mxu0 0.0
    %101 = vmatpush1.msra.mxu0 0.0
    %102 = vmatprep.subr.mxu0 0.0
    %103 = vmatpush1.msra.mxu0 0.0
    %104 = vmatprep.subr.mxu0 0.0
    %105 = vmatpush1.msra.mxu0 0.0
    %106 = vmatprep.subr.mxu0 0.0
    %107 = vmatpush1.msra.mxu0 0.0
    %108 = vmatprep.subr.mxu0 0.0
    %109 = vmatpush1.msra.mxu0 0.0
    %110 = vmatprep.subr.mxu0 0.0
    %111 = vmatpush1.msra.mxu0 0.0
    %112 = vmatprep.subr.mxu0 0.0
    %113 = vmatpush1.msra.mxu0 0.0
    %114 = vmatprep.subr.mxu0 0.0
    %115 = vmatpush1.msra.mxu0 0.0
    %116 = vmatprep.subr.mxu0 0.0
    %117 = vmatpush1.msra.mxu0 0.0
    %118 = vmatprep.subr.mxu0 0.0
    %119 = vmatpush1.msra.mxu0 0.0
    %120 = vmatprep.subr.mxu0 0.0
    %121 = vmatpush1.msra.mxu0 0.0
    %122 = vmatprep.subr.mxu0 0.0
    %123 = vmatpush1.msra.mxu0 0.0
    %124 = vmatprep.subr.mxu0 0.0
    %125 = vmatpush1.msra.mxu0 0.0
    %126 = vmatprep.subr.mxu0 0.0
    %127 = vmatpush1.msra.mxu0 0.0
    %128 = vmatprep.subr.mxu0 0.0
    %129 = vmatpush1.msra.mxu0 0.0
    %130 = vmatprep.subr.mxu0 0.0
    %131 = vmatpush1.msra.mxu0 0.0
    %132 = vmatprep.subr.mxu0 0.0
    %133 = vmatpush1.msra.mxu0 0.0
    %134 = vmatprep.subr.mxu0 0.0
    %135 = vmatpush1.msra.mxu0 0.0
    %136 = vmatprep.subr.mxu0 0.0
    %137 = vmatpush1.msra.mxu0 0.0
    %138 = vmatprep.subr.mxu0 0.0
    %139 = vmatpush1.msra.mxu0 0.0
    %140 = vmatprep.subr.mxu0 0.0
    %141 = vmatpush1.msra.mxu0 0.0
    %142 = vmatprep.mubr.f32.mxu0 0.0
    %143 = vmatmul.mubr.f32.gmra.mrb[0].mxu0 %v76
    %v144 = vpop.f32.mrb[0].mxu0
    %v145 = vadd.f32 %v73, %v144
    %v146 = vpop.f32.mrb[0].mxu0
    %147 = vdwg.mxu0
    %v148 = vlaneseq
    %v149 = vshrl.u32 %v148, 7
    %v150 = vsub.s32 0, %v149
    %v151 = vrot.slane %v52, %v150
    %v153 = vsel %vm74, %v68, 0
    %v156 = vsel %vm74, %v69, 0
    %158 = vmatprep.subr.mxu0 0.0
    %159 = vmatpush1.msra.mxu0 %v37
    %160 = vmatprep.subr.mxu0 0.0
    %161 = vmatpush1.msra.mxu0 %v38
    %162 = vmatprep.subr.mxu0 0.0
    %163 = vmatpush1.msra.mxu0 %v39
    %164 = vmatprep.subr.mxu0 0.0
    %165 = vmatpush1.msra.mxu0 %v40
    %166 = vmatprep.subr.mxu0 0.0
    %167 = vmatpush1.msra.mxu0 0.0
    %168 = vmatprep.subr.mxu0 0.0
    %169 = vmatpush1.msra.mxu0 0.0
    %170 = vmatprep.subr.mxu0 0.0
    %171 = vmatpush1.msra.mxu0 0.0
    %172 = vmatprep.subr.mxu0 0.0
    %173 = vmatpush1.msra.mxu0 0.0
    %174 = vmatprep.subr.mxu0 0.0
    %175 = vmatpush1.msra.mxu0 0.0
    %176 = vmatprep.subr.mxu0 0.0
    %177 = vmatpush1.msra.mxu0 0.0
    %178 = vmatprep.subr.mxu0 0.0
    %179 = vmatpush1.msra.mxu0 0.0
    %180 = vmatprep.subr.mxu0 0.0
    %181 = vmatpush1.msra.mxu0 0.0
    %182 = vmatprep.subr.mxu0 0.0
    %183 = vmatpush1.msra.mxu0 0.0
    %184 = vmatprep.subr.mxu0 0.0
    %185 = vmatpush1.msra.mxu0 0.0
    %186 = vmatprep.subr.mxu0 0.0
    %187 = vmatpush1.msra.mxu0 0.0
    %188 = vmatprep.subr.mxu0 0.0
    %189 = vmatpush1.msra.mxu0 0.0
    %190 = vmatprep.subr.mxu0 0.0
    %191 = vmatpush1.msra.mxu0 0.0
    %192 = vmatprep.subr.mxu0 0.0
    %193 = vmatpush1.msra.mxu0 0.0
    %194 = vmatprep.subr.mxu0 0.0
    %195 = vmatpush1.msra.mxu0 0.0
    %196 = vmatprep.subr.mxu0 0.0
    %197 = vmatpush1.msra.mxu0 0.0
    %198 = vmatprep.subr.mxu0 0.0
    %199 = vmatpush1.msra.mxu0 0.0
    %200 = vmatprep.subr.mxu0 0.0
    %201 = vmatpush1.msra.mxu0 0.0
    %202 = vmatprep.subr.mxu0 0.0
    %203 = vmatpush1.msra.mxu0 0.0
    %204 = vmatprep.subr.mxu0 0.0
    %205 = vmatpush1.msra.mxu0 0.0
    %206 = vmatprep.subr.mxu0 0.0
    %207 = vmatpush1.msra.mxu0 0.0
    %208 = vmatprep.subr.mxu0 0.0
    %209 = vmatpush1.msra.mxu0 0.0
    %210 = vmatprep.subr.mxu0 0.0
    %211 = vmatpush1.msra.mxu0 0.0
    %212 = vmatprep.subr.mxu0 0.0
    %213 = vmatpush1.msra.mxu0 0.0
    %214 = vmatprep.subr.mxu0 0.0
    %215 = vmatpush1.msra.mxu0 0.0
    %216 = vmatprep.subr.mxu0 0.0
    %217 = vmatpush1.msra.mxu0 0.0
    %218 = vmatprep.subr.mxu0 0.0
    %219 = vmatpush1.msra.mxu0 0.0
    %220 = vmatprep.subr.mxu0 0.0
    %221 = vmatpush1.msra.mxu0 0.0
    %222 = vmatprep.mubr.f32.mxu0 0.0
    %223 = vmatmul.mubr.f32.gmra.mrb[0].mxu0 %v153
    %v224 = vpop.f32.mrb[0].mxu0
    %v225 = vadd.f32 %v151, %v224
    %v226 = vpop.f32.mrb[0].mxu0
    %227 = vmatprep.mubr.f32.mxu0 0.0
    %228 = vmatmul.mubr.f32.gmra.mrb[0].mxu0 %v156
    %v229 = vpop.f32.mrb[0].mxu0
    %v230 = vadd.f32 %v151, %v229
    %v231 = vpop.f32.mrb[0].mxu0
    %232 = vdwg.mxu0
    %v233 = vlaneseq
    %v234 = vshrl.u32 %v233, 7
    %v235 = vsub.s32 0, %v234
    %v236 = vrot.slane %v53, %v235
    %v238 = vsel %vm74, %v62, 0
    %v241 = vsel %vm74, %v63, 0
    %243 = vmatprep.subr.mxu0 0.0
    %244 = vmatpush1.msra.mxu0 %v42
    %245 = vmatprep.subr.mxu0 0.0
    %246 = vmatpush1.msra.mxu0 %v43
    %247 = vmatprep.subr.mxu0 0.0
    %248 = vmatpush1.msra.mxu0 %v44
    %249 = vmatprep.subr.mxu0 0.0
    %250 = vmatpush1.msra.mxu0 %v45
    %251 = vmatprep.subr.mxu0 0.0
    %252 = vmatpush1.msra.mxu0 0.0
    %253 = vmatprep.subr.mxu0 0.0
    %254 = vmatpush1.msra.mxu0 0.0
    %255 = vmatprep.subr.mxu0 0.0
    %256 = vmatpush1.msra.mxu0 0.0
    %257 = vmatprep.subr.mxu0 0.0
    %258 = vmatpush1.msra.mxu0 0.0
    %259 = vmatprep.subr.mxu0 0.0
    %260 = vmatpush1.msra.mxu0 0.0
    %261 = vmatprep.subr.mxu0 0.0
    %262 = vmatpush1.msra.mxu0 0.0
    %263 = vmatprep.subr.mxu0 0.0
    %264 = vmatpush1.msra.mxu0 0.0
    %265 = vmatprep.subr.mxu0 0.0
    %266 = vmatpush1.msra.mxu0 0.0
    %267 = vmatprep.subr.mxu0 0.0
    %268 = vmatpush1.msra.mxu0 0.0
    %269 = vmatprep.subr.mxu0 0.0
    %270 = vmatpush1.msra.mxu0 0.0
    %271 = vmatprep.subr.mxu0 0.0
    %272 = vmatpush1.msra.mxu0 0.0
    %273 = vmatprep.subr.mxu0 0.0
    %274 = vmatpush1.msra.mxu0 0.0
    %275 = vmatprep.subr.mxu0 0.0
    %276 = vmatpush1.msra.mxu0 0.0
    %277 = vmatprep.subr.mxu0 0.0
    %278 = vmatpush1.msra.mxu0 0.0
    %279 = vmatprep.subr.mxu0 0.0
    %280 = vmatpush1.msra.mxu0 0.0
    %281 = vmatprep.subr.mxu0 0.0
    %282 = vmatpush1.msra.mxu0 0.0
    %283 = vmatprep.subr.mxu0 0.0
    %284 = vmatpush1.msra.mxu0 0.0
    %285 = vmatprep.subr.mxu0 0.0
    %286 = vmatpush1.msra.mxu0 0.0
    %287 = vmatprep.subr.mxu0 0.0
    %288 = vmatpush1.msra.mxu0 0.0
    %289 = vmatprep.subr.mxu0 0.0
    %290 = vmatpush1.msra.mxu0 0.0
    %291 = vmatprep.subr.mxu0 0.0
    %292 = vmatpush1.msra.mxu0 0.0
    %293 = vmatprep.subr.mxu0 0.0
    %294 = vmatpush1.msra.mxu0 0.0
    %295 = vmatprep.subr.mxu0 0.0
    %296 = vmatpush1.msra.mxu0 0.0
    %297 = vmatprep.subr.mxu0 0.0
    %298 = vmatpush1.msra.mxu0 0.0
    %299 = vmatprep.subr.mxu0 0.0
    %300 = vmatpush1.msra.mxu0 0.0
    %301 = vmatprep.subr.mxu0 0.0
    %302 = vmatpush1.msra.mxu0 0.0
    %303 = vmatprep.subr.mxu0 0.0
    %304 = vmatpush1.msra.mxu0 0.0
    %305 = vmatprep.subr.mxu0 0.0
    %306 = vmatpush1.msra.mxu0 0.0
    %307 = vmatprep.mubr.f32.mxu0 0.0
    %308 = vmatmul.mubr.f32.gmra.mrb[0].mxu0 %v238
    %v309 = vpop.f32.mrb[0].mxu0
    %v310 = vadd.f32 %v236, %v309
    %v311 = vpop.f32.mrb[0].mxu0
    %312 = vmatprep.mubr.f32.mxu0 0.0
    %313 = vmatmul.mubr.f32.gmra.mrb[0].mxu0 %v241
    %v314 = vpop.f32.mrb[0].mxu0
    %v315 = vadd.f32 %v236, %v314
    %v316 = vpop.f32.mrb[0].mxu0
    %317 = vdwg.mxu0
    %v318 = vlaneseq
    %v319 = vshrl.u32 %v318, 7
    %v320 = vsub.s32 0, %v319
    %v321 = vrot.slane %v54, %v320
    %v322 = vadd.f32 %v321, 0.0
    %v323 = vmul.f32 %v145, 0.35355338
    %vm324 = vcmask 64512
    %v326 = vsel %vm324, %v323, 0
    %v329 = vsel %vm324, %v225, 0
    %v332 = vsel %vm324, %v230, 0
    %334 = vmatprep.subr.mxu0 0.0
    %335 = vmatpush1.xpose.msra.mxu0 %v329
    %336 = vmatprep.subr.mxu0 0.0
    %337 = vmatpush1.xpose.msra.mxu0 %v332
    %338 = vmatprep.subr.mxu0 0.0
    %339 = vmatpush1.xpose.msra.mxu0 0.0
    %340 = vmatprep.subr.mxu0 0.0
    %341 = vmatpush1.xpose.msra.mxu0 0.0
    %342 = vmatprep.subr.mxu0 0.0
    %343 = vmatpush1.xpose.msra.mxu0 0.0
    %344 = vmatprep.subr.mxu0 0.0
    %345 = vmatpush1.xpose.msra.mxu0 0.0
    %346 = vmatprep.subr.mxu0 0.0
    %347 = vmatpush1.xpose.msra.mxu0 0.0
    %348 = vmatprep.subr.mxu0 0.0
    %349 = vmatpush1.xpose.msra.mxu0 0.0
    %350 = vmatprep.subr.mxu0 0.0
    %351 = vmatpush1.xpose.msra.mxu0 0.0
    %352 = vmatprep.subr.mxu0 0.0
    %353 = vmatpush1.xpose.msra.mxu0 0.0
    %354 = vmatprep.subr.mxu0 0.0
    %355 = vmatpush1.xpose.msra.mxu0 0.0
    %356 = vmatprep.subr.mxu0 0.0
    %357 = vmatpush1.xpose.msra.mxu0 0.0
    %358 = vmatprep.subr.mxu0 0.0
    %359 = vmatpush1.xpose.msra.mxu0 0.0
    %360 = vmatprep.subr.mxu0 0.0
    %361 = vmatpush1.xpose.msra.mxu0 0.0
    %362 = vmatprep.subr.mxu0 0.0
    %363 = vmatpush1.xpose.msra.mxu0 0.0
    %364 = vmatprep.subr.mxu0 0.0
    %365 = vmatpush1.xpose.msra.mxu0 0.0
    %366 = vmatprep.subr.mxu0 0.0
    %367 = vmatpush1.xpose.msra.mxu0 0.0
    %368 = vmatprep.subr.mxu0 0.0
    %369 = vmatpush1.xpose.msra.mxu0 0.0
    %370 = vmatprep.subr.mxu0 0.0
    %371 = vmatpush1.xpose.msra.mxu0 0.0
    %372 = vmatprep.subr.mxu0 0.0
    %373 = vmatpush1.xpose.msra.mxu0 0.0
    %374 = vmatprep.subr.mxu0 0.0
    %375 = vmatpush1.xpose.msra.mxu0 0.0
    %376 = vmatprep.subr.mxu0 0.0
    %377 = vmatpush1.xpose.msra.mxu0 0.0
    %378 = vmatprep.subr.mxu0 0.0
    %379 = vmatpush1.xpose.msra.mxu0 0.0
    %380 = vmatprep.subr.mxu0 0.0
    %381 = vmatpush1.xpose.msra.mxu0 0.0
    %382 = vmatprep.subr.mxu0 0.0
    %383 = vmatpush1.xpose.msra.mxu0 0.0
    %384 = vmatprep.subr.mxu0 0.0
    %385 = vmatpush1.xpose.msra.mxu0 0.0
    %386 = vmatprep.subr.mxu0 0.0
    %387 = vmatpush1.xpose.msra.mxu0 0.0
    %388 = vmatprep.subr.mxu0 0.0
    %389 = vmatpush1.xpose.msra.mxu0 0.0
    %390 = vmatprep.subr.mxu0 0.0
    %391 = vmatpush1.xpose.msra.mxu0 0.0
    %392 = vmatprep.subr.mxu0 0.0
    %393 = vmatpush1.xpose.msra.mxu0 0.0
    %394 = vmatprep.subr.mxu0 0.0
    %395 = vmatpush1.xpose.msra.mxu0 0.0
    %396 = vmatprep.subr.mxu0 0.0
    %397 = vmatpush1.xpose.msra.mxu0 0.0
    %398 = vmatprep.mubr.f32.mxu0 0.0
    %399 = vmatmul.mubr.f32.gmra.mrb[0].mxu0 %v326
    %v400 = vpop.f32.mrb[0].mxu0
    %v401 = vadd.f32 0.0, %v400
    %v402 = vpop.f32.mrb[0].mxu0
    %403 = vdwg.mxu0
    %vm404 = vcmask 130048
    %v405 = vsel %vm404, %v401, -inf
    %406 = vmax.xlane.f32.xlu0 %v405
    %v407 = vpop.xlane.xlu0 %406
    %v408 = vsub.f32 %v401, %v407
    %v409 = vmul.f32 %v408, 1.442695
    %v410 = vpow.pop %v409
    %v411 = vsel %vm404, %v410, 0.0
    %412 = vadd.xlane.f32.xlu0 %v411
    %v413 = vpop.xlane.xlu0 %412
    %v414 = vrcp.pop %v413
    %v415 = vmul.f32 %v410, %v414
    %v416 = vadd.f32 %v415, 0.0
    %v418 = vsel %vm404, %v415, 0
    %420 = vmatprep.subr.mxu0 0.0
    %421 = vmatpush1.msra.mxu0 %v310
    %422 = vmatprep.subr.mxu0 0.0
    %423 = vmatpush1.msra.mxu0 %v315
    %424 = vmatprep.subr.mxu0 0.0
    %425 = vmatpush1.msra.mxu0 0.0
    %426 = vmatprep.subr.mxu0 0.0
    %427 = vmatpush1.msra.mxu0 0.0
    %428 = vmatprep.subr.mxu0 0.0
    %429 = vmatpush1.msra.mxu0 0.0
    %430 = vmatprep.subr.mxu0 0.0
    %431 = vmatpush1.msra.mxu0 0.0
    %432 = vmatprep.subr.mxu0 0.0
    %433 = vmatpush1.msra.mxu0 0.0
    %434 = vmatprep.subr.mxu0 0.0
    %435 = vmatpush1.msra.mxu0 0.0
    %436 = vmatprep.subr.mxu0 0.0
    %437 = vmatpush1.msra.mxu0 0.0
    %438 = vmatprep.subr.mxu0 0.0
    %439 = vmatpush1.msra.mxu0 0.0
    %440 = vmatprep.subr.mxu0 0.0
    %441 = vmatpush1.msra.mxu0 0.0
    %442 = vmatprep.subr.mxu0 0.0
    %443 = vmatpush1.msra.mxu0 0.0
    %444 = vmatprep.subr.mxu0 0.0
    %445 = vmatpush1.msra.mxu0 0.0
    %446 = vmatprep.subr.mxu0 0.0
    %447 = vmatpush1.msra.mxu0 0.0
    %448 = vmatprep.subr.mxu0 0.0
    %449 = vmatpush1.msra.mxu0 0.0
    %450 = vmatprep.subr.mxu0 0.0
    %451 = vmatpush1.msra.mxu0 0.0
    %452 = vmatprep.subr.mxu0 0.0
    %453 = vmatpush1.msra.mxu0 0.0
    %454 = vmatprep.subr.mxu0 0.0
    %455 = vmatpush1.msra.mxu0 0.0
    %456 = vmatprep.subr.mxu0 0.0
    %457 = vmatpush1.msra.mxu0 0.0
    %458 = vmatprep.subr.mxu0 0.0
    %459 = vmatpush1.msra.mxu0 0.0
    %460 = vmatprep.subr.mxu0 0.0
    %461 = vmatpush1.msra.mxu0 0.0
    %462 = vmatprep.subr.mxu0 0.0
    %463 = vmatpush1.msra.mxu0 0.0
    %464 = vmatprep.subr.mxu0 0.0
    %465 = vmatpush1.msra.mxu0 0.0
    %466 = vmatprep.subr.mxu0 0.0
    %467 = vmatpush1.msra.mxu0 0.0
    %468 = vmatprep.subr.mxu0 0.0
    %469 = vmatpush1.msra.mxu0 0.0
    %470 = vmatprep.subr.mxu0 0.0
    %471 = vmatpush1.msra.mxu0 0.0
    %472 = vmatprep.subr.mxu0 0.0
    %473 = vmatpush1.msra.mxu0 0.0
    %474 = vmatprep.subr.mxu0 0.0
    %475 = vmatpush1.msra.mxu0 0.0
    %476 = vmatprep.subr.mxu0 0.0
    %477 = vmatpush1.msra.mxu0 0.0
    %478 = vmatprep.subr.mxu0 0.0
    %479 = vmatpush1.msra.mxu0 0.0
    %480 = vmatprep.subr.mxu0 0.0
    %481 = vmatpush1.msra.mxu0 0.0
    %482 = vmatprep.subr.mxu0 0.0
    %483 = vmatpush1.msra.mxu0 0.0
    %484 = vmatprep.mubr.f32.mxu0 0.0
    %485 = vmatmul.mubr.f32.gmra.mrb[0].mxu0 %v418
    %v486 = vpop.f32.mrb[0].mxu0
    %v487 = vadd.f32 0.0, %v486
    %v488 = vpop.f32.mrb[0].mxu0
    %489 = vdwg.mxu0
    %v491 = vsel %vm324, %v487, 0
    %493 = vmatprep.subr.mxu0 0.0
    %494 = vmatpush1.msra.mxu0 %v47
    %495 = vmatprep.subr.mxu0 0.0
    %496 = vmatpush1.msra.mxu0 0.0
    %497 = vmatprep.subr.mxu0 0.0
    %498 = vmatpush1.msra.mxu0 0.0
    %499 = vmatprep.subr.mxu0 0.0
    %500 = vmatpush1.msra.mxu0 0.0
    %501 = vmatprep.subr.mxu0 0.0
    %502 = vmatpush1.msra.mxu0 0.0
    %503 = vmatprep.subr.mxu0 0.0
    %504 = vmatpush1.msra.mxu0 0.0
    %505 = vmatprep.subr.mxu0 0.0
    %506 = vmatpush1.msra.mxu0 0.0
    %507 = vmatprep.subr.mxu0 0.0
    %508 = vmatpush1.msra.mxu0 0.0
    %509 = vmatprep.subr.mxu0 0.0
    %510 = vmatpush1.msra.mxu0 0.0
    %511 = vmatprep.subr.mxu0 0.0
    %512 = vmatpush1.msra.mxu0 0.0
    %513 = vmatprep.subr.mxu0 0.0
    %514 = vmatpush1.msra.mxu0 0.0
    %515 = vmatprep.subr.mxu0 0.0
    %516 = vmatpush1.msra.mxu0 0.0
    %517 = vmatprep.subr.mxu0 0.0
    %518 = vmatpush1.msra.mxu0 0.0
    %519 = vmatprep.subr.mxu0 0.0
    %520 = vmatpush1.msra.mxu0 0.0
    %521 = vmatprep.subr.mxu0 0.0
    %522 = vmatpush1.msra.mxu0 0.0
    %523 = vmatprep.subr.mxu0 0.0
    %524 = vmatpush1.msra.mxu0 0.0
    %525 = vmatprep.subr.mxu0 0.0
    %526 = vmatpush1.msra.mxu0 0.0
    %527 = vmatprep.subr.mxu0 0.0
    %528 = vmatpush1.msra.mxu0 0.0
    %529 = vmatprep.subr.mxu0 0.0
    %530 = vmatpush1.msra.mxu0 0.0
    %531 = vmatprep.subr.mxu0 0.0
    %532 = vmatpush1.msra.mxu0 0.0
    %533 = vmatprep.subr.mxu0 0.0
    %534 = vmatpush1.msra.mxu0 0.0
    %535 = vmatprep.subr.mxu0 0.0
    %536 = vmatpush1.msra.mxu0 0.0
    %537 = vmatprep.subr.mxu0 0.0
    %538 = vmatpush1.msra.mxu0 0.0
    %539 = vmatprep.subr.mxu0 0.0
    %540 = vmatpush1.msra.mxu0 0.0
    %541 = vmatprep.subr.mxu0 0.0
    %542 = vmatpush1.msra.mxu0 0.0
    %543 = vmatprep.subr.mxu0 0.0
    %544 = vmatpush1.msra.mxu0 0.0
    %545 = vmatprep.subr.mxu0 0.0
    %546 = vmatpush1.msra.mxu0 0.0
    %547 = vmatprep.subr.mxu0 0.0
    %548 = vmatpush1.msra.mxu0 0.0
    %549 = vmatprep.subr.mxu0 0.0
    %550 = vmatpush1.msra.mxu0 0.0
    %551 = vmatprep.subr.mxu0 0.0
    %552 = vmatpush1.msra.mxu0 0.0
    %553 = vmatprep.subr.mxu0 0.0
    %554 = vmatpush1.msra.mxu0 0.0
    %555 = vmatprep.subr.mxu0 0.0
    %556 = vmatpush1.msra.mxu0 0.0
    %557 = vmatprep.mubr.f32.mxu0 0.0
    %558 = vmatmul.mubr.f32.gmra.mrb[0].mxu0 %v491
    %v559 = vpop.f32.mrb[0].mxu0
    %v560 = vadd.f32 0.0, %v559
    %v561 = vpop.f32.mrb[0].mxu0
    %562 = vdwg.mxu0
    %v563 = vadd.f32 %v322, %v560
    %564 = vrot.lane.b32.xlu0 %v323, 120
    %v565 = vpop.permute.xlu0 %564
    %566 = vrot.lane.b32.xlu0 %v225, 120
    %v567 = vpop.permute.xlu0 %566
    %568 = vrot.lane.b32.xlu0 %v230, 120
    %v569 = vpop.permute.xlu0 %568
    %v570 = vsel %vm324, %v565, 0
    %v572 = vsel %vm324, %v567, 0
    %v574 = vsel %vm324, %v569, 0
    %576 = vmatprep.subr.mxu0 0.0
    %577 = vmatpush1.xpose.msra.mxu0 %v572
    %578 = vmatprep.subr.mxu0 0.0
    %579 = vmatpush1.xpose.msra.mxu0 %v574
    %580 = vmatprep.subr.mxu0 0.0
    %581 = vmatpush1.xpose.msra.mxu0 0.0
    %582 = vmatprep.subr.mxu0 0.0
    %583 = vmatpush1.xpose.msra.mxu0 0.0
    %584 = vmatprep.subr.mxu0 0.0
    %585 = vmatpush1.xpose.msra.mxu0 0.0
    %586 = vmatprep.subr.mxu0 0.0
    %587 = vmatpush1.xpose.msra.mxu0 0.0
    %588 = vmatprep.subr.mxu0 0.0
    %589 = vmatpush1.xpose.msra.mxu0 0.0
    %590 = vmatprep.subr.mxu0 0.0
    %591 = vmatpush1.xpose.msra.mxu0 0.0
    %592 = vmatprep.subr.mxu0 0.0
    %593 = vmatpush1.xpose.msra.mxu0 0.0
    %594 = vmatprep.subr.mxu0 0.0
    %595 = vmatpush1.xpose.msra.mxu0 0.0
    %596 = vmatprep.subr.mxu0 0.0
    %597 = vmatpush1.xpose.msra.mxu0 0.0
    %598 = vmatprep.subr.mxu0 0.0
    %599 = vmatpush1.xpose.msra.mxu0 0.0
    %600 = vmatprep.subr.mxu0 0.0
    %601 = vmatpush1.xpose.msra.mxu0 0.0
    %602 = vmatprep.subr.mxu0 0.0
    %603 = vmatpush1.xpose.msra.mxu0 0.0
    %604 = vmatprep.subr.mxu0 0.0
    %605 = vmatpush1.xpose.msra.mxu0 0.0
    %606 = vmatprep.subr.mxu0 0.0
    %607 = vmatpush1.xpose.msra.mxu0 0.0
    %608 = vmatprep.subr.mxu0 0.0
    %609 = vmatpush1.xpose.msra.mxu0 0.0
    %610 = vmatprep.subr.mxu0 0.0
    %611 = vmatpush1.xpose.msra.mxu0 0.0
    %612 = vmatprep.subr.mxu0 0.0
    %613 = vmatpush1.xpose.msra.mxu0 0.0
    %614 = vmatprep.subr.mxu0 0.0
    %615 = vmatpush1.xpose.msra.mxu0 0.0
    %616 = vmatprep.subr.mxu0 0.0
    %617 = vmatpush1.xpose.msra.mxu0 0.0
    %618 = vmatprep.subr.mxu0 0.0
    %619 = vmatpush1.xpose.msra.mxu0 0.0
    %620 = vmatprep.subr.mxu0 0.0
    %621 = vmatpush1.xpose.msra.mxu0 0.0
    %622 = vmatprep.subr.mxu0 0.0
    %623 = vmatpush1.xpose.msra.mxu0 0.0
    %624 = vmatprep.subr.mxu0 0.0
    %625 = vmatpush1.xpose.msra.mxu0 0.0
    %626 = vmatprep.subr.mxu0 0.0
    %627 = vmatpush1.xpose.msra.mxu0 0.0
    %628 = vmatprep.subr.mxu0 0.0
    %629 = vmatpush1.xpose.msra.mxu0 0.0
    %630 = vmatprep.subr.mxu0 0.0
    %631 = vmatpush1.xpose.msra.mxu0 0.0
    %632 = vmatprep.subr.mxu0 0.0
    %633 = vmatpush1.xpose.msra.mxu0 0.0
    %634 = vmatprep.subr.mxu0 0.0
    %635 = vmatpush1.xpose.msra.mxu0 0.0
    %636 = vmatprep.subr.mxu0 0.0
    %637 = vmatpush1.xpose.msra.mxu0 0.0
    %638 = vmatprep.subr.mxu0 0.0
    %639 = vmatpush1.xpose.msra.mxu0 0.0
    %640 = vmatprep.mubr.f32.mxu0 0.0
    %641 = vmatmul.mubr.f32.gmra.mrb[0].mxu0 %v570
    %v642 = vpop.f32.mrb[0].mxu0
    %v643 = vadd.f32 0.0, %v642
    %v644 = vpop.f32.mrb[0].mxu0
    %645 = vdwg.mxu0
    %v646 = vsel %vm404, %v643, -inf
    %647 = vmax.xlane.f32.xlu0 %v646
    %v648 = vpop.xlane.xlu0 %647
    %v649 = vsub.f32 %v643, %v648
    %v650 = vmul.f32 %v649, 1.442695
    %v651 = vpow.pop %v650
    %v652 = vsel %vm404, %v651, 0.0
    %653 = vadd.xlane.f32.xlu0 %v652
    %v654 = vpop.xlane.xlu0 %653
    %v655 = vrcp.pop %v654
    %v656 = vmul.f32 %v651, %v655
    %v657 = vadd.f32 %v416, %v656
    %660 = vrot.lane.b32.xlu0 %v310, 120
    %v661 = vpop.permute.xlu0 %660
    %662 = vrot.lane.b32.xlu0 %v315, 120
    %v663 = vpop.permute.xlu0 %662
    %v667 = vsel %vm404, %v656, 0
    %669 = vmatprep.subr.mxu0 0.0
    %670 = vmatpush1.msra.mxu0 %v661
    %671 = vmatprep.subr.mxu0 0.0
    %672 = vmatpush1.msra.mxu0 %v663
    %673 = vmatprep.subr.mxu0 0.0
    %674 = vmatpush1.msra.mxu0 0.0
    %675 = vmatprep.subr.mxu0 0.0
    %676 = vmatpush1.msra.mxu0 0.0
    %677 = vmatprep.subr.mxu0 0.0
    %678 = vmatpush1.msra.mxu0 0.0
    %679 = vmatprep.subr.mxu0 0.0
    %680 = vmatpush1.msra.mxu0 0.0
    %681 = vmatprep.subr.mxu0 0.0
    %682 = vmatpush1.msra.mxu0 0.0
    %683 = vmatprep.subr.mxu0 0.0
    %684 = vmatpush1.msra.mxu0 0.0
    %685 = vmatprep.subr.mxu0 0.0
    %686 = vmatpush1.msra.mxu0 0.0
    %687 = vmatprep.subr.mxu0 0.0
    %688 = vmatpush1.msra.mxu0 0.0
    %689 = vmatprep.subr.mxu0 0.0
    %690 = vmatpush1.msra.mxu0 0.0
    %691 = vmatprep.subr.mxu0 0.0
    %692 = vmatpush1.msra.mxu0 0.0
    %693 = vmatprep.subr.mxu0 0.0
    %694 = vmatpush1.msra.mxu0 0.0
    %695 = vmatprep.subr.mxu0 0.0
    %696 = vmatpush1.msra.mxu0 0.0
    %697 = vmatprep.subr.mxu0 0.0
    %698 = vmatpush1.msra.mxu0 0.0
    %699 = vmatprep.subr.mxu0 0.0
    %700 = vmatpush1.msra.mxu0 0.0
    %701 = vmatprep.subr.mxu0 0.0
    %702 = vmatpush1.msra.mxu0 0.0
    %703 = vmatprep.subr.mxu0 0.0
    %704 = vmatpush1.msra.mxu0 0.0
    %705 = vmatprep.subr.mxu0 0.0
    %706 = vmatpush1.msra.mxu0 0.0
    %707 = vmatprep.subr.mxu0 0.0
    %708 = vmatpush1.msra.mxu0 0.0
    %709 = vmatprep.subr.mxu0 0.0
    %710 = vmatpush1.msra.mxu0 0.0
    %711 = vmatprep.subr.mxu0 0.0
    %712 = vmatpush1.msra.mxu0 0.0
    %713 = vmatprep.subr.mxu0 0.0
    %714 = vmatpush1.msra.mxu0 0.0
    %715 = vmatprep.subr.mxu0 0.0
    %716 = vmatpush1.msra.mxu0 0.0
    %717 = vmatprep.subr.mxu0 0.0
    %718 = vmatpush1.msra.mxu0 0.0
    %719 = vmatprep.subr.mxu0 0.0
    %720 = vmatpush1.msra.mxu0 0.0
    %721 = vmatprep.subr.mxu0 0.0
    %722 = vmatpush1.msra.mxu0 0.0
    %723 = vmatprep.subr.mxu0 0.0
    %724 = vmatpush1.msra.mxu0 0.0
    %725 = vmatprep.subr.mxu0 0.0
    %726 = vmatpush1.msra.mxu0 0.0
    %727 = vmatprep.subr.mxu0 0.0
    %728 = vmatpush1.msra.mxu0 0.0
    %729 = vmatprep.subr.mxu0 0.0
    %730 = vmatpush1.msra.mxu0 0.0
    %731 = vmatprep.subr.mxu0 0.0
    %732 = vmatpush1.msra.mxu0 0.0
    %733 = vmatprep.mubr.f32.mxu0 0.0
    %734 = vmatmul.mubr.f32.gmra.mrb[0].mxu0 %v667
    %v735 = vpop.f32.mrb[0].mxu0
    %v736 = vadd.f32 0.0, %v735
    %v737 = vpop.f32.mrb[0].mxu0
    %738 = vdwg.mxu0
    %v740 = vsel %vm324, %v736, 0
    %742 = vmatprep.subr.mxu0 0.0
    %743 = vmatpush1.msra.mxu0 %v48
    %744 = vmatprep.subr.mxu0 0.0
    %745 = vmatpush1.msra.mxu0 0.0
    %746 = vmatprep.subr.mxu0 0.0
    %747 = vmatpush1.msra.mxu0 0.0
    %748 = vmatprep.subr.mxu0 0.0
    %749 = vmatpush1.msra.mxu0 0.0
    %750 = vmatprep.subr.mxu0 0.0
    %751 = vmatpush1.msra.mxu0 0.0
    %752 = vmatprep.subr.mxu0 0.0
    %753 = vmatpush1.msra.mxu0 0.0
    %754 = vmatprep.subr.mxu0 0.0
    %755 = vmatpush1.msra.mxu0 0.0
    %756 = vmatprep.subr.mxu0 0.0
    %757 = vmatpush1.msra.mxu0 0.0
    %758 = vmatprep.subr.mxu0 0.0
    %759 = vmatpush1.msra.mxu0 0.0
    %760 = vmatprep.subr.mxu0 0.0
    %761 = vmatpush1.msra.mxu0 0.0
    %762 = vmatprep.subr.mxu0 0.0
    %763 = vmatpush1.msra.mxu0 0.0
    %764 = vmatprep.subr.mxu0 0.0
    %765 = vmatpush1.msra.mxu0 0.0
    %766 = vmatprep.subr.mxu0 0.0
    %767 = vmatpush1.msra.mxu0 0.0
    %768 = vmatprep.subr.mxu0 0.0
    %769 = vmatpush1.msra.mxu0 0.0
    %770 = vmatprep.subr.mxu0 0.0
    %771 = vmatpush1.msra.mxu0 0.0
    %772 = vmatprep.subr.mxu0 0.0
    %773 = vmatpush1.msra.mxu0 0.0
    %774 = vmatprep.subr.mxu0 0.0
    %775 = vmatpush1.msra.mxu0 0.0
    %776 = vmatprep.subr.mxu0 0.0
    %777 = vmatpush1.msra.mxu0 0.0
    %778 = vmatprep.subr.mxu0 0.0
    %779 = vmatpush1.msra.mxu0 0.0
    %780 = vmatprep.subr.mxu0 0.0
    %781 = vmatpush1.msra.mxu0 0.0
    %782 = vmatprep.subr.mxu0 0.0
    %783 = vmatpush1.msra.mxu0 0.0
    %784 = vmatprep.subr.mxu0 0.0
    %785 = vmatpush1.msra.mxu0 0.0
    %786 = vmatprep.subr.mxu0 0.0
    %787 = vmatpush1.msra.mxu0 0.0
    %788 = vmatprep.subr.mxu0 0.0
    %789 = vmatpush1.msra.mxu0 0.0
    %790 = vmatprep.subr.mxu0 0.0
    %791 = vmatpush1.msra.mxu0 0.0
    %792 = vmatprep.subr.mxu0 0.0
    %793 = vmatpush1.msra.mxu0 0.0
    %794 = vmatprep.subr.mxu0 0.0
    %795 = vmatpush1.msra.mxu0 0.0
    %796 = vmatprep.subr.mxu0 0.0
    %797 = vmatpush1.msra.mxu0 0.0
    %798 = vmatprep.subr.mxu0 0.0
    %799 = vmatpush1.msra.mxu0 0.0
    %800 = vmatprep.subr.mxu0 0.0
    %801 = vmatpush1.msra.mxu0 0.0
    %802 = vmatprep.subr.mxu0 0.0
    %803 = vmatpush1.msra.mxu0 0.0
    %804 = vmatprep.subr.mxu0 0.0
    %805 = vmatpush1.msra.mxu0 0.0
    %806 = vmatprep.mubr.f32.mxu0 0.0
    %807 = vmatmul.mubr.f32.gmra.mrb[0].mxu0 %v740
    %v808 = vpop.f32.mrb[0].mxu0
    %v809 = vadd.f32 0.0, %v808
    %v810 = vpop.f32.mrb[0].mxu0
    %811 = vdwg.mxu0
    %v812 = vadd.f32 %v563, %v809
    %813 = vrot.lane.b32.xlu0 %v323, 112
    %v814 = vpop.permute.xlu0 %813
    %815 = vrot.lane.b32.xlu0 %v225, 112
    %v816 = vpop.permute.xlu0 %815
    %817 = vrot.lane.b32.xlu0 %v230, 112
    %v818 = vpop.permute.xlu0 %817
    %v819 = vsel %vm324, %v814, 0
    %v821 = vsel %vm324, %v816, 0
    %v823 = vsel %vm324, %v818, 0
    %825 = vmatprep.subr.mxu0 0.0
    %826 = vmatpush1.xpose.msra.mxu0 %v821
    %827 = vmatprep.subr.mxu0 0.0
    %828 = vmatpush1.xpose.msra.mxu0 %v823
    %829 = vmatprep.subr.mxu0 0.0
    %830 = vmatpush1.xpose.msra.mxu0 0.0
    %831 = vmatprep.subr.mxu0 0.0
    %832 = vmatpush1.xpose.msra.mxu0 0.0
    %833 = vmatprep.subr.mxu0 0.0
    %834 = vmatpush1.xpose.msra.mxu0 0.0
    %835 = vmatprep.subr.mxu0 0.0
    %836 = vmatpush1.xpose.msra.mxu0 0.0
    %837 = vmatprep.subr.mxu0 0.0
    %838 = vmatpush1.xpose.msra.mxu0 0.0
    %839 = vmatprep.subr.mxu0 0.0
    %840 = vmatpush1.xpose.msra.mxu0 0.0
    %841 = vmatprep.subr.mxu0 0.0
    %842 = vmatpush1.xpose.msra.mxu0 0.0
    %843 = vmatprep.subr.mxu0 0.0
    %844 = vmatpush1.xpose.msra.mxu0 0.0
    %845 = vmatprep.subr.mxu0 0.0
    %846 = vmatpush1.xpose.msra.mxu0 0.0
    %847 = vmatprep.subr.mxu0 0.0
    %848 = vmatpush1.xpose.msra.mxu0 0.0
    %849 = vmatprep.subr.mxu0 0.0
    %850 = vmatpush1.xpose.msra.mxu0 0.0
    %851 = vmatprep.subr.mxu0 0.0
    %852 = vmatpush1.xpose.msra.mxu0 0.0
    %853 = vmatprep.subr.mxu0 0.0
    %854 = vmatpush1.xpose.msra.mxu0 0.0
    %855 = vmatprep.subr.mxu0 0.0
    %856 = vmatpush1.xpose.msra.mxu0 0.0
    %857 = vmatprep.subr.mxu0 0.0
    %858 = vmatpush1.xpose.msra.mxu0 0.0
    %859 = vmatprep.subr.mxu0 0.0
    %860 = vmatpush1.xpose.msra.mxu0 0.0
    %861 = vmatprep.subr.mxu0 0.0
    %862 = vmatpush1.xpose.msra.mxu0 0.0
    %863 = vmatprep.subr.mxu0 0.0
    %864 = vmatpush1.xpose.msra.mxu0 0.0
    %865 = vmatprep.subr.mxu0 0.0
    %866 = vmatpush1.xpose.msra.mxu0 0.0
    %867 = vmatprep.subr.mxu0 0.0
    %868 = vmatpush1.xpose.msra.mxu0 0.0
    %869 = vmatprep.subr.mxu0 0.0
    %870 = vmatpush1.xpose.msra.mxu0 0.0
    %871 = vmatprep.subr.mxu0 0.0
    %872 = vmatpush1.xpose.msra.mxu0 0.0
    %873 = vmatprep.subr.mxu0 0.0
    %874 = vmatpush1.xpose.msra.mxu0 0.0
    %875 = vmatprep.subr.mxu0 0.0
    %876 = vmatpush1.xpose.msra.mxu0 0.0
    %877 = vmatprep.subr.mxu0 0.0
    %878 = vmatpush1.xpose.msra.mxu0 0.0
    %879 = vmatprep.subr.mxu0 0.0
    %880 = vmatpush1.xpose.msra.mxu0 0.0
    %881 = vmatprep.subr.mxu0 0.0
    %882 = vmatpush1.xpose.msra.mxu0 0.0
    %883 = vmatprep.subr.mxu0 0.0
    %884 = vmatpush1.xpose.msra.mxu0 0.0
    %885 = vmatprep.subr.mxu0 0.0
    %886 = vmatpush1.xpose.msra.mxu0 0.0
    %887 = vmatprep.subr.mxu0 0.0
    %888 = vmatpush1.xpose.msra.mxu0 0.0
    %889 = vmatprep.mubr.f32.mxu0 0.0
    %890 = vmatmul.mubr.f32.gmra.mrb[0].mxu0 %v819
    %v891 = vpop.f32.mrb[0].mxu0
    %v892 = vadd.f32 0.0, %v891
    %v893 = vpop.f32.mrb[0].mxu0
    %894 = vdwg.mxu0
    %v895 = vsel %vm404, %v892, -inf
    %896 = vmax.xlane.f32.xlu0 %v895
    %v897 = vpop.xlane.xlu0 %896
    %v898 = vsub.f32 %v892, %v897
    %v899 = vmul.f32 %v898, 1.442695
    %v900 = vpow.pop %v899
    %v901 = vsel %vm404, %v900, 0.0
    %902 = vadd.xlane.f32.xlu0 %v901
    %v903 = vpop.xlane.xlu0 %902
    %v904 = vrcp.pop %v903
    %v905 = vmul.f32 %v900, %v904
    %v906 = vadd.f32 %v657, %v905
    %907 = vrot.lane.b32.xlu0 %v310, 112
    %v908 = vpop.permute.xlu0 %907
    %909 = vrot.lane.b32.xlu0 %v315, 112
    %v910 = vpop.permute.xlu0 %909
    %v914 = vsel %vm404, %v905, 0
    %916 = vmatprep.subr.mxu0 0.0
    %917 = vmatpush1.msra.mxu0 %v908
    %918 = vmatprep.subr.mxu0 0.0
    %919 = vmatpush1.msra.mxu0 %v910
    %920 = vmatprep.subr.mxu0 0.0
    %921 = vmatpush1.msra.mxu0 0.0
    %922 = vmatprep.subr.mxu0 0.0
    %923 = vmatpush1.msra.mxu0 0.0
    %924 = vmatprep.subr.mxu0 0.0
    %925 = vmatpush1.msra.mxu0 0.0
    %926 = vmatprep.subr.mxu0 0.0
    %927 = vmatpush1.msra.mxu0 0.0
    %928 = vmatprep.subr.mxu0 0.0
    %929 = vmatpush1.msra.mxu0 0.0
    %930 = vmatprep.subr.mxu0 0.0
    %931 = vmatpush1.msra.mxu0 0.0
    %932 = vmatprep.subr.mxu0 0.0
    %933 = vmatpush1.msra.mxu0 0.0
    %934 = vmatprep.subr.mxu0 0.0
    %935 = vmatpush1.msra.mxu0 0.0
    %936 = vmatprep.subr.mxu0 0.0
    %937 = vmatpush1.msra.mxu0 0.0
    %938 = vmatprep.subr.mxu0 0.0
    %939 = vmatpush1.msra.mxu0 0.0
    %940 = vmatprep.subr.mxu0 0.0
    %941 = vmatpush1.msra.mxu0 0.0
    %942 = vmatprep.subr.mxu0 0.0
    %943 = vmatpush1.msra.mxu0 0.0
    %944 = vmatprep.subr.mxu0 0.0
    %945 = vmatpush1.msra.mxu0 0.0
    %946 = vmatprep.subr.mxu0 0.0
    %947 = vmatpush1.msra.mxu0 0.0
    %948 = vmatprep.subr.mxu0 0.0
    %949 = vmatpush1.msra.mxu0 0.0
    %950 = vmatprep.subr.mxu0 0.0
    %951 = vmatpush1.msra.mxu0 0.0
    %952 = vmatprep.subr.mxu0 0.0
    %953 = vmatpush1.msra.mxu0 0.0
    %954 = vmatprep.subr.mxu0 0.0
    %955 = vmatpush1.msra.mxu0 0.0
    %956 = vmatprep.subr.mxu0 0.0
    %957 = vmatpush1.msra.mxu0 0.0
    %958 = vmatprep.subr.mxu0 0.0
    %959 = vmatpush1.msra.mxu0 0.0
    %960 = vmatprep.subr.mxu0 0.0
    %961 = vmatpush1.msra.mxu0 0.0
    %962 = vmatprep.subr.mxu0 0.0
    %963 = vmatpush1.msra.mxu0 0.0
    %964 = vmatprep.subr.mxu0 0.0
    %965 = vmatpush1.msra.mxu0 0.0
    %966 = vmatprep.subr.mxu0 0.0
    %967 = vmatpush1.msra.mxu0 0.0
    %968 = vmatprep.subr.mxu0 0.0
    %969 = vmatpush1.msra.mxu0 0.0
    %970 = vmatprep.subr.mxu0 0.0
    %971 = vmatpush1.msra.mxu0 0.0
    %972 = vmatprep.subr.mxu0 0.0
    %973 = vmatpush1.msra.mxu0 0.0
    %974 = vmatprep.subr.mxu0 0.0
    %975 = vmatpush1.msra.mxu0 0.0
    %976 = vmatprep.subr.mxu0 0.0
    %977 = vmatpush1.msra.mxu0 0.0
    %978 = vmatprep.subr.mxu0 0.0
    %979 = vmatpush1.msra.mxu0 0.0
    %980 = vmatprep.mubr.f32.mxu0 0.0
    %981 = vmatmul.mubr.f32.gmra.mrb[0].mxu0 %v914
    %v982 = vpop.f32.mrb[0].mxu0
    %v983 = vadd.f32 0.0, %v982
    %v984 = vpop.f32.mrb[0].mxu0
    %985 = vdwg.mxu0
    %v987 = vsel %vm324, %v983, 0
    %989 = vmatprep.subr.mxu0 0.0
    %990 = vmatpush1.msra.mxu0 %v49
    %991 = vmatprep.subr.mxu0 0.0
    %992 = vmatpush1.msra.mxu0 0.0
    %993 = vmatprep.subr.mxu0 0.0
    %994 = vmatpush1.msra.mxu0 0.0
    %995 = vmatprep.subr.mxu0 0.0
    %996 = vmatpush1.msra.mxu0 0.0
    %997 = vmatprep.subr.mxu0 0.0
    %998 = vmatpush1.msra.mxu0 0.0
    %999 = vmatprep.subr.mxu0 0.0
    %1000 = vmatpush1.msra.mxu0 0.0
    %1001 = vmatprep.subr.mxu0 0.0
    %1002 = vmatpush1.msra.mxu0 0.0
    %1003 = vmatprep.subr.mxu0 0.0
    %1004 = vmatpush1.msra.mxu0 0.0
    %1005 = vmatprep.subr.mxu0 0.0
    %1006 = vmatpush1.msra.mxu0 0.0
    %1007 = vmatprep.subr.mxu0 0.0
    %1008 = vmatpush1.msra.mxu0 0.0
    %1009 = vmatprep.subr.mxu0 0.0
    %1010 = vmatpush1.msra.mxu0 0.0
    %1011 = vmatprep.subr.mxu0 0.0
    %1012 = vmatpush1.msra.mxu0 0.0
    %1013 = vmatprep.subr.mxu0 0.0
    %1014 = vmatpush1.msra.mxu0 0.0
    %1015 = vmatprep.subr.mxu0 0.0
    %1016 = vmatpush1.msra.mxu0 0.0
    %1017 = vmatprep.subr.mxu0 0.0
    %1018 = vmatpush1.msra.mxu0 0.0
    %1019 = vmatprep.subr.mxu0 0.0
    %1020 = vmatpush1.msra.mxu0 0.0
    %1021 = vmatprep.subr.mxu0 0.0
    %1022 = vmatpush1.msra.mxu0 0.0
    %1023 = vmatprep.subr.mxu0 0.0
    %1024 = vmatpush1.msra.mxu0 0.0
    %1025 = vmatprep.subr.mxu0 0.0
    %1026 = vmatpush1.msra.mxu0 0.0
    %1027 = vmatprep.subr.mxu0 0.0
    %1028 = vmatpush1.msra.mxu0 0.0
    %1029 = vmatprep.subr.mxu0 0.0
    %1030 = vmatpush1.msra.mxu0 0.0
    %1031 = vmatprep.subr.mxu0 0.0
    %1032 = vmatpush1.msra.mxu0 0.0
    %1033 = vmatprep.subr.mxu0 0.0
    %1034 = vmatpush1.msra.mxu0 0.0
    %1035 = vmatprep.subr.mxu0 0.0
    %1036 = vmatpush1.msra.mxu0 0.0
    %1037 = vmatprep.subr.mxu0 0.0
    %1038 = vmatpush1.msra.mxu0 0.0
    %1039 = vmatprep.subr.mxu0 0.0
    %1040 = vmatpush1.msra.mxu0 0.0
    %1041 = vmatprep.subr.mxu0 0.0
    %1042 = vmatpush1.msra.mxu0 0.0
    %1043 = vmatprep.subr.mxu0 0.0
    %1044 = vmatpush1.msra.mxu0 0.0
    %1045 = vmatprep.subr.mxu0 0.0
    %1046 = vmatpush1.msra.mxu0 0.0
    %1047 = vmatprep.subr.mxu0 0.0
    %1048 = vmatpush1.msra.mxu0 0.0
    %1049 = vmatprep.subr.mxu0 0.0
    %1050 = vmatpush1.msra.mxu0 0.0
    %1051 = vmatprep.subr.mxu0 0.0
    %1052 = vmatpush1.msra.mxu0 0.0
    %1053 = vmatprep.mubr.f32.mxu0 0.0
    %1054 = vmatmul.mubr.f32.gmra.mrb[0].mxu0 %v987
    %v1055 = vpop.f32.mrb[0].mxu0
    %v1056 = vadd.f32 0.0, %v1055
    %v1057 = vpop.f32.mrb[0].mxu0
    %1058 = vdwg.mxu0
    %v1059 = vadd.f32 %v812, %v1056
    %1060 = vrot.lane.b32.xlu0 %v323, 104
    %v1061 = vpop.permute.xlu0 %1060
    %1062 = vrot.lane.b32.xlu0 %v225, 104
    %v1063 = vpop.permute.xlu0 %1062
    %1064 = vrot.lane.b32.xlu0 %v230, 104
    %v1065 = vpop.permute.xlu0 %1064
    %v1066 = vsel %vm324, %v1061, 0
    %v1068 = vsel %vm324, %v1063, 0
    %v1070 = vsel %vm324, %v1065, 0
    %1072 = vmatprep.subr.mxu0 0.0
    %1073 = vmatpush1.xpose.msra.mxu0 %v1068
    %1074 = vmatprep.subr.mxu0 0.0
    %1075 = vmatpush1.xpose.msra.mxu0 %v1070
    %1076 = vmatprep.subr.mxu0 0.0
    %1077 = vmatpush1.xpose.msra.mxu0 0.0
    %1078 = vmatprep.subr.mxu0 0.0
    %1079 = vmatpush1.xpose.msra.mxu0 0.0
    %1080 = vmatprep.subr.mxu0 0.0
    %1081 = vmatpush1.xpose.msra.mxu0 0.0
    %1082 = vmatprep.subr.mxu0 0.0
    %1083 = vmatpush1.xpose.msra.mxu0 0.0
    %1084 = vmatprep.subr.mxu0 0.0
    %1085 = vmatpush1.xpose.msra.mxu0 0.0
    %1086 = vmatprep.subr.mxu0 0.0
    %1087 = vmatpush1.xpose.msra.mxu0 0.0
    %1088 = vmatprep.subr.mxu0 0.0
    %1089 = vmatpush1.xpose.msra.mxu0 0.0
    %1090 = vmatprep.subr.mxu0 0.0
    %1091 = vmatpush1.xpose.msra.mxu0 0.0
    %1092 = vmatprep.subr.mxu0 0.0
    %1093 = vmatpush1.xpose.msra.mxu0 0.0
    %1094 = vmatprep.subr.mxu0 0.0
    %1095 = vmatpush1.xpose.msra.mxu0 0.0
    %1096 = vmatprep.subr.mxu0 0.0
    %1097 = vmatpush1.xpose.msra.mxu0 0.0
    %1098 = vmatprep.subr.mxu0 0.0
    %1099 = vmatpush1.xpose.msra.mxu0 0.0
    %1100 = vmatprep.subr.mxu0 0.0
    %1101 = vmatpush1.xpose.msra.mxu0 0.0
    %1102 = vmatprep.subr.mxu0 0.0
    %1103 = vmatpush1.xpose.msra.mxu0 0.0
    %1104 = vmatprep.subr.mxu0 0.0
    %1105 = vmatpush1.xpose.msra.mxu0 0.0
    %1106 = vmatprep.subr.mxu0 0.0
    %1107 = vmatpush1.xpose.msra.mxu0 0.0
    %1108 = vmatprep.subr.mxu0 0.0
    %1109 = vmatpush1.xpose.msra.mxu0 0.0
    %1110 = vmatprep.subr.mxu0 0.0
    %1111 = vmatpush1.xpose.msra.mxu0 0.0
    %1112 = vmatprep.subr.mxu0 0.0
    %1113 = vmatpush1.xpose.msra.mxu0 0.0
    %1114 = vmatprep.subr.mxu0 0.0
    %1115 = vmatpush1.xpose.msra.mxu0 0.0
    %1116 = vmatprep.subr.mxu0 0.0
    %1117 = vmatpush1.xpose.msra.mxu0 0.0
    %1118 = vmatprep.subr.mxu0 0.0
    %1119 = vmatpush1.xpose.msra.mxu0 0.0
    %1120 = vmatprep.subr.mxu0 0.0
    %1121 = vmatpush1.xpose.msra.mxu0 0.0
    %1122 = vmatprep.subr.mxu0 0.0
    %1123 = vmatpush1.xpose.msra.mxu0 0.0
    %1124 = vmatprep.subr.mxu0 0.0
    %1125 = vmatpush1.xpose.msra.mxu0 0.0
    %1126 = vmatprep.subr.mxu0 0.0
    %1127 = vmatpush1.xpose.msra.mxu0 0.0
    %1128 = vmatprep.subr.mxu0 0.0
    %1129 = vmatpush1.xpose.msra.mxu0 0.0
    %1130 = vmatprep.subr.mxu0 0.0
    %1131 = vmatpush1.xpose.msra.mxu0 0.0
    %1132 = vmatprep.subr.mxu0 0.0
    %1133 = vmatpush1.xpose.msra.mxu0 0.0
    %1134 = vmatprep.subr.mxu0 0.0
    %1135 = vmatpush1.xpose.msra.mxu0 0.0
    %1136 = vmatprep.mubr.f32.mxu0 0.0
    %1137 = vmatmul.mubr.f32.gmra.mrb[0].mxu0 %v1066
    %v1138 = vpop.f32.mrb[0].mxu0
    %v1139 = vadd.f32 0.0, %v1138
    %v1140 = vpop.f32.mrb[0].mxu0
    %1141 = vdwg.mxu0
    %v1142 = vsel %vm404, %v1139, -inf
    %1143 = vmax.xlane.f32.xlu0 %v1142
    %v1144 = vpop.xlane.xlu0 %1143
    %v1145 = vsub.f32 %v1139, %v1144
    %v1146 = vmul.f32 %v1145, 1.442695
    %v1147 = vpow.pop %v1146
    %v1148 = vsel %vm404, %v1147, 0.0
    %1149 = vadd.xlane.f32.xlu0 %v1148
    %v1150 = vpop.xlane.xlu0 %1149
    %v1151 = vrcp.pop %v1150
    %v1152 = vmul.f32 %v1147, %v1151
    %v1153 = vadd.f32 %v906, %v1152
    %1154 = vrot.lane.b32.xlu0 %v310, 104
    %v1155 = vpop.permute.xlu0 %1154
    %1156 = vrot.lane.b32.xlu0 %v315, 104
    %v1157 = vpop.permute.xlu0 %1156
    %v1161 = vsel %vm404, %v1152, 0
    %1163 = vmatprep.subr.mxu0 0.0
    %1164 = vmatpush1.msra.mxu0 %v1155
    %1165 = vmatprep.subr.mxu0 0.0
    %1166 = vmatpush1.msra.mxu0 %v1157
    %1167 = vmatprep.subr.mxu0 0.0
    %1168 = vmatpush1.msra.mxu0 0.0
    %1169 = vmatprep.subr.mxu0 0.0
    %1170 = vmatpush1.msra.mxu0 0.0
    %1171 = vmatprep.subr.mxu0 0.0
    %1172 = vmatpush1.msra.mxu0 0.0
    %1173 = vmatprep.subr.mxu0 0.0
    %1174 = vmatpush1.msra.mxu0 0.0
    %1175 = vmatprep.subr.mxu0 0.0
    %1176 = vmatpush1.msra.mxu0 0.0
    %1177 = vmatprep.subr.mxu0 0.0
    %1178 = vmatpush1.msra.mxu0 0.0
    %1179 = vmatprep.subr.mxu0 0.0
    %1180 = vmatpush1.msra.mxu0 0.0
    %1181 = vmatprep.subr.mxu0 0.0
    %1182 = vmatpush1.msra.mxu0 0.0
    %1183 = vmatprep.subr.mxu0 0.0
    %1184 = vmatpush1.msra.mxu0 0.0
    %1185 = vmatprep.subr.mxu0 0.0
    %1186 = vmatpush1.msra.mxu0 0.0
    %1187 = vmatprep.subr.mxu0 0.0
    %1188 = vmatpush1.msra.mxu0 0.0
    %1189 = vmatprep.subr.mxu0 0.0
    %1190 = vmatpush1.msra.mxu0 0.0
    %1191 = vmatprep.subr.mxu0 0.0
    %1192 = vmatpush1.msra.mxu0 0.0
    %1193 = vmatprep.subr.mxu0 0.0
    %1194 = vmatpush1.msra.mxu0 0.0
    %1195 = vmatprep.subr.mxu0 0.0
    %1196 = vmatpush1.msra.mxu0 0.0
    %1197 = vmatprep.subr.mxu0 0.0
    %1198 = vmatpush1.msra.mxu0 0.0
    %1199 = vmatprep.subr.mxu0 0.0
    %1200 = vmatpush1.msra.mxu0 0.0
    %1201 = vmatprep.subr.mxu0 0.0
    %1202 = vmatpush1.msra.mxu0 0.0
    %1203 = vmatprep.subr.mxu0 0.0
    %1204 = vmatpush1.msra.mxu0 0.0
    %1205 = vmatprep.subr.mxu0 0.0
    %1206 = vmatpush1.msra.mxu0 0.0
    %1207 = vmatprep.subr.mxu0 0.0
    %1208 = vmatpush1.msra.mxu0 0.0
    %1209 = vmatprep.subr.mxu0 0.0
    %1210 = vmatpush1.msra.mxu0 0.0
    %1211 = vmatprep.subr.mxu0 0.0
    %1212 = vmatpush1.msra.mxu0 0.0
    %1213 = vmatprep.subr.mxu0 0.0
    %1214 = vmatpush1.msra.mxu0 0.0
    %1215 = vmatprep.subr.mxu0 0.0
    %1216 = vmatpush1.msra.mxu0 0.0
    %1217 = vmatprep.subr.mxu0 0.0
    %1218 = vmatpush1.msra.mxu0 0.0
    %1219 = vmatprep.subr.mxu0 0.0
    %1220 = vmatpush1.msra.mxu0 0.0
    %1221 = vmatprep.subr.mxu0 0.0
    %1222 = vmatpush1.msra.mxu0 0.0
    %1223 = vmatprep.subr.mxu0 0.0
    %1224 = vmatpush1.msra.mxu0 0.0
    %1225 = vmatprep.subr.mxu0 0.0
    %1226 = vmatpush1.msra.mxu0 0.0
    %1227 = vmatprep.mubr.f32.mxu0 0.0
    %1228 = vmatmul.mubr.f32.gmra.mrb[0].mxu0 %v1161
    %v1229 = vpop.f32.mrb[0].mxu0
    %v1230 = vadd.f32 0.0, %v1229
    %v1231 = vpop.f32.mrb[0].mxu0
    %1232 = vdwg.mxu0
    %v1234 = vsel %vm324, %v1230, 0
    %1236 = vmatprep.subr.mxu0 0.0
    %1237 = vmatpush1.msra.mxu0 %v50
    %1238 = vmatprep.subr.mxu0 0.0
    %1239 = vmatpush1.msra.mxu0 0.0
    %1240 = vmatprep.subr.mxu0 0.0
    %1241 = vmatpush1.msra.mxu0 0.0
    %1242 = vmatprep.subr.mxu0 0.0
    %1243 = vmatpush1.msra.mxu0 0.0
    %1244 = vmatprep.subr.mxu0 0.0
    %1245 = vmatpush1.msra.mxu0 0.0
    %1246 = vmatprep.subr.mxu0 0.0
    %1247 = vmatpush1.msra.mxu0 0.0
    %1248 = vmatprep.subr.mxu0 0.0
    %1249 = vmatpush1.msra.mxu0 0.0
    %1250 = vmatprep.subr.mxu0 0.0
    %1251 = vmatpush1.msra.mxu0 0.0
    %1252 = vmatprep.subr.mxu0 0.0
    %1253 = vmatpush1.msra.mxu0 0.0
    %1254 = vmatprep.subr.mxu0 0.0
    %1255 = vmatpush1.msra.mxu0 0.0
    %1256 = vmatprep.subr.mxu0 0.0
    %1257 = vmatpush1.msra.mxu0 0.0
    %1258 = vmatprep.subr.mxu0 0.0
    %1259 = vmatpush1.msra.mxu0 0.0
    %1260 = vmatprep.subr.mxu0 0.0
    %1261 = vmatpush1.msra.mxu0 0.0
    %1262 = vmatprep.subr.mxu0 0.0
    %1263 = vmatpush1.msra.mxu0 0.0
    %1264 = vmatprep.subr.mxu0 0.0
    %1265 = vmatpush1.msra.mxu0 0.0
    %1266 = vmatprep.subr.mxu0 0.0
    %1267 = vmatpush1.msra.mxu0 0.0
    %1268 = vmatprep.subr.mxu0 0.0
    %1269 = vmatpush1.msra.mxu0 0.0
    %1270 = vmatprep.subr.mxu0 0.0
    %1271 = vmatpush1.msra.mxu0 0.0
    %1272 = vmatprep.subr.mxu0 0.0
    %1273 = vmatpush1.msra.mxu0 0.0
    %1274 = vmatprep.subr.mxu0 0.0
    %1275 = vmatpush1.msra.mxu0 0.0
    %1276 = vmatprep.subr.mxu0 0.0
    %1277 = vmatpush1.msra.mxu0 0.0
    %1278 = vmatprep.subr.mxu0 0.0
    %1279 = vmatpush1.msra.mxu0 0.0
    %1280 = vmatprep.subr.mxu0 0.0
    %1281 = vmatpush1.msra.mxu0 0.0
    %1282 = vmatprep.subr.mxu0 0.0
    %1283 = vmatpush1.msra.mxu0 0.0
    %1284 = vmatprep.subr.mxu0 0.0
    %1285 = vmatpush1.msra.mxu0 0.0
    %1286 = vmatprep.subr.mxu0 0.0
    %1287 = vmatpush1.msra.mxu0 0.0
    %1288 = vmatprep.subr.mxu0 0.0
    %1289 = vmatpush1.msra.mxu0 0.0
    %1290 = vmatprep.subr.mxu0 0.0
    %1291 = vmatpush1.msra.mxu0 0.0
    %1292 = vmatprep.subr.mxu0 0.0
    %1293 = vmatpush1.msra.mxu0 0.0
    %1294 = vmatprep.subr.mxu0 0.0
    %1295 = vmatpush1.msra.mxu0 0.0
    %1296 = vmatprep.subr.mxu0 0.0
    %1297 = vmatpush1.msra.mxu0 0.0
    %1298 = vmatprep.subr.mxu0 0.0
    %1299 = vmatpush1.msra.mxu0 0.0
    %1300 = vmatprep.mubr.f32.mxu0 0.0
    %1301 = vmatmul.mubr.f32.gmra.mrb[0].mxu0 %v1234
    %v1302 = vpop.f32.mrb[0].mxu0
    %v1303 = vadd.f32 0.0, %v1302
    %v1304 = vpop.f32.mrb[0].mxu0
    %1305 = vdwg.mxu0
    %v1306 = vadd.f32 %v1059, %v1303
    %v1307 = vmul.f32 %v1153, 0.25
    %1308 = vst.msk [vmem:[#allocation2] sm:$0xff] %vm404, %v1307
    %v1309 = vadd.f32 %v61, %v1306
    %v1310 = vsel %vm74, %v1309, 0.0
    %1311 = vadd.xlane.f32.xlu0 %v1310
    %v1312 = vpop.xlane.xlu0 %1311
    %v1313 = vrcp.pop 32.0
    %v1314 = vmul.f32 %v1312, %v1313
    %v1315 = vsub.f32 %v1309, %v1314
    %v1316 = vmul.f32 %v1315, %v1315
    %v1317 = vsel %vm74, %v1316, 0.0
    %1318 = vadd.xlane.f32.xlu0 %v1317
    %v1319 = vpop.xlane.xlu0 %1318
    %v1320 = vmul.f32 %v1319, %v1313
    %v1321 = vadd.f32 %v1320, 1e-05
    %v1322 = vrsqrt.pop %v1321
    %v1323 = vmul.f32 %v1315, %v1322
    %v1324 = vlaneseq
    %v1325 = vshrl.u32 %v1324, 7
    %v1326 = vsub.s32 0, %v1325
    %v1327 = vrot.slane %v56, %v1326
    %v1328 = vmul.f32 %v1323, %v1327
    %v1329 = vlaneseq
    %v1330 = vshrl.u32 %v1329, 7
    %v1331 = vsub.s32 0, %v1330
    %v1332 = vrot.slane %v57, %v1331
    %v1333 = vadd.f32 %v1328, %v1332
    %v1334 = vld [vmem:[%s5] sm:$0xff]
    %v1335 = vld [vmem:[%s5 + $0x8] sm:$0xff]
    %v1336 = vld [vmem:[%s5 + $0x10] sm:$0xff]
    %v1337 = vld [vmem:[%s5 + $0x18] sm:$0xff]
    %v1338 = vlaneseq
    %v1339 = vshrl.u32 %v1338, 7
    %v1340 = vsub.s32 0, %v1339
    %v1341 = vrot.slane %v60, %v1340
    %v1343 = vsel %vm74, %v1333, 0
    %1345 = vmatprep.subr.mxu0 0.0
    %1346 = vmatpush1.msra.mxu0 %v1334
    %1347 = vmatprep.subr.mxu0 0.0
    %1348 = vmatpush1.msra.mxu0 %v1335
    %1349 = vmatprep.subr.mxu0 0.0
    %1350 = vmatpush1.msra.mxu0 %v1336
    %1351 = vmatprep.subr.mxu0 0.0
    %1352 = vmatpush1.msra.mxu0 %v1337
    %1353 = vmatprep.subr.mxu0 0.0
    %1354 = vmatpush1.msra.mxu0 0.0
    %1355 = vmatprep.subr.mxu0 0.0
    %1356 = vmatpush1.msra.mxu0 0.0
    %1357 = vmatprep.subr.mxu0 0.0
    %1358 = vmatpush1.msra.mxu0 0.0
    %1359 = vmatprep.subr.mxu0 0.0
    %1360 = vmatpush1.msra.mxu0 0.0
    %1361 = vmatprep.subr.mxu0 0.0
    %1362 = vmatpush1.msra.mxu0 0.0
    %1363 = vmatprep.subr.mxu0 0.0
    %1364 = vmatpush1.msra.mxu0 0.0
    %1365 = vmatprep.subr.mxu0 0.0
    %1366 = vmatpush1.msra.mxu0 0.0
    %1367 = vmatprep.subr.mxu0 0.0
    %1368 = vmatpush1.msra.mxu0 0.0
    %1369 = vmatprep.subr.mxu0 0.0
    %1370 = vmatpush1.msra.mxu0 0.0
    %1371 = vmatprep.subr.mxu0 0.0
    %1372 = vmatpush1.msra.mxu0 0.0
    %1373 = vmatprep.subr.mxu0 0.0
    %1374 = vmatpush1.msra.mxu0 0.0
    %1375 = vmatprep.subr.mxu0 0.0
    %1376 = vmatpush1.msra.mxu0 0.0
    %1377 = vmatprep.subr.mxu0 0.0
    %1378 = vmatpush1.msra.mxu0 0.0
    %1379 = vmatprep.subr.mxu0 0.0
    %1380 = vmatpush1.msra.mxu0 0.0
    %1381 = vmatprep.subr.mxu0 0.0
    %1382 = vmatpush1.msra.mxu0 0.0
    %1383 = vmatprep.subr.mxu0 0.0
    %1384 = vmatpush1.msra.mxu0 0.0
    %1385 = vmatprep.subr.mxu0 0.0
    %1386 = vmatpush1.msra.mxu0 0.0
    %1387 = vmatprep.subr.mxu0 0.0
    %1388 = vmatpush1.msra.mxu0 0.0
    %1389 = vmatprep.subr.mxu0 0.0
    %1390 = vmatpush1.msra.mxu0 0.0
    %1391 = vmatprep.subr.mxu0 0.0
    %1392 = vmatpush1.msra.mxu0 0.0
    %1393 = vmatprep.subr.mxu0 0.0
    %1394 = vmatpush1.msra.mxu0 0.0
    %1395 = vmatprep.subr.mxu0 0.0
    %1396 = vmatpush1.msra.mxu0 0.0
    %1397 = vmatprep.subr.mxu0 0.0
    %1398 = vmatpush1.msra.mxu0 0.0
    %1399 = vmatprep.subr.mxu0 0.0
    %1400 = vmatpush1.msra.mxu0 0.0
    %1401 = vmatprep.subr.mxu0 0.0
    %1402 = vmatpush1.msra.mxu0 0.0
    %1403 = vmatprep.subr.mxu0 0.0
    %1404 = vmatpush1.msra.mxu0 0.0
    %1405 = vmatprep.subr.mxu0 0.0
    %1406 = vmatpush1.msra.mxu0 0.0
    %1407 = vmatprep.subr.mxu0 0.0
    %1408 = vmatpush1.msra.mxu0 0.0
    %1409 = vmatprep.mubr.f32.mxu0 0.0
    %1410 = vmatmul.mubr.f32.gmra.mrb[0].mxu0 %v1343
    %v1411 = vpop.f32.mrb[0].mxu0
    %v1412 = vadd.f32 %v1341, %v1411
    %v1413 = vpop.f32.mrb[0].mxu0
    %1414 = vdwg.mxu0
    %v1415 = vmax.f32 %v1412, 0.0
    %v1416 = vld [vmem:[%s6] sm:$0xff]
    %v1417 = vld [vmem:[%s6 + $0x8] sm:$0xff]
    %v1418 = vld [vmem:[%s6 + $0x10] sm:$0xff]
    %v1419 = vld [vmem:[%s6 + $0x18] sm:$0xff]
    %v1420 = vld [vmem:[%s6 + $0x20] sm:$0xff]
    %v1421 = vld [vmem:[%s6 + $0x28] sm:$0xff]
    %v1422 = vld [vmem:[%s6 + $0x30] sm:$0xff]
    %v1423 = vld [vmem:[%s6 + $0x38] sm:$0xff]
    %v1424 = vlaneseq
    %v1425 = vshrl.u32 %v1424, 7
    %v1426 = vsub.s32 0, %v1425
    %v1427 = vrot.slane %v55, %v1426
    %vm1428 = vcmask 523264
    %v1430 = vsel %vm1428, %v1415, 0
    %1432 = vmatprep.subr.mxu0 0.0
    %1433 = vmatpush1.msra.mxu0 %v1416
    %1434 = vmatprep.subr.mxu0 0.0
    %1435 = vmatpush1.msra.mxu0 %v1417
    %1436 = vmatprep.subr.mxu0 0.0
    %1437 = vmatpush1.msra.mxu0 %v1418
    %1438 = vmatprep.subr.mxu0 0.0
    %1439 = vmatpush1.msra.mxu0 %v1419
    %1440 = vmatprep.subr.mxu0 0.0
    %1441 = vmatpush1.msra.mxu0 %v1420
    %1442 = vmatprep.subr.mxu0 0.0
    %1443 = vmatpush1.msra.mxu0 %v1421
    %1444 = vmatprep.subr.mxu0 0.0
    %1445 = vmatpush1.msra.mxu0 %v1422
    %1446 = vmatprep.subr.mxu0 0.0
    %1447 = vmatpush1.msra.mxu0 %v1423
    %1448 = vmatprep.subr.mxu0 0.0
    %1449 = vmatpush1.msra.mxu0 0.0
    %1450 = vmatprep.subr.mxu0 0.0
    %1451 = vmatpush1.msra.mxu0 0.0
    %1452 = vmatprep.subr.mxu0 0.0
    %1453 = vmatpush1.msra.mxu0 0.0
    %1454 = vmatprep.subr.mxu0 0.0
    %1455 = vmatpush1.msra.mxu0 0.0
    %1456 = vmatprep.subr.mxu0 0.0
    %1457 = vmatpush1.msra.mxu0 0.0
    %1458 = vmatprep.subr.mxu0 0.0
    %1459 = vmatpush1.msra.mxu0 0.0
    %1460 = vmatprep.subr.mxu0 0.0
    %1461 = vmatpush1.msra.mxu0 0.0
    %1462 = vmatprep.subr.mxu0 0.0
    %1463 = vmatpush1.msra.mxu0 0.0
    %1464 = vmatprep.subr.mxu0 0.0
    %1465 = vmatpush1.msra.mxu0 0.0
    %1466 = vmatprep.subr.mxu0 0.0
    %1467 = vmatpush1.msra.mxu0 0.0
    %1468 = vmatprep.subr.mxu0 0.0
    %1469 = vmatpush1.msra.mxu0 0.0
    %1470 = vmatprep.subr.mxu0 0.0
    %1471 = vmatpush1.msra.mxu0 0.0
    %1472 = vmatprep.subr.mxu0 0.0
    %1473 = vmatpush1.msra.mxu0 0.0
    %1474 = vmatprep.subr.mxu0 0.0
    %1475 = vmatpush1.msra.mxu0 0.0
    %1476 = vmatprep.subr.mxu0 0.0
    %1477 = vmatpush1.msra.mxu0 0.0
    %1478 = vmatprep.subr.mxu0 0.0
    %1479 = vmatpush1.msra.mxu0 0.0
    %1480 = vmatprep.subr.mxu0 0.0
    %1481 = vmatpush1.msra.mxu0 0.0
    %1482 = vmatprep.subr.mxu0 0.0
    %1483 = vmatpush1.msra.mxu0 0.0
    %1484 = vmatprep.subr.mxu0 0.0
    %1485 = vmatpush1.msra.mxu0 0.0
    %1486 = vmatprep.subr.mxu0 0.0
    %1487 = vmatpush1.msra.mxu0 0.0
    %1488 = vmatprep.subr.mxu0 0.0
    %1489 = vmatpush1.msra.mxu0 0.0
    %1490 = vmatprep.subr.mxu0 0.0
    %1491 = vmatpush1.msra.mxu0 0.0
    %1492 = vmatprep.subr.mxu0 0.0
    %1493 = vmatpush1.msra.mxu0 0.0
    %1494 = vmatprep.subr.mxu0 0.0
    %1495 = vmatpush1.msra.mxu0 0.0
    %1496 = vmatprep.mubr.f32.mxu0 0.0
    %1497 = vmatmul.mubr.f32.gmra.mrb[0].mxu0 %v1430
    %v1498 = vpop.f32.mrb[0].mxu0
    %v1499 = vadd.f32 %v1427, %v1498
    %v1500 = vpop.f32.mrb[0].mxu0
    %1501 = vdwg.mxu0
    %v1502 = vadd.f32 %v1333, %v1499
    %v1503 = vsel %vm74, %v1502, 0.0
    %1504 = vadd.xlane.f32.xlu0 %v1503
    %v1505 = vpop.xlane.xlu0 %1504
    %v1506 = vmul.f32 %v1505, %v1313
    %v1507 = vsub.f32 %v1502, %v1506
    %v1508 = vmul.f32 %v1507, %v1507
    %v1509 = vsel %vm74, %v1508, 0.0
    %1510 = vadd.xlane.f32.xlu0 %v1509
    %v1511 = vpop.xlane.xlu0 %1510
    %v1512 = vmul.f32 %v1511, %v1313
    %v1513 = vadd.f32 %v1512, 1e-05
    %v1514 = vrsqrt.pop %v1513
    %v1515 = vmul.f32 %v1507, %v1514
    %v1516 = vlaneseq
    %v1517 = vshrl.u32 %v1516, 7
    %v1518 = vsub.s32 0, %v1517
    %v1519 = vrot.slane %v58, %v1518
    %v1520 = vmul.f32 %v1515, %v1519
    %v1521 = vlaneseq
    %v1522 = vshrl.u32 %v1521, 7
    %v1523 = vsub.s32 0, %v1522
    %v1524 = vrot.slane %v59, %v1523
    %v1525 = vadd.f32 %v1520, %v1524
    %1526 = vst.msk [vmem:[%s8] sm:$0xff] %vm74, %v1525
    %s1527 = scalar_lea.vmem %s0, 8
    %v1528 = vld [vmem:[%s1527] sm:$0xff]
    %s1529 = scalar_lea.vmem %s1, 16
    %v1530 = vld [vmem:[%s1529] sm:$0xff]
    %v1531 = vld [vmem:[%s1529 + $0x8] sm:$0xff]
    %s1532 = scalar_lea.vmem %s2, 8
    %v1533 = vld [vmem:[%s1532] sm:$0xff]
    %v1534 = vadd.f32 %v1528, %v1533
    %s1535 = scalar_lea.vmem %s3, 16
    %v1536 = vld [vmem:[%s1535] sm:$0xff]
    %v1537 = vld [vmem:[%s1535 + $0x8] sm:$0xff]
    %v1538 = vadd.f32 %v1530, %v1536
    %v1539 = vadd.f32 %v1531, %v1537
    %v1541 = vsel %vm74, %v1534, 0
    %1543 = vmatprep.subr.mxu0 0.0
    %1544 = vmatpush1.msra.mxu0 %v32
    %1545 = vmatprep.subr.mxu0 0.0
    %1546 = vmatpush1.msra.mxu0 %v33
    %1547 = vmatprep.subr.mxu0 0.0
    %1548 = vmatpush1.msra.mxu0 %v34
    %1549 = vmatprep.subr.mxu0 0.0
    %1550 = vmatpush1.msra.mxu0 %v35
    %1551 = vmatprep.subr.mxu0 0.0
    %1552 = vmatpush1.msra.mxu0 0.0
    %1553 = vmatprep.subr.mxu0 0.0
    %1554 = vmatpush1.msra.mxu0 0.0
    %1555 = vmatprep.subr.mxu0 0.0
    %1556 = vmatpush1.msra.mxu0 0.0
    %1557 = vmatprep.subr.mxu0 0.0
    %1558 = vmatpush1.msra.mxu0 0.0
    %1559 = vmatprep.subr.mxu0 0.0
    %1560 = vmatpush1.msra.mxu0 0.0
    %1561 = vmatprep.subr.mxu0 0.0
    %1562 = vmatpush1.msra.mxu0 0.0
    %1563 = vmatprep.subr.mxu0 0.0
    %1564 = vmatpush1.msra.mxu0 0.0
    %1565 = vmatprep.subr.mxu0 0.0
    %1566 = vmatpush1.msra.mxu0 0.0
    %1567 = vmatprep.subr.mxu0 0.0
    %1568 = vmatpush1.msra.mxu0 0.0
    %1569 = vmatprep.subr.mxu0 0.0
    %1570 = vmatpush1.msra.mxu0 0.0
    %1571 = vmatprep.subr.mxu0 0.0
    %1572 = vmatpush1.msra.mxu0 0.0
    %1573 = vmatprep.subr.mxu0 0.0
    %1574 = vmatpush1.msra.mxu0 0.0
    %1575 = vmatprep.subr.mxu0 0.0
    %1576 = vmatpush1.msra.mxu0 0.0
    %1577 = vmatprep.subr.mxu0 0.0
    %1578 = vmatpush1.msra.mxu0 0.0
    %1579 = vmatprep.subr.mxu0 0.0
    %1580 = vmatpush1.msra.mxu0 0.0
    %1581 = vmatprep.subr.mxu0 0.0
    %1582 = vmatpush1.msra.mxu0 0.0
    %1583 = vmatprep.subr.mxu0 0.0
    %1584 = vmatpush1.msra.mxu0 0.0
    %1585 = vmatprep.subr.mxu0 0.0
    %1586 = vmatpush1.msra.mxu0 0.0
    %1587 = vmatprep.subr.mxu0 0.0
    %1588 = vmatpush1.msra.mxu0 0.0
    %1589 = vmatprep.subr.mxu0 0.0
    %1590 = vmatpush1.msra.mxu0 0.0
    %1591 = vmatprep.subr.mxu0 0.0
    %1592 = vmatpush1.msra.mxu0 0.0
    %1593 = vmatprep.subr.mxu0 0.0
    %1594 = vmatpush1.msra.mxu0 0.0
    %1595 = vmatprep.subr.mxu0 0.0
    %1596 = vmatpush1.msra.mxu0 0.0
    %1597 = vmatprep.subr.mxu0 0.0
    %1598 = vmatpush1.msra.mxu0 0.0
    %1599 = vmatprep.subr.mxu0 0.0
    %1600 = vmatpush1.msra.mxu0 0.0
    %1601 = vmatprep.subr.mxu0 0.0
    %1602 = vmatpush1.msra.mxu0 0.0
    %1603 = vmatprep.subr.mxu0 0.0
    %1604 = vmatpush1.msra.mxu0 0.0
    %1605 = vmatprep.subr.mxu0 0.0
    %1606 = vmatpush1.msra.mxu0 0.0
    %1607 = vmatprep.mubr.f32.mxu0 0.0
    %1608 = vmatmul.mubr.f32.gmra.mrb[0].mxu0 %v1541
    %v1609 = vpop.f32.mrb[0].mxu0
    %v1610 = vadd.f32 %v73, %v1609
    %v1611 = vpop.f32.mrb[0].mxu0
    %1612 = vdwg.mxu0
    %v1614 = vsel %vm74, %v1538, 0
    %v1617 = vsel %vm74, %v1539, 0
    %1619 = vmatprep.subr.mxu0 0.0
    %1620 = vmatpush1.msra.mxu0 %v37
    %1621 = vmatprep.subr.mxu0 0.0
    %1622 = vmatpush1.msra.mxu0 %v38
    %1623 = vmatprep.subr.mxu0 0.0
    %1624 = vmatpush1.msra.mxu0 %v39
    %1625 = vmatprep.subr.mxu0 0.0
    %1626 = vmatpush1.msra.mxu0 %v40
    %1627 = vmatprep.subr.mxu0 0.0
    %1628 = vmatpush1.msra.mxu0 0.0
    %1629 = vmatprep.subr.mxu0 0.0
    %1630 = vmatpush1.msra.mxu0 0.0
    %1631 = vmatprep.subr.mxu0 0.0
    %1632 = vmatpush1.msra.mxu0 0.0
    %1633 = vmatprep.subr.mxu0 0.0
    %1634 = vmatpush1.msra.mxu0 0.0
    %1635 = vmatprep.subr.mxu0 0.0
    %1636 = vmatpush1.msra.mxu0 0.0
    %1637 = vmatprep.subr.mxu0 0.0
    %1638 = vmatpush1.msra.mxu0 0.0
    %1639 = vmatprep.subr.mxu0 0.0
    %1640 = vmatpush1.msra.mxu0 0.0
    %1641 = vmatprep.subr.mxu0 0.0
    %1642 = vmatpush1.msra.mxu0 0.0
    %1643 = vmatprep.subr.mxu0 0.0
    %1644 = vmatpush1.msra.mxu0 0.0
    %1645 = vmatprep.subr.mxu0 0.0
    %1646 = vmatpush1.msra.mxu0 0.0
    %1647 = vmatprep.subr.mxu0 0.0
    %1648 = vmatpush1.msra.mxu0 0.0
    %1649 = vmatprep.subr.mxu0 0.0
    %1650 = vmatpush1.msra.mxu0 0.0
    %1651 = vmatprep.subr.mxu0 0.0
    %1652 = vmatpush1.msra.mxu0 0.0
    %1653 = vmatprep.subr.mxu0 0.0
    %1654 = vmatpush1.msra.mxu0 0.0
    %1655 = vmatprep.subr.mxu0 0.0
    %1656 = vmatpush1.msra.mxu0 0.0
    %1657 = vmatprep.subr.mxu0 0.0
    %1658 = vmatpush1.msra.mxu0 0.0
    %1659 = vmatprep.subr.mxu0 0.0
    %1660 = vmatpush1.msra.mxu0 0.0
    %1661 = vmatprep.subr.mxu0 0.0
    %1662 = vmatpush1.msra.mxu0 0.0
    %1663 = vmatprep.subr.mxu0 0.0
    %1664 = vmatpush1.msra.mxu0 0.0
    %1665 = vmatprep.subr.mxu0 0.0
    %1666 = vmatpush1.msra.mxu0 0.0
    %1667 = vmatprep.subr.mxu0 0.0
    %1668 = vmatpush1.msra.mxu0 0.0
    %1669 = vmatprep.subr.mxu0 0.0
    %1670 = vmatpush1.msra.mxu0 0.0
    %1671 = vmatprep.subr.mxu0 0.0
    %1672 = vmatpush1.msra.mxu0 0.0
    %1673 = vmatprep.subr.mxu0 0.0
    %1674 = vmatpush1.msra.mxu0 0.0
    %1675 = vmatprep.subr.mxu0 0.0
    %1676 = vmatpush1.msra.mxu0 0.0
    %1677 = vmatprep.subr.mxu0 0.0
    %1678 = vmatpush1.msra.mxu0 0.0
    %1679 = vmatprep.subr.mxu0 0.0
    %1680 = vmatpush1.msra.mxu0 0.0
    %1681 = vmatprep.subr.mxu0 0.0
    %1682 = vmatpush1.msra.mxu0 0.0
    %1683 = vmatprep.mubr.f32.mxu0 0.0
    %1684 = vmatmul.mubr.f32.gmra.mrb[0].mxu0 %v1614
    %v1685 = vpop.f32.mrb[0].mxu0
    %v1686 = vadd.f32 %v151, %v1685
    %v1687 = vpop.f32.mrb[0].mxu0
    %1688 = vmatprep.mubr.f32.mxu0 0.0
    %1689 = vmatmul.mubr.f32.gmra.mrb[0].mxu0 %v1617
    %v1690 = vpop.f32.mrb[0].mxu0
    %v1691 = vadd.f32 %v151, %v1690
    %v1692 = vpop.f32.mrb[0].mxu0
    %1693 = vdwg.mxu0
    %v1695 = vsel %vm74, %v1530, 0
    %v1698 = vsel %vm74, %v1531, 0
    %1700 = vmatprep.subr.mxu0 0.0
    %1701 = vmatpush1.msra.mxu0 %v42
    %1702 = vmatprep.subr.mxu0 0.0
    %1703 = vmatpush1.msra.mxu0 %v43
    %1704 = vmatprep.subr.mxu0 0.0
    %1705 = vmatpush1.msra.mxu0 %v44
    %1706 = vmatprep.subr.mxu0 0.0
    %1707 = vmatpush1.msra.mxu0 %v45
    %1708 = vmatprep.subr.mxu0 0.0
    %1709 = vmatpush1.msra.mxu0 0.0
    %1710 = vmatprep.subr.mxu0 0.0
    %1711 = vmatpush1.msra.mxu0 0.0
    %1712 = vmatprep.subr.mxu0 0.0
    %1713 = vmatpush1.msra.mxu0 0.0
    %1714 = vmatprep.subr.mxu0 0.0
    %1715 = vmatpush1.msra.mxu0 0.0
    %1716 = vmatprep.subr.mxu0 0.0
    %1717 = vmatpush1.msra.mxu0 0.0
    %1718 = vmatprep.subr.mxu0 0.0
    %1719 = vmatpush1.msra.mxu0 0.0
    %1720 = vmatprep.subr.mxu0 0.0
    %1721 = vmatpush1.msra.mxu0 0.0
    %1722 = vmatprep.subr.mxu0 0.0
    %1723 = vmatpush1.msra.mxu0 0.0
    %1724 = vmatprep.subr.mxu0 0.0
    %1725 = vmatpush1.msra.mxu0 0.0
    %1726 = vmatprep.subr.mxu0 0.0
    %1727 = vmatpush1.msra.mxu0 0.0
    %1728 = vmatprep.subr.mxu0 0.0
    %1729 = vmatpush1.msra.mxu0 0.0
    %1730 = vmatprep.subr.mxu0 0.0
    %1731 = vmatpush1.msra.mxu0 0.0
    %1732 = vmatprep.subr.mxu0 0.0
    %1733 = vmatpush1.msra.mxu0 0.0
    %1734 = vmatprep.subr.mxu0 0.0
    %1735 = vmatpush1.msra.mxu0 0.0
    %1736 = vmatprep.subr.mxu0 0.0
    %1737 = vmatpush1.msra.mxu0 0.0
    %1738 = vmatprep.subr.mxu0 0.0
    %1739 = vmatpush1.msra.mxu0 0.0
    %1740 = vmatprep.subr.mxu0 0.0
    %1741 = vmatpush1.msra.mxu0 0.0
    %1742 = vmatprep.subr.mxu0 0.0
    %1743 = vmatpush1.msra.mxu0 0.0
    %1744 = vmatprep.subr.mxu0 0.0
    %1745 = vmatpush1.msra.mxu0 0.0
    %1746 = vmatprep.subr.mxu0 0.0
    %1747 = vmatpush1.msra.mxu0 0.0
    %1748 = vmatprep.subr.mxu0 0.0
    %1749 = vmatpush1.msra.mxu0 0.0
    %1750 = vmatprep.subr.mxu0 0.0
    %1751 = vmatpush1.msra.mxu0 0.0
    %1752 = vmatprep.subr.mxu0 0.0
    %1753 = vmatpush1.msra.mxu0 0.0
    %1754 = vmatprep.subr.mxu0 0.0
    %1755 = vmatpush1.msra.mxu0 0.0
    %1756 = vmatprep.subr.mxu0 0.0
    %1757 = vmatpush1.msra.mxu0 0.0
    %1758 = vmatprep.subr.mxu0 0.0
    %1759 = vmatpush1.msra.mxu0 0.0
    %1760 = vmatprep.subr.mxu0 0.0
    %1761 = vmatpush1.msra.mxu0 0.0
    %1762 = vmatprep.subr.mxu0 0.0
    %1763 = vmatpush1.msra.mxu0 0.0
    %1764 = vmatprep.mubr.f32.mxu0 0.0
    %1765 = vmatmul.mubr.f32.gmra.mrb[0].mxu0 %v1695
    %v1766 = vpop.f32.mrb[0].mxu0
    %v1767 = vadd.f32 %v236, %v1766
    %v1768 = vpop.f32.mrb[0].mxu0
    %1769 = vmatprep.mubr.f32.mxu0 0.0
    %1770 = vmatmul.mubr.f32.gmra.mrb[0].mxu0 %v1698
    %v1771 = vpop.f32.mrb[0].mxu0
    %v1772 = vadd.f32 %v236, %v1771
    %v1773 = vpop.f32.mrb[0].mxu0
    %1774 = vdwg.mxu0
    %v1775 = vmul.f32 %v1610, 0.35355338
    %v1777 = vsel %vm324, %v1775, 0
    %v1780 = vsel %vm324, %v1686, 0
    %v1783 = vsel %vm324, %v1691, 0
    %1785 = vmatprep.subr.mxu0 0.0
    %1786 = vmatpush1.xpose.msra.mxu0 %v1780
    %1787 = vmatprep.subr.mxu0 0.0
    %1788 = vmatpush1.xpose.msra.mxu0 %v1783
    %1789 = vmatprep.subr.mxu0 0.0
    %1790 = vmatpush1.xpose.msra.mxu0 0.0
    %1791 = vmatprep.subr.mxu0 0.0
    %1792 = vmatpush1.xpose.msra.mxu0 0.0
    %1793 = vmatprep.subr.mxu0 0.0
    %1794 = vmatpush1.xpose.msra.mxu0 0.0
    %1795 = vmatprep.subr.mxu0 0.0
    %1796 = vmatpush1.xpose.msra.mxu0 0.0
    %1797 = vmatprep.subr.mxu0 0.0
    %1798 = vmatpush1.xpose.msra.mxu0 0.0
    %1799 = vmatprep.subr.mxu0 0.0
    %1800 = vmatpush1.xpose.msra.mxu0 0.0
    %1801 = vmatprep.subr.mxu0 0.0
    %1802 = vmatpush1.xpose.msra.mxu0 0.0
    %1803 = vmatprep.subr.mxu0 0.0
    %1804 = vmatpush1.xpose.msra.mxu0 0.0
    %1805 = vmatprep.subr.mxu0 0.0
    %1806 = vmatpush1.xpose.msra.mxu0 0.0
    %1807 = vmatprep.subr.mxu0 0.0
    %1808 = vmatpush1.xpose.msra.mxu0 0.0
    %1809 = vmatprep.subr.mxu0 0.0
    %1810 = vmatpush1.xpose.msra.mxu0 0.0
    %1811 = vmatprep.subr.mxu0 0.0
    %1812 = vmatpush1.xpose.msra.mxu0 0.0
    %1813 = vmatprep.subr.mxu0 0.0
    %1814 = vmatpush1.xpose.msra.mxu0 0.0
    %1815 = vmatprep.subr.mxu0 0.0
    %1816 = vmatpush1.xpose.msra.mxu0 0.0
    %1817 = vmatprep.subr.mxu0 0.0
    %1818 = vmatpush1.xpose.msra.mxu0 0.0
    %1819 = vmatprep.subr.mxu0 0.0
    %1820 = vmatpush1.xpose.msra.mxu0 0.0
    %1821 = vmatprep.subr.mxu0 0.0
    %1822 = vmatpush1.xpose.msra.mxu0 0.0
    %1823 = vmatprep.subr.mxu0 0.0
    %1824 = vmatpush1.xpose.msra.mxu0 0.0
    %1825 = vmatprep.subr.mxu0 0.0
    %1826 = vmatpush1.xpose.msra.mxu0 0.0
    %1827 = vmatprep.subr.mxu0 0.0
    %1828 = vmatpush1.xpose.msra.mxu0 0.0
    %1829 = vmatprep.subr.mxu0 0.0
    %1830 = vmatpush1.xpose.msra.mxu0 0.0
    %1831 = vmatprep.subr.mxu0 0.0
    %1832 = vmatpush1.xpose.msra.mxu0 0.0
    %1833 = vmatprep.subr.mxu0 0.0
    %1834 = vmatpush1.xpose.msra.mxu0 0.0
    %1835 = vmatprep.subr.mxu0 0.0
    %1836 = vmatpush1.xpose.msra.mxu0 0.0
    %1837 = vmatprep.subr.mxu0 0.0
    %1838 = vmatpush1.xpose.msra.mxu0 0.0
    %1839 = vmatprep.subr.mxu0 0.0
    %1840 = vmatpush1.xpose.msra.mxu0 0.0
    %1841 = vmatprep.subr.mxu0 0.0
    %1842 = vmatpush1.xpose.msra.mxu0 0.0
    %1843 = vmatprep.subr.mxu0 0.0
    %1844 = vmatpush1.xpose.msra.mxu0 0.0
    %1845 = vmatprep.subr.mxu0 0.0
    %1846 = vmatpush1.xpose.msra.mxu0 0.0
    %1847 = vmatprep.subr.mxu0 0.0
    %1848 = vmatpush1.xpose.msra.mxu0 0.0
    %1849 = vmatprep.mubr.f32.mxu0 0.0
    %1850 = vmatmul.mubr.f32.gmra.mrb[0].mxu0 %v1777
    %v1851 = vpop.f32.mrb[0].mxu0
    %v1852 = vadd.f32 0.0, %v1851
    %v1853 = vpop.f32.mrb[0].mxu0
    %1854 = vdwg.mxu0
    %v1855 = vsel %vm404, %v1852, -inf
    %1856 = vmax.xlane.f32.xlu0 %v1855
    %v1857 = vpop.xlane.xlu0 %1856
    %v1858 = vsub.f32 %v1852, %v1857
    %v1859 = vmul.f32 %v1858, 1.442695
    %v1860 = vpow.pop %v1859
    %v1861 = vsel %vm404, %v1860, 0.0
    %1862 = vadd.xlane.f32.xlu0 %v1861
    %v1863 = vpop.xlane.xlu0 %1862
    %v1864 = vrcp.pop %v1863
    %v1865 = vmul.f32 %v1860, %v1864
    %v1866 = vadd.f32 %v1865, 0.0
    %v1868 = vsel %vm404, %v1865, 0
    %1870 = vmatprep.subr.mxu0 0.0
    %1871 = vmatpush1.msra.mxu0 %v1767
    %1872 = vmatprep.subr.mxu0 0.0
    %1873 = vmatpush1.msra.mxu0 %v1772
    %1874 = vmatprep.subr.mxu0 0.0
    %1875 = vmatpush1.msra.mxu0 0.0
    %1876 = vmatprep.subr.mxu0 0.0
    %1877 = vmatpush1.msra.mxu0 0.0
    %1878 = vmatprep.subr.mxu0 0.0
    %1879 = vmatpush1.msra.mxu0 0.0
    %1880 = vmatprep.subr.mxu0 0.0
    %1881 = vmatpush1.msra.mxu0 0.0
    %1882 = vmatprep.subr.mxu0 0.0
    %1883 = vmatpush1.msra.mxu0 0.0
    %1884 = vmatprep.subr.mxu0 0.0
    %1885 = vmatpush1.msra.mxu0 0.0
    %1886 = vmatprep.subr.mxu0 0.0
    %1887 = vmatpush1.msra.mxu0 0.0
    %1888 = vmatprep.subr.mxu0 0.0
    %1889 = vmatpush1.msra.mxu0 0.0
    %1890 = vmatprep.subr.mxu0 0.0
    %1891 = vmatpush1.msra.mxu0 0.0
    %1892 = vmatprep.subr.mxu0 0.0
    %1893 = vmatpush1.msra.mxu0 0.0
    %1894 = vmatprep.subr.mxu0 0.0
    %1895 = vmatpush1.msra.mxu0 0.0
    %1896 = vmatprep.subr.mxu0 0.0
    %1897 = vmatpush1.msra.mxu0 0.0
    %1898 = vmatprep.subr.mxu0 0.0
    %1899 = vmatpush1.msra.mxu0 0.0
    %1900 = vmatprep.subr.mxu0 0.0
    %1901 = vmatpush1.msra.mxu0 0.0
    %1902 = vmatprep.subr.mxu0 0.0
    %1903 = vmatpush1.msra.mxu0 0.0
    %1904 = vmatprep.subr.mxu0 0.0
    %1905 = vmatpush1.msra.mxu0 0.0
    %1906 = vmatprep.subr.mxu0 0.0
    %1907 = vmatpush1.msra.mxu0 0.0
    %1908 = vmatprep.subr.mxu0 0.0
    %1909 = vmatpush1.msra.mxu0 0.0
    %1910 = vmatprep.subr.mxu0 0.0
    %1911 = vmatpush1.msra.mxu0 0.0
    %1912 = vmatprep.subr.mxu0 0.0
    %1913 = vmatpush1.msra.mxu0 0.0
    %1914 = vmatprep.subr.mxu0 0.0
    %1915 = vmatpush1.msra.mxu0 0.0
    %1916 = vmatprep.subr.mxu0 0.0
    %1917 = vmatpush1.msra.mxu0 0.0
    %1918 = vmatprep.subr.mxu0 0.0
    %1919 = vmatpush1.msra.mxu0 0.0
    %1920 = vmatprep.subr.mxu0 0.0
    %1921 = vmatpush1.msra.mxu0 0.0
    %1922 = vmatprep.subr.mxu0 0.0
    %1923 = vmatpush1.msra.mxu0 0.0
    %1924 = vmatprep.subr.mxu0 0.0
    %1925 = vmatpush1.msra.mxu0 0.0
    %1926 = vmatprep.subr.mxu0 0.0
    %1927 = vmatpush1.msra.mxu0 0.0
    %1928 = vmatprep.subr.mxu0 0.0
    %1929 = vmatpush1.msra.mxu0 0.0
    %1930 = vmatprep.subr.mxu0 0.0
    %1931 = vmatpush1.msra.mxu0 0.0
    %1932 = vmatprep.subr.mxu0 0.0
    %1933 = vmatpush1.msra.mxu0 0.0
    %1934 = vmatprep.mubr.f32.mxu0 0.0
    %1935 = vmatmul.mubr.f32.gmra.mrb[0].mxu0 %v1868
    %v1936 = vpop.f32.mrb[0].mxu0
    %v1937 = vadd.f32 0.0, %v1936
    %v1938 = vpop.f32.mrb[0].mxu0
    %1939 = vdwg.mxu0
    %v1941 = vsel %vm324, %v1937, 0
    %1943 = vmatprep.subr.mxu0 0.0
    %1944 = vmatpush1.msra.mxu0 %v47
    %1945 = vmatprep.subr.mxu0 0.0
    %1946 = vmatpush1.msra.mxu0 0.0
    %1947 = vmatprep.subr.mxu0 0.0
    %1948 = vmatpush1.msra.mxu0 0.0
    %1949 = vmatprep.subr.mxu0 0.0
    %1950 = vmatpush1.msra.mxu0 0.0
    %1951 = vmatprep.subr.mxu0 0.0
    %1952 = vmatpush1.msra.mxu0 0.0
    %1953 = vmatprep.subr.mxu0 0.0
    %1954 = vmatpush1.msra.mxu0 0.0
    %1955 = vmatprep.subr.mxu0 0.0
    %1956 = vmatpush1.msra.mxu0 0.0
    %1957 = vmatprep.subr.mxu0 0.0
    %1958 = vmatpush1.msra.mxu0 0.0
    %1959 = vmatprep.subr.mxu0 0.0
    %1960 = vmatpush1.msra.mxu0 0.0
    %1961 = vmatprep.subr.mxu0 0.0
    %1962 = vmatpush1.msra.mxu0 0.0
    %1963 = vmatprep.subr.mxu0 0.0
    %1964 = vmatpush1.msra.mxu0 0.0
    %1965 = vmatprep.subr.mxu0 0.0
    %1966 = vmatpush1.msra.mxu0 0.0
    %1967 = vmatprep.subr.mxu0 0.0
    %1968 = vmatpush1.msra.mxu0 0.0
    %1969 = vmatprep.subr.mxu0 0.0
    %1970 = vmatpush1.msra.mxu0 0.0
    %1971 = vmatprep.subr.mxu0 0.0
    %1972 = vmatpush1.msra.mxu0 0.0
    %1973 = vmatprep.subr.mxu0 0.0
    %1974 = vmatpush1.msra.mxu0 0.0
    %1975 = vmatprep.subr.mxu0 0.0
    %1976 = vmatpush1.msra.mxu0 0.0
    %1977 = vmatprep.subr.mxu0 0.0
    %1978 = vmatpush1.msra.mxu0 0.0
    %1979 = vmatprep.subr.mxu0 0.0
    %1980 = vmatpush1.msra.mxu0 0.0
    %1981 = vmatprep.subr.mxu0 0.0
    %1982 = vmatpush1.msra.mxu0 0.0
    %1983 = vmatprep.subr.mxu0 0.0
    %1984 = vmatpush1.msra.mxu0 0.0
    %1985 = vmatprep.subr.mxu0 0.0
    %1986 = vmatpush1.msra.mxu0 0.0
    %1987 = vmatprep.subr.mxu0 0.0
    %1988 = vmatpush1.msra.mxu0 0.0
    %1989 = vmatprep.subr.mxu0 0.0
    %1990 = vmatpush1.msra.mxu0 0.0
    %1991 = vmatprep.subr.mxu0 0.0
    %1992 = vmatpush1.msra.mxu0 0.0
    %1993 = vmatprep.subr.mxu0 0.0
    %1994 = vmatpush1.msra.mxu0 0.0
    %1995 = vmatprep.subr.mxu0 0.0
    %1996 = vmatpush1.msra.mxu0 0.0
    %1997 = vmatprep.subr.mxu0 0.0
    %1998 = vmatpush1.msra.mxu0 0.0
    %1999 = vmatprep.subr.mxu0 0.0
    %2000 = vmatpush1.msra.mxu0 0.0
    %2001 = vmatprep.subr.mxu0 0.0
    %2002 = vmatpush1.msra.mxu0 0.0
    %2003 = vmatprep.subr.mxu0 0.0
    %2004 = vmatpush1.msra.mxu0 0.0
    %2005 = vmatprep.subr.mxu0 0.0
    %2006 = vmatpush1.msra.mxu0 0.0
    %2007 = vmatprep.mubr.f32.mxu0 0.0
    %2008 = vmatmul.mubr.f32.gmra.mrb[0].mxu0 %v1941
    %v2009 = vpop.f32.mrb[0].mxu0
    %v2010 = vadd.f32 0.0, %v2009
    %v2011 = vpop.f32.mrb[0].mxu0
    %2012 = vdwg.mxu0
    %v2013 = vadd.f32 %v322, %v2010
    %2014 = vrot.lane.b32.xlu0 %v1775, 120
    %v2015 = vpop.permute.xlu0 %2014
    %2016 = vrot.lane.b32.xlu0 %v1686, 120
    %v2017 = vpop.permute.xlu0 %2016
    %2018 = vrot.lane.b32.xlu0 %v1691, 120
    %v2019 = vpop.permute.xlu0 %2018
    %v2020 = vsel %vm324, %v2015, 0
    %v2022 = vsel %vm324, %v2017, 0
    %v2024 = vsel %vm324, %v2019, 0
    %2026 = vmatprep.subr.mxu0 0.0
    %2027 = vmatpush1.xpose.msra.mxu0 %v2022
    %2028 = vmatprep.subr.mxu0 0.0
    %2029 = vmatpush1.xpose.msra.mxu0 %v2024
    %2030 = vmatprep.subr.mxu0 0.0
    %2031 = vmatpush1.xpose.msra.mxu0 0.0
    %2032 = vmatprep.subr.mxu0 0.0
    %2033 = vmatpush1.xpose.msra.mxu0 0.0
    %2034 = vmatprep.subr.mxu0 0.0
    %2035 = vmatpush1.xpose.msra.mxu0 0.0
    %2036 = vmatprep.subr.mxu0 0.0
    %2037 = vmatpush1.xpose.msra.mxu0 0.0
    %2038 = vmatprep.subr.mxu0 0.0
    %2039 = vmatpush1.xpose.msra.mxu0 0.0
    %2040 = vmatprep.subr.mxu0 0.0
    %2041 = vmatpush1.xpose.msra.mxu0 0.0
    %2042 = vmatprep.subr.mxu0 0.0
    %2043 = vmatpush1.xpose.msra.mxu0 0.0
    %2044 = vmatprep.subr.mxu0 0.0
    %2045 = vmatpush1.xpose.msra.mxu0 0.0
    %2046 = vmatprep.subr.mxu0 0.0
    %2047 = vmatpush1.xpose.msra.mxu0 0.0
    %2048 = vmatprep.subr.mxu0 0.0
    %2049 = vmatpush1.xpose.msra.mxu0 0.0
    %2050 = vmatprep.subr.mxu0 0.0
    %2051 = vmatpush1.xpose.msra.mxu0 0.0
    %2052 = vmatprep.subr.mxu0 0.0
    %2053 = vmatpush1.xpose.msra.mxu0 0.0
    %2054 = vmatprep.subr.mxu0 0.0
    %2055 = vmatpush1.xpose.msra.mxu0 0.0
    %2056 = vmatprep.subr.mxu0 0.0
    %2057 = vmatpush1.xpose.msra.mxu0 0.0
    %2058 = vmatprep.subr.mxu0 0.0
    %2059 = vmatpush1.xpose.msra.mxu0 0.0
    %2060 = vmatprep.subr.mxu0 0.0
    %2061 = vmatpush1.xpose.msra.mxu0 0.0
    %2062 = vmatprep.subr.mxu0 0.0
    %2063 = vmatpush1.xpose.msra.mxu0 0.0
    %2064 = vmatprep.subr.mxu0 0.0
    %2065 = vmatpush1.xpose.msra.mxu0 0.0
    %2066 = vmatprep.subr.mxu0 0.0
    %2067 = vmatpush1.xpose.msra.mxu0 0.0
    %2068 = vmatprep.subr.mxu0 0.0
    %2069 = vmatpush1.xpose.msra.mxu0 0.0
    %2070 = vmatprep.subr.mxu0 0.0
    %2071 = vmatpush1.xpose.msra.mxu0 0.0
    %2072 = vmatprep.subr.mxu0 0.0
    %2073 = vmatpush1.xpose.msra.mxu0 0.0
    %2074 = vmatprep.subr.mxu0 0.0
    %2075 = vmatpush1.xpose.msra.mxu0 0.0
    %2076 = vmatprep.subr.mxu0 0.0
    %2077 = vmatpush1.xpose.msra.mxu0 0.0
    %2078 = vmatprep.subr.mxu0 0.0
    %2079 = vmatpush1.xpose.msra.mxu0 0.0
    %2080 = vmatprep.subr.mxu0 0.0
    %2081 = vmatpush1.xpose.msra.mxu0 0.0
    %2082 = vmatprep.subr.mxu0 0.0
    %2083 = vmatpush1.xpose.msra.mxu0 0.0
    %2084 = vmatprep.subr.mxu0 0.0
    %2085 = vmatpush1.xpose.msra.mxu0 0.0
    %2086 = vmatprep.subr.mxu0 0.0
    %2087 = vmatpush1.xpose.msra.mxu0 0.0
    %2088 = vmatprep.subr.mxu0 0.0
    %2089 = vmatpush1.xpose.msra.mxu0 0.0
    %2090 = vmatprep.mubr.f32.mxu0 0.0
    %2091 = vmatmul.mubr.f32.gmra.mrb[0].mxu0 %v2020
    %v2092 = vpop.f32.mrb[0].mxu0
    %v2093 = vadd.f32 0.0, %v2092
    %v2094 = vpop.f32.mrb[0].mxu0
    %2095 = vdwg.mxu0
    %v2096 = vsel %vm404, %v2093, -inf
    %2097 = vmax.xlane.f32.xlu0 %v2096
    %v2098 = vpop.xlane.xlu0 %2097
    %v2099 = vsub.f32 %v2093, %v2098
    %v2100 = vmul.f32 %v2099, 1.442695
    %v2101 = vpow.pop %v2100
    %v2102 = vsel %vm404, %v2101, 0.0
    %2103 = vadd.xlane.f32.xlu0 %v2102
    %v2104 = vpop.xlane.xlu0 %2103
    %v2105 = vrcp.pop %v2104
    %v2106 = vmul.f32 %v2101, %v2105
    %v2107 = vadd.f32 %v1866, %v2106
    %2110 = vrot.lane.b32.xlu0 %v1767, 120
    %v2111 = vpop.permute.xlu0 %2110
    %2112 = vrot.lane.b32.xlu0 %v1772, 120
    %v2113 = vpop.permute.xlu0 %2112
    %v2117 = vsel %vm404, %v2106, 0
    %2119 = vmatprep.subr.mxu0 0.0
    %2120 = vmatpush1.msra.mxu0 %v2111
    %2121 = vmatprep.subr.mxu0 0.0
    %2122 = vmatpush1.msra.mxu0 %v2113
    %2123 = vmatprep.subr.mxu0 0.0
    %2124 = vmatpush1.msra.mxu0 0.0
    %2125 = vmatprep.subr.mxu0 0.0
    %2126 = vmatpush1.msra.mxu0 0.0
    %2127 = vmatprep.subr.mxu0 0.0
    %2128 = vmatpush1.msra.mxu0 0.0
    %2129 = vmatprep.subr.mxu0 0.0
    %2130 = vmatpush1.msra.mxu0 0.0
    %2131 = vmatprep.subr.mxu0 0.0
    %2132 = vmatpush1.msra.mxu0 0.0
    %2133 = vmatprep.subr.mxu0 0.0
    %2134 = vmatpush1.msra.mxu0 0.0
    %2135 = vmatprep.subr.mxu0 0.0
    %2136 = vmatpush1.msra.mxu0 0.0
    %2137 = vmatprep.subr.mxu0 0.0
    %2138 = vmatpush1.msra.mxu0 0.0
    %2139 = vmatprep.subr.mxu0 0.0
    %2140 = vmatpush1.msra.mxu0 0.0
    %2141 = vmatprep.subr.mxu0 0.0
    %2142 = vmatpush1.msra.mxu0 0.0
    %2143 = vmatprep.subr.mxu0 0.0
    %2144 = vmatpush1.msra.mxu0 0.0
    %2145 = vmatprep.subr.mxu0 0.0
    %2146 = vmatpush1.msra.mxu0 0.0
    %2147 = vmatprep.subr.mxu0 0.0
    %2148 = vmatpush1.msra.mxu0 0.0
    %2149 = vmatprep.subr.mxu0 0.0
    %2150 = vmatpush1.msra.mxu0 0.0
    %2151 = vmatprep.subr.mxu0 0.0
    %2152 = vmatpush1.msra.mxu0 0.0
    %2153 = vmatprep.subr.mxu0 0.0
    %2154 = vmatpush1.msra.mxu0 0.0
    %2155 = vmatprep.subr.mxu0 0.0
    %2156 = vmatpush1.msra.mxu0 0.0
    %2157 = vmatprep.subr.mxu0 0.0
    %2158 = vmatpush1.msra.mxu0 0.0
    %2159 = vmatprep.subr.mxu0 0.0
    %2160 = vmatpush1.msra.mxu0 0.0
    %2161 = vmatprep.subr.mxu0 0.0
    %2162 = vmatpush1.msra.mxu0 0.0
    %2163 = vmatprep.subr.mxu0 0.0
    %2164 = vmatpush1.msra.mxu0 0.0
    %2165 = vmatprep.subr.mxu0 0.0
    %2166 = vmatpush1.msra.mxu0 0.0
    %2167 = vmatprep.subr.mxu0 0.0
    %2168 = vmatpush1.msra.mxu0 0.0
    %2169 = vmatprep.subr.mxu0 0.0
    %2170 = vmatpush1.msra.mxu0 0.0
    %2171 = vmatprep.subr.mxu0 0.0
    %2172 = vmatpush1.msra.mxu0 0.0
    %2173 = vmatprep.subr.mxu0 0.0
    %2174 = vmatpush1.msra.mxu0 0.0
    %2175 = vmatprep.subr.mxu0 0.0
    %2176 = vmatpush1.msra.mxu0 0.0
    %2177 = vmatprep.subr.mxu0 0.0
    %2178 = vmatpush1.msra.mxu0 0.0
    %2179 = vmatprep.subr.mxu0 0.0
    %2180 = vmatpush1.msra.mxu0 0.0
    %2181 = vmatprep.subr.mxu0 0.0
    %2182 = vmatpush1.msra.mxu0 0.0
    %2183 = vmatprep.mubr.f32.mxu0 0.0
    %2184 = vmatmul.mubr.f32.gmra.mrb[0].mxu0 %v2117
    %v2185 = vpop.f32.mrb[0].mxu0
    %v2186 = vadd.f32 0.0, %v2185
    %v2187 = vpop.f32.mrb[0].mxu0
    %2188 = vdwg.mxu0
    %v2190 = vsel %vm324, %v2186, 0
    %2192 = vmatprep.subr.mxu0 0.0
    %2193 = vmatpush1.msra.mxu0 %v48
    %2194 = vmatprep.subr.mxu0 0.0
    %2195 = vmatpush1.msra.mxu0 0.0
    %2196 = vmatprep.subr.mxu0 0.0
    %2197 = vmatpush1.msra.mxu0 0.0
    %2198 = vmatprep.subr.mxu0 0.0
    %2199 = vmatpush1.msra.mxu0 0.0
    %2200 = vmatprep.subr.mxu0 0.0
    %2201 = vmatpush1.msra.mxu0 0.0
    %2202 = vmatprep.subr.mxu0 0.0
    %2203 = vmatpush1.msra.mxu0 0.0
    %2204 = vmatprep.subr.mxu0 0.0
    %2205 = vmatpush1.msra.mxu0 0.0
    %2206 = vmatprep.subr.mxu0 0.0
    %2207 = vmatpush1.msra.mxu0 0.0
    %2208 = vmatprep.subr.mxu0 0.0
    %2209 = vmatpush1.msra.mxu0 0.0
    %2210 = vmatprep.subr.mxu0 0.0
    %2211 = vmatpush1.msra.mxu0 0.0
    %2212 = vmatprep.subr.mxu0 0.0
    %2213 = vmatpush1.msra.mxu0 0.0
    %2214 = vmatprep.subr.mxu0 0.0
    %2215 = vmatpush1.msra.mxu0 0.0
    %2216 = vmatprep.subr.mxu0 0.0
    %2217 = vmatpush1.msra.mxu0 0.0
    %2218 = vmatprep.subr.mxu0 0.0
    %2219 = vmatpush1.msra.mxu0 0.0
    %2220 = vmatprep.subr.mxu0 0.0
    %2221 = vmatpush1.msra.mxu0 0.0
    %2222 = vmatprep.subr.mxu0 0.0
    %2223 = vmatpush1.msra.mxu0 0.0
    %2224 = vmatprep.subr.mxu0 0.0
    %2225 = vmatpush1.msra.mxu0 0.0
    %2226 = vmatprep.subr.mxu0 0.0
    %2227 = vmatpush1.msra.mxu0 0.0
    %2228 = vmatprep.subr.mxu0 0.0
    %2229 = vmatpush1.msra.mxu0 0.0
    %2230 = vmatprep.subr.mxu0 0.0
    %2231 = vmatpush1.msra.mxu0 0.0
    %2232 = vmatprep.subr.mxu0 0.0
    %2233 = vmatpush1.msra.mxu0 0.0
    %2234 = vmatprep.subr.mxu0 0.0
    %2235 = vmatpush1.msra.mxu0 0.0
    %2236 = vmatprep.subr.mxu0 0.0
    %2237 = vmatpush1.msra.mxu0 0.0
    %2238 = vmatprep.subr.mxu0 0.0
    %2239 = vmatpush1.msra.mxu0 0.0
    %2240 = vmatprep.subr.mxu0 0.0
    %2241 = vmatpush1.msra.mxu0 0.0
    %2242 = vmatprep.subr.mxu0 0.0
    %2243 = vmatpush1.msra.mxu0 0.0
    %2244 = vmatprep.subr.mxu0 0.0
    %2245 = vmatpush1.msra.mxu0 0.0
    %2246 = vmatprep.subr.mxu0 0.0
    %2247 = vmatpush1.msra.mxu0 0.0
    %2248 = vmatprep.subr.mxu0 0.0
    %2249 = vmatpush1.msra.mxu0 0.0
    %2250 = vmatprep.subr.mxu0 0.0
    %2251 = vmatpush1.msra.mxu0 0.0
    %2252 = vmatprep.subr.mxu0 0.0
    %2253 = vmatpush1.msra.mxu0 0.0
    %2254 = vmatprep.subr.mxu0 0.0
    %2255 = vmatpush1.msra.mxu0 0.0
    %2256 = vmatprep.mubr.f32.mxu0 0.0
    %2257 = vmatmul.mubr.f32.gmra.mrb[0].mxu0 %v2190
    %v2258 = vpop.f32.mrb[0].mxu0
    %v2259 = vadd.f32 0.0, %v2258
    %v2260 = vpop.f32.mrb[0].mxu0
    %2261 = vdwg.mxu0
    %v2262 = vadd.f32 %v2013, %v2259
    %2263 = vrot.lane.b32.xlu0 %v1775, 112
    %v2264 = vpop.permute.xlu0 %2263
    %2265 = vrot.lane.b32.xlu0 %v1686, 112
    %v2266 = vpop.permute.xlu0 %2265
    %2267 = vrot.lane.b32.xlu0 %v1691, 112
    %v2268 = vpop.permute.xlu0 %2267
    %v2269 = vsel %vm324, %v2264, 0
    %v2271 = vsel %vm324, %v2266, 0
    %v2273 = vsel %vm324, %v2268, 0
    %2275 = vmatprep.subr.mxu0 0.0
    %2276 = vmatpush1.xpose.msra.mxu0 %v2271
    %2277 = vmatprep.subr.mxu0 0.0
    %2278 = vmatpush1.xpose.msra.mxu0 %v2273
    %2279 = vmatprep.subr.mxu0 0.0
    %2280 = vmatpush1.xpose.msra.mxu0 0.0
    %2281 = vmatprep.subr.mxu0 0.0
    %2282 = vmatpush1.xpose.msra.mxu0 0.0
    %2283 = vmatprep.subr.mxu0 0.0
    %2284 = vmatpush1.xpose.msra.mxu0 0.0
    %2285 = vmatprep.subr.mxu0 0.0
    %2286 = vmatpush1.xpose.msra.mxu0 0.0
    %2287 = vmatprep.subr.mxu0 0.0
    %2288 = vmatpush1.xpose.msra.mxu0 0.0
    %2289 = vmatprep.subr.mxu0 0.0
    %2290 = vmatpush1.xpose.msra.mxu0 0.0
    %2291 = vmatprep.subr.mxu0 0.0
    %2292 = vmatpush1.xpose.msra.mxu0 0.0
    %2293 = vmatprep.subr.mxu0 0.0
    %2294 = vmatpush1.xpose.msra.mxu0 0.0
    %2295 = vmatprep.subr.mxu0 0.0
    %2296 = vmatpush1.xpose.msra.mxu0 0.0
    %2297 = vmatprep.subr.mxu0 0.0
    %2298 = vmatpush1.xpose.msra.mxu0 0.0
    %2299 = vmatprep.subr.mxu0 0.0
    %2300 = vmatpush1.xpose.msra.mxu0 0.0
    %2301 = vmatprep.subr.mxu0 0.0
    %2302 = vmatpush1.xpose.msra.mxu0 0.0
    %2303 = vmatprep.subr.mxu0 0.0
    %2304 = vmatpush1.xpose.msra.mxu0 0.0
    %2305 = vmatprep.subr.mxu0 0.0
    %2306 = vmatpush1.xpose.msra.mxu0 0.0
    %2307 = vmatprep.subr.mxu0 0.0
    %2308 = vmatpush1.xpose.msra.mxu0 0.0
    %2309 = vmatprep.subr.mxu0 0.0
    %2310 = vmatpush1.xpose.msra.mxu0 0.0
    %2311 = vmatprep.subr.mxu0 0.0
    %2312 = vmatpush1.xpose.msra.mxu0 0.0
    %2313 = vmatprep.subr.mxu0 0.0
    %2314 = vmatpush1.xpose.msra.mxu0 0.0
    %2315 = vmatprep.subr.mxu0 0.0
    %2316 = vmatpush1.xpose.msra.mxu0 0.0
    %2317 = vmatprep.subr.mxu0 0.0
    %2318 = vmatpush1.xpose.msra.mxu0 0.0
    %2319 = vmatprep.subr.mxu0 0.0
    %2320 = vmatpush1.xpose.msra.mxu0 0.0
    %2321 = vmatprep.subr.mxu0 0.0
    %2322 = vmatpush1.xpose.msra.mxu0 0.0
    %2323 = vmatprep.subr.mxu0 0.0
    %2324 = vmatpush1.xpose.msra.mxu0 0.0
    %2325 = vmatprep.subr.mxu0 0.0
    %2326 = vmatpush1.xpose.msra.mxu0 0.0
    %2327 = vmatprep.subr.mxu0 0.0
    %2328 = vmatpush1.xpose.msra.mxu0 0.0
    %2329 = vmatprep.subr.mxu0 0.0
    %2330 = vmatpush1.xpose.msra.mxu0 0.0
    %2331 = vmatprep.subr.mxu0 0.0
    %2332 = vmatpush1.xpose.msra.mxu0 0.0
    %2333 = vmatprep.subr.mxu0 0.0
    %2334 = vmatpush1.xpose.msra.mxu0 0.0
    %2335 = vmatprep.subr.mxu0 0.0
    %2336 = vmatpush1.xpose.msra.mxu0 0.0
    %2337 = vmatprep.subr.mxu0 0.0
    %2338 = vmatpush1.xpose.msra.mxu0 0.0
    %2339 = vmatprep.mubr.f32.mxu0 0.0
    %2340 = vmatmul.mubr.f32.gmra.mrb[0].mxu0 %v2269
    %v2341 = vpop.f32.mrb[0].mxu0
    %v2342 = vadd.f32 0.0, %v2341
    %v2343 = vpop.f32.mrb[0].mxu0
    %2344 = vdwg.mxu0
    %v2345 = vsel %vm404, %v2342, -inf
    %2346 = vmax.xlane.f32.xlu0 %v2345
    %v2347 = vpop.xlane.xlu0 %2346
    %v2348 = vsub.f32 %v2342, %v2347
    %v2349 = vmul.f32 %v2348, 1.442695
    %v2350 = vpow.pop %v2349
    %v2351 = vsel %vm404, %v2350, 0.0
    %2352 = vadd.xlane.f32.xlu0 %v2351
    %v2353 = vpop.xlane.xlu0 %2352
    %v2354 = vrcp.pop %v2353
    %v2355 = vmul.f32 %v2350, %v2354
    %v2356 = vadd.f32 %v2107, %v2355
    %2357 = vrot.lane.b32.xlu0 %v1767, 112
    %v2358 = vpop.permute.xlu0 %2357
    %2359 = vrot.lane.b32.xlu0 %v1772, 112
    %v2360 = vpop.permute.xlu0 %2359
    %v2364 = vsel %vm404, %v2355, 0
    %2366 = vmatprep.subr.mxu0 0.0
    %2367 = vmatpush1.msra.mxu0 %v2358
    %2368 = vmatprep.subr.mxu0 0.0
    %2369 = vmatpush1.msra.mxu0 %v2360
    %2370 = vmatprep.subr.mxu0 0.0
    %2371 = vmatpush1.msra.mxu0 0.0
    %2372 = vmatprep.subr.mxu0 0.0
    %2373 = vmatpush1.msra.mxu0 0.0
    %2374 = vmatprep.subr.mxu0 0.0
    %2375 = vmatpush1.msra.mxu0 0.0
    %2376 = vmatprep.subr.mxu0 0.0
    %2377 = vmatpush1.msra.mxu0 0.0
    %2378 = vmatprep.subr.mxu0 0.0
    %2379 = vmatpush1.msra.mxu0 0.0
    %2380 = vmatprep.subr.mxu0 0.0
    %2381 = vmatpush1.msra.mxu0 0.0
    %2382 = vmatprep.subr.mxu0 0.0
    %2383 = vmatpush1.msra.mxu0 0.0
    %2384 = vmatprep.subr.mxu0 0.0
    %2385 = vmatpush1.msra.mxu0 0.0
    %2386 = vmatprep.subr.mxu0 0.0
    %2387 = vmatpush1.msra.mxu0 0.0
    %2388 = vmatprep.subr.mxu0 0.0
    %2389 = vmatpush1.msra.mxu0 0.0
    %2390 = vmatprep.subr.mxu0 0.0
    %2391 = vmatpush1.msra.mxu0 0.0
    %2392 = vmatprep.subr.mxu0 0.0
    %2393 = vmatpush1.msra.mxu0 0.0
    %2394 = vmatprep.subr.mxu0 0.0
    %2395 = vmatpush1.msra.mxu0 0.0
    %2396 = vmatprep.subr.mxu0 0.0
    %2397 = vmatpush1.msra.mxu0 0.0
    %2398 = vmatprep.subr.mxu0 0.0
    %2399 = vmatpush1.msra.mxu0 0.0
    %2400 = vmatprep.subr.mxu0 0.0
    %2401 = vmatpush1.msra.mxu0 0.0
    %2402 = vmatprep.subr.mxu0 0.0
    %2403 = vmatpush1.msra.mxu0 0.0
    %2404 = vmatprep.subr.mxu0 0.0
    %2405 = vmatpush1.msra.mxu0 0.0
    %2406 = vmatprep.subr.mxu0 0.0
    %2407 = vmatpush1.msra.mxu0 0.0
    %2408 = vmatprep.subr.mxu0 0.0
    %2409 = vmatpush1.msra.mxu0 0.0
    %2410 = vmatprep.subr.mxu0 0.0
    %2411 = vmatpush1.msra.mxu0 0.0
    %2412 = vmatprep.subr.mxu0 0.0
    %2413 = vmatpush1.msra.mxu0 0.0
    %2414 = vmatprep.subr.mxu0 0.0
    %2415 = vmatpush1.msra.mxu0 0.0
    %2416 = vmatprep.subr.mxu0 0.0
    %2417 = vmatpush1.msra.mxu0 0.0
    %2418 = vmatprep.subr.mxu0 0.0
    %2419 = vmatpush1.msra.mxu0 0.0
    %2420 = vmatprep.subr.mxu0 0.0
    %2421 = vmatpush1.msra.mxu0 0.0
    %2422 = vmatprep.subr.mxu0 0.0
    %2423 = vmatpush1.msra.mxu0 0.0
    %2424 = vmatprep.subr.mxu0 0.0
    %2425 = vmatpush1.msra.mxu0 0.0
    %2426 = vmatprep.subr.mxu0 0.0
    %2427 = vmatpush1.msra.mxu0 0.0
    %2428 = vmatprep.subr.mxu0 0.0
    %2429 = vmatpush1.msra.mxu0 0.0
    %2430 = vmatprep.mubr.f32.mxu0 0.0
    %2431 = vmatmul.mubr.f32.gmra.mrb[0].mxu0 %v2364
    %v2432 = vpop.f32.mrb[0].mxu0
    %v2433 = vadd.f32 0.0, %v2432
    %v2434 = vpop.f32.mrb[0].mxu0
    %2435 = vdwg.mxu0
    %v2437 = vsel %vm324, %v2433, 0
    %2439 = vmatprep.subr.mxu0 0.0
    %2440 = vmatpush1.msra.mxu0 %v49
    %2441 = vmatprep.subr.mxu0 0.0
    %2442 = vmatpush1.msra.mxu0 0.0
    %2443 = vmatprep.subr.mxu0 0.0
    %2444 = vmatpush1.msra.mxu0 0.0
    %2445 = vmatprep.subr.mxu0 0.0
    %2446 = vmatpush1.msra.mxu0 0.0
    %2447 = vmatprep.subr.mxu0 0.0
    %2448 = vmatpush1.msra.mxu0 0.0
    %2449 = vmatprep.subr.mxu0 0.0
    %2450 = vmatpush1.msra.mxu0 0.0
    %2451 = vmatprep.subr.mxu0 0.0
    %2452 = vmatpush1.msra.mxu0 0.0
    %2453 = vmatprep.subr.mxu0 0.0
    %2454 = vmatpush1.msra.mxu0 0.0
    %2455 = vmatprep.subr.mxu0 0.0
    %2456 = vmatpush1.msra.mxu0 0.0
    %2457 = vmatprep.subr.mxu0 0.0
    %2458 = vmatpush1.msra.mxu0 0.0
    %2459 = vmatprep.subr.mxu0 0.0
    %2460 = vmatpush1.msra.mxu0 0.0
    %2461 = vmatprep.subr.mxu0 0.0
    %2462 = vmatpush1.msra.mxu0 0.0
    %2463 = vmatprep.subr.mxu0 0.0
    %2464 = vmatpush1.msra.mxu0 0.0
    %2465 = vmatprep.subr.mxu0 0.0
    %2466 = vmatpush1.msra.mxu0 0.0
    %2467 = vmatprep.subr.mxu0 0.0
    %2468 = vmatpush1.msra.mxu0 0.0
    %2469 = vmatprep.subr.mxu0 0.0
    %2470 = vmatpush1.msra.mxu0 0.0
    %2471 = vmatprep.subr.mxu0 0.0
    %2472 = vmatpush1.msra.mxu0 0.0
    %2473 = vmatprep.subr.mxu0 0.0
    %2474 = vmatpush1.msra.mxu0 0.0
    %2475 = vmatprep.subr.mxu0 0.0
    %2476 = vmatpush1.msra.mxu0 0.0
    %2477 = vmatprep.subr.mxu0 0.0
    %2478 = vmatpush1.msra.mxu0 0.0
    %2479 = vmatprep.subr.mxu0 0.0
    %2480 = vmatpush1.msra.mxu0 0.0
    %2481 = vmatprep.subr.mxu0 0.0
    %2482 = vmatpush1.msra.mxu0 0.0
    %2483 = vmatprep.subr.mxu0 0.0
    %2484 = vmatpush1.msra.mxu0 0.0
    %2485 = vmatprep.subr.mxu0 0.0
    %2486 = vmatpush1.msra.mxu0 0.0
    %2487 = vmatprep.subr.mxu0 0.0
    %2488 = vmatpush1.msra.mxu0 0.0
    %2489 = vmatprep.subr.mxu0 0.0
    %2490 = vmatpush1.msra.mxu0 0.0
    %2491 = vmatprep.subr.mxu0 0.0
    %2492 = vmatpush1.msra.mxu0 0.0
    %2493 = vmatprep.subr.mxu0 0.0
    %2494 = vmatpush1.msra.mxu0 0.0
    %2495 = vmatprep.subr.mxu0 0.0
    %2496 = vmatpush1.msra.mxu0 0.0
    %2497 = vmatprep.subr.mxu0 0.0
    %2498 = vmatpush1.msra.mxu0 0.0
    %2499 = vmatprep.subr.mxu0 0.0
    %2500 = vmatpush1.msra.mxu0 0.0
    %2501 = vmatprep.subr.mxu0 0.0
    %2502 = vmatpush1.msra.mxu0 0.0
    %2503 = vmatprep.mubr.f32.mxu0 0.0
    %2504 = vmatmul.mubr.f32.gmra.mrb[0].mxu0 %v2437
    %v2505 = vpop.f32.mrb[0].mxu0
    %v2506 = vadd.f32 0.0, %v2505
    %v2507 = vpop.f32.mrb[0].mxu0
    %2508 = vdwg.mxu0
    %v2509 = vadd.f32 %v2262, %v2506
    %2510 = vrot.lane.b32.xlu0 %v1775, 104
    %v2511 = vpop.permute.xlu0 %2510
    %2512 = vrot.lane.b32.xlu0 %v1686, 104
    %v2513 = vpop.permute.xlu0 %2512
    %2514 = vrot.lane.b32.xlu0 %v1691, 104
    %v2515 = vpop.permute.xlu0 %2514
    %v2516 = vsel %vm324, %v2511, 0
    %v2518 = vsel %vm324, %v2513, 0
    %v2520 = vsel %vm324, %v2515, 0
    %2522 = vmatprep.subr.mxu0 0.0
    %2523 = vmatpush1.xpose.msra.mxu0 %v2518
    %2524 = vmatprep.subr.mxu0 0.0
    %2525 = vmatpush1.xpose.msra.mxu0 %v2520
    %2526 = vmatprep.subr.mxu0 0.0
    %2527 = vmatpush1.xpose.msra.mxu0 0.0
    %2528 = vmatprep.subr.mxu0 0.0
    %2529 = vmatpush1.xpose.msra.mxu0 0.0
    %2530 = vmatprep.subr.mxu0 0.0
    %2531 = vmatpush1.xpose.msra.mxu0 0.0
    %2532 = vmatprep.subr.mxu0 0.0
    %2533 = vmatpush1.xpose.msra.mxu0 0.0
    %2534 = vmatprep.subr.mxu0 0.0
    %2535 = vmatpush1.xpose.msra.mxu0 0.0
    %2536 = vmatprep.subr.mxu0 0.0
    %2537 = vmatpush1.xpose.msra.mxu0 0.0
    %2538 = vmatprep.subr.mxu0 0.0
    %2539 = vmatpush1.xpose.msra.mxu0 0.0
    %2540 = vmatprep.subr.mxu0 0.0
    %2541 = vmatpush1.xpose.msra.mxu0 0.0
    %2542 = vmatprep.subr.mxu0 0.0
    %2543 = vmatpush1.xpose.msra.mxu0 0.0
    %2544 = vmatprep.subr.mxu0 0.0
    %2545 = vmatpush1.xpose.msra.mxu0 0.0
    %2546 = vmatprep.subr.mxu0 0.0
    %2547 = vmatpush1.xpose.msra.mxu0 0.0
    %2548 = vmatprep.subr.mxu0 0.0
    %2549 = vmatpush1.xpose.msra.mxu0 0.0
    %2550 = vmatprep.subr.mxu0 0.0
    %2551 = vmatpush1.xpose.msra.mxu0 0.0
    %2552 = vmatprep.subr.mxu0 0.0
    %2553 = vmatpush1.xpose.msra.mxu0 0.0
    %2554 = vmatprep.subr.mxu0 0.0
    %2555 = vmatpush1.xpose.msra.mxu0 0.0
    %2556 = vmatprep.subr.mxu0 0.0
    %2557 = vmatpush1.xpose.msra.mxu0 0.0
    %2558 = vmatprep.subr.mxu0 0.0
    %2559 = vmatpush1.xpose.msra.mxu0 0.0
    %2560 = vmatprep.subr.mxu0 0.0
    %2561 = vmatpush1.xpose.msra.mxu0 0.0
    %2562 = vmatprep.subr.mxu0 0.0
    %2563 = vmatpush1.xpose.msra.mxu0 0.0
    %2564 = vmatprep.subr.mxu0 0.0
    %2565 = vmatpush1.xpose.msra.mxu0 0.0
    %2566 = vmatprep.subr.mxu0 0.0
    %2567 = vmatpush1.xpose.msra.mxu0 0.0
    %2568 = vmatprep.subr.mxu0 0.0
    %2569 = vmatpush1.xpose.msra.mxu0 0.0
    %2570 = vmatprep.subr.mxu0 0.0
    %2571 = vmatpush1.xpose.msra.mxu0 0.0
    %2572 = vmatprep.subr.mxu0 0.0
    %2573 = vmatpush1.xpose.msra.mxu0 0.0
    %2574 = vmatprep.subr.mxu0 0.0
    %2575 = vmatpush1.xpose.msra.mxu0 0.0
    %2576 = vmatprep.subr.mxu0 0.0
    %2577 = vmatpush1.xpose.msra.mxu0 0.0
    %2578 = vmatprep.subr.mxu0 0.0
    %2579 = vmatpush1.xpose.msra.mxu0 0.0
    %2580 = vmatprep.subr.mxu0 0.0
    %2581 = vmatpush1.xpose.msra.mxu0 0.0
    %2582 = vmatprep.subr.mxu0 0.0
    %2583 = vmatpush1.xpose.msra.mxu0 0.0
    %2584 = vmatprep.subr.mxu0 0.0
    %2585 = vmatpush1.xpose.msra.mxu0 0.0
    %2586 = vmatprep.mubr.f32.mxu0 0.0
    %2587 = vmatmul.mubr.f32.gmra.mrb[0].mxu0 %v2516
    %v2588 = vpop.f32.mrb[0].mxu0
    %v2589 = vadd.f32 0.0, %v2588
    %v2590 = vpop.f32.mrb[0].mxu0
    %2591 = vdwg.mxu0
    %v2592 = vsel %vm404, %v2589, -inf
    %2593 = vmax.xlane.f32.xlu0 %v2592
    %v2594 = vpop.xlane.xlu0 %2593
    %v2595 = vsub.f32 %v2589, %v2594
    %v2596 = vmul.f32 %v2595, 1.442695
    %v2597 = vpow.pop %v2596
    %v2598 = vsel %vm404, %v2597, 0.0
    %2599 = vadd.xlane.f32.xlu0 %v2598
    %v2600 = vpop.xlane.xlu0 %2599
    %v2601 = vrcp.pop %v2600
    %v2602 = vmul.f32 %v2597, %v2601
    %v2603 = vadd.f32 %v2356, %v2602
    %2604 = vrot.lane.b32.xlu0 %v1767, 104
    %v2605 = vpop.permute.xlu0 %2604
    %2606 = vrot.lane.b32.xlu0 %v1772, 104
    %v2607 = vpop.permute.xlu0 %2606
    %v2611 = vsel %vm404, %v2602, 0
    %2613 = vmatprep.subr.mxu0 0.0
    %2614 = vmatpush1.msra.mxu0 %v2605
    %2615 = vmatprep.subr.mxu0 0.0
    %2616 = vmatpush1.msra.mxu0 %v2607
    %2617 = vmatprep.subr.mxu0 0.0
    %2618 = vmatpush1.msra.mxu0 0.0
    %2619 = vmatprep.subr.mxu0 0.0
    %2620 = vmatpush1.msra.mxu0 0.0
    %2621 = vmatprep.subr.mxu0 0.0
    %2622 = vmatpush1.msra.mxu0 0.0
    %2623 = vmatprep.subr.mxu0 0.0
    %2624 = vmatpush1.msra.mxu0 0.0
    %2625 = vmatprep.subr.mxu0 0.0
    %2626 = vmatpush1.msra.mxu0 0.0
    %2627 = vmatprep.subr.mxu0 0.0
    %2628 = vmatpush1.msra.mxu0 0.0
    %2629 = vmatprep.subr.mxu0 0.0
    %2630 = vmatpush1.msra.mxu0 0.0
    %2631 = vmatprep.subr.mxu0 0.0
    %2632 = vmatpush1.msra.mxu0 0.0
    %2633 = vmatprep.subr.mxu0 0.0
    %2634 = vmatpush1.msra.mxu0 0.0
    %2635 = vmatprep.subr.mxu0 0.0
    %2636 = vmatpush1.msra.mxu0 0.0
    %2637 = vmatprep.subr.mxu0 0.0
    %2638 = vmatpush1.msra.mxu0 0.0
    %2639 = vmatprep.subr.mxu0 0.0
    %2640 = vmatpush1.msra.mxu0 0.0
    %2641 = vmatprep.subr.mxu0 0.0
    %2642 = vmatpush1.msra.mxu0 0.0
    %2643 = vmatprep.subr.mxu0 0.0
    %2644 = vmatpush1.msra.mxu0 0.0
    %2645 = vmatprep.subr.mxu0 0.0
    %2646 = vmatpush1.msra.mxu0 0.0
    %2647 = vmatprep.subr.mxu0 0.0
    %2648 = vmatpush1.msra.mxu0 0.0
    %2649 = vmatprep.subr.mxu0 0.0
    %2650 = vmatpush1.msra.mxu0 0.0
    %2651 = vmatprep.subr.mxu0 0.0
    %2652 = vmatpush1.msra.mxu0 0.0
    %2653 = vmatprep.subr.mxu0 0.0
    %2654 = vmatpush1.msra.mxu0 0.0
    %2655 = vmatprep.subr.mxu0 0.0
    %2656 = vmatpush1.msra.mxu0 0.0
    %2657 = vmatprep.subr.mxu0 0.0
    %2658 = vmatpush1.msra.mxu0 0.0
    %2659 = vmatprep.subr.mxu0 0.0
    %2660 = vmatpush1.msra.mxu0 0.0
    %2661 = vmatprep.subr.mxu0 0.0
    %2662 = vmatpush1.msra.mxu0 0.0
    %2663 = vmatprep.subr.mxu0 0.0
    %2664 = vmatpush1.msra.mxu0 0.0
    %2665 = vmatprep.subr.mxu0 0.0
    %2666 = vmatpush1.msra.mxu0 0.0
    %2667 = vmatprep.subr.mxu0 0.0
    %2668 = vmatpush1.msra.mxu0 0.0
    %2669 = vmatprep.subr.mxu0 0.0
    %2670 = vmatpush1.msra.mxu0 0.0
    %2671 = vmatprep.subr.mxu0 0.0
    %2672 = vmatpush1.msra.mxu0 0.0
    %2673 = vmatprep.subr.mxu0 0.0
    %2674 = vmatpush1.msra.mxu0 0.0
    %2675 = vmatprep.subr.mxu0 0.0
    %2676 = vmatpush1.msra.mxu0 0.0
    %2677 = vmatprep.mubr.f32.mxu0 0.0
    %2678 = vmatmul.mubr.f32.gmra.mrb[0].mxu0 %v2611
    %v2679 = vpop.f32.mrb[0].mxu0
    %v2680 = vadd.f32 0.0, %v2679
    %v2681 = vpop.f32.mrb[0].mxu0
    %2682 = vdwg.mxu0
    %v2684 = vsel %vm324, %v2680, 0
    %2686 = vmatprep.subr.mxu0 0.0
    %2687 = vmatpush1.msra.mxu0 %v50
    %2688 = vmatprep.subr.mxu0 0.0
    %2689 = vmatpush1.msra.mxu0 0.0
    %2690 = vmatprep.subr.mxu0 0.0
    %2691 = vmatpush1.msra.mxu0 0.0
    %2692 = vmatprep.subr.mxu0 0.0
    %2693 = vmatpush1.msra.mxu0 0.0
    %2694 = vmatprep.subr.mxu0 0.0
    %2695 = vmatpush1.msra.mxu0 0.0
    %2696 = vmatprep.subr.mxu0 0.0
    %2697 = vmatpush1.msra.mxu0 0.0
    %2698 = vmatprep.subr.mxu0 0.0
    %2699 = vmatpush1.msra.mxu0 0.0
    %2700 = vmatprep.subr.mxu0 0.0
    %2701 = vmatpush1.msra.mxu0 0.0
    %2702 = vmatprep.subr.mxu0 0.0
    %2703 = vmatpush1.msra.mxu0 0.0
    %2704 = vmatprep.subr.mxu0 0.0
    %2705 = vmatpush1.msra.mxu0 0.0
    %2706 = vmatprep.subr.mxu0 0.0
    %2707 = vmatpush1.msra.mxu0 0.0
    %2708 = vmatprep.subr.mxu0 0.0
    %2709 = vmatpush1.msra.mxu0 0.0
    %2710 = vmatprep.subr.mxu0 0.0
    %2711 = vmatpush1.msra.mxu0 0.0
    %2712 = vmatprep.subr.mxu0 0.0
    %2713 = vmatpush1.msra.mxu0 0.0
    %2714 = vmatprep.subr.mxu0 0.0
    %2715 = vmatpush1.msra.mxu0 0.0
    %2716 = vmatprep.subr.mxu0 0.0
    %2717 = vmatpush1.msra.mxu0 0.0
    %2718 = vmatprep.subr.mxu0 0.0
    %2719 = vmatpush1.msra.mxu0 0.0
    %2720 = vmatprep.subr.mxu0 0.0
    %2721 = vmatpush1.msra.mxu0 0.0
    %2722 = vmatprep.subr.mxu0 0.0
    %2723 = vmatpush1.msra.mxu0 0.0
    %2724 = vmatprep.subr.mxu0 0.0
    %2725 = vmatpush1.msra.mxu0 0.0
    %2726 = vmatprep.subr.mxu0 0.0
    %2727 = vmatpush1.msra.mxu0 0.0
    %2728 = vmatprep.subr.mxu0 0.0
    %2729 = vmatpush1.msra.mxu0 0.0
    %2730 = vmatprep.subr.mxu0 0.0
    %2731 = vmatpush1.msra.mxu0 0.0
    %2732 = vmatprep.subr.mxu0 0.0
    %2733 = vmatpush1.msra.mxu0 0.0
    %2734 = vmatprep.subr.mxu0 0.0
    %2735 = vmatpush1.msra.mxu0 0.0
    %2736 = vmatprep.subr.mxu0 0.0
    %2737 = vmatpush1.msra.mxu0 0.0
    %2738 = vmatprep.subr.mxu0 0.0
    %2739 = vmatpush1.msra.mxu0 0.0
    %2740 = vmatprep.subr.mxu0 0.0
    %2741 = vmatpush1.msra.mxu0 0.0
    %2742 = vmatprep.subr.mxu0 0.0
    %2743 = vmatpush1.msra.mxu0 0.0
    %2744 = vmatprep.subr.mxu0 0.0
    %2745 = vmatpush1.msra.mxu0 0.0
    %2746 = vmatprep.subr.mxu0 0.0
    %2747 = vmatpush1.msra.mxu0 0.0
    %2748 = vmatprep.subr.mxu0 0.0
    %2749 = vmatpush1.msra.mxu0 0.0
    %2750 = vmatprep.mubr.f32.mxu0 0.0
    %2751 = vmatmul.mubr.f32.gmra.mrb[0].mxu0 %v2684
    %v2752 = vpop.f32.mrb[0].mxu0
    %v2753 = vadd.f32 0.0, %v2752
    %v2754 = vpop.f32.mrb[0].mxu0
    %2755 = vdwg.mxu0
    %v2756 = vadd.f32 %v2509, %v2753
    %v2757 = vmul.f32 %v2603, 0.25
    %s2758 = scalar_lea.vmem [#allocation2], 8
    %2759 = vst.msk [vmem:[%s2758] sm:$0xff] %vm404, %v2757
    %v2760 = vadd.f32 %v1528, %v2756
    %v2761 = vsel %vm74, %v2760, 0.0
    %2762 = vadd.xlane.f32.xlu0 %v2761
    %v2763 = vpop.xlane.xlu0 %2762
    %v2764 = vmul.f32 %v2763, %v1313
    %v2765 = vsub.f32 %v2760, %v2764
    %v2766 = vmul.f32 %v2765, %v2765
    %v2767 = vsel %vm74, %v2766, 0.0
    %2768 = vadd.xlane.f32.xlu0 %v2767
    %v2769 = vpop.xlane.xlu0 %2768
    %v2770 = vmul.f32 %v2769, %v1313
    %v2771 = vadd.f32 %v2770, 1e-05
    %v2772 = vrsqrt.pop %v2771
    %v2773 = vmul.f32 %v2765, %v2772
    %v2774 = vmul.f32 %v2773, %v1327
    %v2775 = vadd.f32 %v2774, %v1332
    %v2776 = vld [vmem:[%s5] sm:$0xff]
    %v2777 = vld [vmem:[%s5 + $0x8] sm:$0xff]
    %v2778 = vld [vmem:[%s5 + $0x10] sm:$0xff]
    %v2779 = vld [vmem:[%s5 + $0x18] sm:$0xff]
    %v2781 = vsel %vm74, %v2775, 0
    %2783 = vmatprep.subr.mxu0 0.0
    %2784 = vmatpush1.msra.mxu0 %v2776
    %2785 = vmatprep.subr.mxu0 0.0
    %2786 = vmatpush1.msra.mxu0 %v2777
    %2787 = vmatprep.subr.mxu0 0.0
    %2788 = vmatpush1.msra.mxu0 %v2778
    %2789 = vmatprep.subr.mxu0 0.0
    %2790 = vmatpush1.msra.mxu0 %v2779
    %2791 = vmatprep.subr.mxu0 0.0
    %2792 = vmatpush1.msra.mxu0 0.0
    %2793 = vmatprep.subr.mxu0 0.0
    %2794 = vmatpush1.msra.mxu0 0.0
    %2795 = vmatprep.subr.mxu0 0.0
    %2796 = vmatpush1.msra.mxu0 0.0
    %2797 = vmatprep.subr.mxu0 0.0
    %2798 = vmatpush1.msra.mxu0 0.0
    %2799 = vmatprep.subr.mxu0 0.0
    %2800 = vmatpush1.msra.mxu0 0.0
    %2801 = vmatprep.subr.mxu0 0.0
    %2802 = vmatpush1.msra.mxu0 0.0
    %2803 = vmatprep.subr.mxu0 0.0
    %2804 = vmatpush1.msra.mxu0 0.0
    %2805 = vmatprep.subr.mxu0 0.0
    %2806 = vmatpush1.msra.mxu0 0.0
    %2807 = vmatprep.subr.mxu0 0.0
    %2808 = vmatpush1.msra.mxu0 0.0
    %2809 = vmatprep.subr.mxu0 0.0
    %2810 = vmatpush1.msra.mxu0 0.0
    %2811 = vmatprep.subr.mxu0 0.0
    %2812 = vmatpush1.msra.mxu0 0.0
    %2813 = vmatprep.subr.mxu0 0.0
    %2814 = vmatpush1.msra.mxu0 0.0
    %2815 = vmatprep.subr.mxu0 0.0
    %2816 = vmatpush1.msra.mxu0 0.0
    %2817 = vmatprep.subr.mxu0 0.0
    %2818 = vmatpush1.msra.mxu0 0.0
    %2819 = vmatprep.subr.mxu0 0.0
    %2820 = vmatpush1.msra.mxu0 0.0
    %2821 = vmatprep.subr.mxu0 0.0
    %2822 = vmatpush1.msra.mxu0 0.0
    %2823 = vmatprep.subr.mxu0 0.0
    %2824 = vmatpush1.msra.mxu0 0.0
    %2825 = vmatprep.subr.mxu0 0.0
    %2826 = vmatpush1.msra.mxu0 0.0
    %2827 = vmatprep.subr.mxu0 0.0
    %2828 = vmatpush1.msra.mxu0 0.0
    %2829 = vmatprep.subr.mxu0 0.0
    %2830 = vmatpush1.msra.mxu0 0.0
    %2831 = vmatprep.subr.mxu0 0.0
    %2832 = vmatpush1.msra.mxu0 0.0
    %2833 = vmatprep.subr.mxu0 0.0
    %2834 = vmatpush1.msra.mxu0 0.0
    %2835 = vmatprep.subr.mxu0 0.0
    %2836 = vmatpush1.msra.mxu0 0.0
    %2837 = vmatprep.subr.mxu0 0.0
    %2838 = vmatpush1.msra.mxu0 0.0
    %2839 = vmatprep.subr.mxu0 0.0
    %2840 = vmatpush1.msra.mxu0 0.0
    %2841 = vmatprep.subr.mxu0 0.0
    %2842 = vmatpush1.msra.mxu0 0.0
    %2843 = vmatprep.subr.mxu0 0.0
    %2844 = vmatpush1.msra.mxu0 0.0
    %2845 = vmatprep.subr.mxu0 0.0
    %2846 = vmatpush1.msra.mxu0 0.0
    %2847 = vmatprep.mubr.f32.mxu0 0.0
    %2848 = vmatmul.mubr.f32.gmra.mrb[0].mxu0 %v2781
    %v2849 = vpop.f32.mrb[0].mxu0
    %v2850 = vadd.f32 %v1341, %v2849
    %v2851 = vpop.f32.mrb[0].mxu0
    %2852 = vdwg.mxu0
    %v2853 = vmax.f32 %v2850, 0.0
    %v2854 = vld [vmem:[%s6] sm:$0xff]
    %v2855 = vld [vmem:[%s6 + $0x8] sm:$0xff]
    %v2856 = vld [vmem:[%s6 + $0x10] sm:$0xff]
    %v2857 = vld [vmem:[%s6 + $0x18] sm:$0xff]
    %v2858 = vld [vmem:[%s6 + $0x20] sm:$0xff]
    %v2859 = vld [vmem:[%s6 + $0x28] sm:$0xff]
    %v2860 = vld [vmem:[%s6 + $0x30] sm:$0xff]
    %v2861 = vld [vmem:[%s6 + $0x38] sm:$0xff]
    %v2863 = vsel %vm1428, %v2853, 0
    %2865 = vmatprep.subr.mxu0 0.0
    %2866 = vmatpush1.msra.mxu0 %v2854
    %2867 = vmatprep.subr.mxu0 0.0
    %2868 = vmatpush1.msra.mxu0 %v2855
    %2869 = vmatprep.subr.mxu0 0.0
    %2870 = vmatpush1.msra.mxu0 %v2856
    %2871 = vmatprep.subr.mxu0 0.0
    %2872 = vmatpush1.msra.mxu0 %v2857
    %2873 = vmatprep.subr.mxu0 0.0
    %2874 = vmatpush1.msra.mxu0 %v2858
    %2875 = vmatprep.subr.mxu0 0.0
    %2876 = vmatpush1.msra.mxu0 %v2859
    %2877 = vmatprep.subr.mxu0 0.0
    %2878 = vmatpush1.msra.mxu0 %v2860
    %2879 = vmatprep.subr.mxu0 0.0
    %2880 = vmatpush1.msra.mxu0 %v2861
    %2881 = vmatprep.subr.mxu0 0.0
    %2882 = vmatpush1.msra.mxu0 0.0
    %2883 = vmatprep.subr.mxu0 0.0
    %2884 = vmatpush1.msra.mxu0 0.0
    %2885 = vmatprep.subr.mxu0 0.0
    %2886 = vmatpush1.msra.mxu0 0.0
    %2887 = vmatprep.subr.mxu0 0.0
    %2888 = vmatpush1.msra.mxu0 0.0
    %2889 = vmatprep.subr.mxu0 0.0
    %2890 = vmatpush1.msra.mxu0 0.0
    %2891 = vmatprep.subr.mxu0 0.0
    %2892 = vmatpush1.msra.mxu0 0.0
    %2893 = vmatprep.subr.mxu0 0.0
    %2894 = vmatpush1.msra.mxu0 0.0
    %2895 = vmatprep.subr.mxu0 0.0
    %2896 = vmatpush1.msra.mxu0 0.0
    %2897 = vmatprep.subr.mxu0 0.0
    %2898 = vmatpush1.msra.mxu0 0.0
    %2899 = vmatprep.subr.mxu0 0.0
    %2900 = vmatpush1.msra.mxu0 0.0
    %2901 = vmatprep.subr.mxu0 0.0
    %2902 = vmatpush1.msra.mxu0 0.0
    %2903 = vmatprep.subr.mxu0 0.0
    %2904 = vmatpush1.msra.mxu0 0.0
    %2905 = vmatprep.subr.mxu0 0.0
    %2906 = vmatpush1.msra.mxu0 0.0
    %2907 = vmatprep.subr.mxu0 0.0
    %2908 = vmatpush1.msra.mxu0 0.0
    %2909 = vmatprep.subr.mxu0 0.0
    %2910 = vmatpush1.msra.mxu0 0.0
    %2911 = vmatprep.subr.mxu0 0.0
    %2912 = vmatpush1.msra.mxu0 0.0
    %2913 = vmatprep.subr.mxu0 0.0
    %2914 = vmatpush1.msra.mxu0 0.0
    %2915 = vmatprep.subr.mxu0 0.0
    %2916 = vmatpush1.msra.mxu0 0.0
    %2917 = vmatprep.subr.mxu0 0.0
    %2918 = vmatpush1.msra.mxu0 0.0
    %2919 = vmatprep.subr.mxu0 0.0
    %2920 = vmatpush1.msra.mxu0 0.0
    %2921 = vmatprep.subr.mxu0 0.0
    %2922 = vmatpush1.msra.mxu0 0.0
    %2923 = vmatprep.subr.mxu0 0.0
    %2924 = vmatpush1.msra.mxu0 0.0
    %2925 = vmatprep.subr.mxu0 0.0
    %2926 = vmatpush1.msra.mxu0 0.0
    %2927 = vmatprep.subr.mxu0 0.0
    %2928 = vmatpush1.msra.mxu0 0.0
    %2929 = vmatprep.mubr.f32.mxu0 0.0
    %2930 = vmatmul.mubr.f32.gmra.mrb[0].mxu0 %v2863
    %v2931 = vpop.f32.mrb[0].mxu0
    %v2932 = vadd.f32 %v1427, %v2931
    %v2933 = vpop.f32.mrb[0].mxu0
    %2934 = vdwg.mxu0
    %v2935 = vadd.f32 %v2775, %v2932
    %v2936 = vsel %vm74, %v2935, 0.0
    %2937 = vadd.xlane.f32.xlu0 %v2936
    %v2938 = vpop.xlane.xlu0 %2937
    %v2939 = vmul.f32 %v2938, %v1313
    %v2940 = vsub.f32 %v2935, %v2939
    %v2941 = vmul.f32 %v2940, %v2940
    %v2942 = vsel %vm74, %v2941, 0.0
    %2943 = vadd.xlane.f32.xlu0 %v2942
    %v2944 = vpop.xlane.xlu0 %2943
    %v2945 = vmul.f32 %v2944, %v1313
    %v2946 = vadd.f32 %v2945, 1e-05
    %v2947 = vrsqrt.pop %v2946
    %v2948 = vmul.f32 %v2940, %v2947
    %v2949 = vmul.f32 %v2948, %v1519
    %v2950 = vadd.f32 %v2949, %v1524
    %s2951 = scalar_lea.vmem %s8, 8
    %2952 = vst.msk [vmem:[%s2951] sm:$0xff] %vm74, %v2950
    // Predicated region
    $region34: #{decoder_forward.1} parent=1 // pred_check
      _
    $region35: #{decoder_forward.1} parent=1 // pred_check_branch
      %2954 = sbr.rel (0) target = $region37
    $region36: #{decoder_forward.1} parent=1 // pred_region
      _
    $region37: #{decoder_forward.1} parent=1 // pred_fallthru
      _
    // Predicated region
    $region38: #{decoder_forward.1} parent=1 // pred_check
      _
    $region39: #{decoder_forward.1} parent=1 // pred_check_branch
      %2956 = sbr.rel (0) target = $region41
    $region40: #{decoder_forward.1} parent=1 // pred_region
      %s2958 = ssub.s32 256, 256
      %2959 = vsyncadd [#allocation3], %s2958
      %s2960 = sshll.u32 [#allocation2], 4
      %s2961 = int_to_ptr.vmem [resolvable:$true] %s2960
      %2966 = dma.vmem_to_hbm [thread:$0]  %s2961, 256, %s9, [#allocation3], 128, 128, 8
    $region41: #{decoder_forward.1} parent=1 // pred_fallthru
      _
    // Predicated region
    $region42: #{decoder_forward.1} parent=1 // pred_check
      _
    $region43: #{decoder_forward.1} parent=1 // pred_check_branch
      %2968 = sbr.rel (0) target = $region45
    $region44: #{decoder_forward.1} parent=1 // pred_region
      _
    $region45: #{decoder_forward.1} parent=1 // pred_fallthru
      _
    // Predicated region
    $region46: #{decoder_forward.1} parent=1 // pred_check
      _
    $region47: #{decoder_forward.1} parent=1 // pred_check_branch
      %2970 = sbr.rel (0) target = $region49
    $region48: #{decoder_forward.1} parent=1 // pred_region
      %2971 = dma.done [#allocation3], 256
    $region49: #{decoder_forward.1} parent=1 // pred_fallthru
      _
    %2972 = vsyncpa [#allocation3], 1

</llo_original>
